<compile_context>
chip_gen: v6e
topology: v6e:2x2x1
jax: 0.10.0
libtpu: 0.0.40
codegen_flags: <defaults>
</compile_context>

<pallas_src>
import functools

import jax
import jax.numpy as jnp
from jax.experimental import pallas as pl
from jax.experimental.pallas import tpu as pltpu


def _adaptive_bins(size, out):
    """PyTorch-style adaptive pooling bin boundaries (start, end) per bin."""
    return tuple(((i * size) // out, -(-((i + 1) * size) // out))
                 for i in range(out))


def conv3x3_banded(w_hwio, W_out):
    """Fold the dx taps of a 3x3 conv into banded matrices, one per dy.

    Returns (3, (W_out+2)*Cin, W_out*Cout) such that, for a zero-padded
    lane-dense input xp of shape (H+2, (W_out+2)*Cin),

        conv_out(H, W_out*Cout) = sum_dy  xp[dy:dy+H, :] @ result[dy]
    """
    _, _, Cin, Cout = w_hwio.shape
    p = jnp.arange(W_out + 2)[:, None]          # padded pixel column
    x = jnp.arange(W_out)[None, :]              # output pixel column
    dx = p - x                                  # (W+2, W)
    valid = (dx >= 0) & (dx < 3)
    dx_c = jnp.clip(dx, 0, 2)
    mats = []
    for dy in range(3):
        g = w_hwio[dy][dx_c]                    # (W+2, W, Cin, Cout)
        g = jnp.where(valid[:, :, None, None], g, 0.0)
        mats.append(g.transpose(0, 2, 1, 3).reshape((W_out + 2) * Cin,
                                                    W_out * Cout))
    return jnp.stack(mats)


# ----------------------------------------------------------------------------
# Kernel 1: backbone conv3x3+ReLU (banded, bf16 MXU) + RoI adaptive max-pool.
#           One image per grid step ("parallel").  Outputs:
#             feat (1, H, W*Cb) bf16 lane-dense,  roi (1, O, O*Cb) f32.
# ----------------------------------------------------------------------------
def _backbone_roi_kernel(x_ref, wb_ref, bt_ref, feat_ref, roi_ref,
                         xp_ref, rows_ref, *, H, W, Cin, Cb, h_bins, w_bins):
    # in-kernel halo padding: zero-fill, copy interior (bf16)
    xp_ref[...] = jnp.zeros_like(xp_ref)
    xp_ref[pl.ds(1, H), pl.ds(Cin, W * Cin)] = x_ref[0]

    # conv3x3 + bias + ReLU as 3 banded MXU accumulations (no im2col relayout)
    acc = jnp.zeros((H, W * Cb), jnp.float32)
    for dy in range(3):
        acc += jnp.dot(xp_ref[pl.ds(dy, H), :], wb_ref[dy],
                       preferred_element_type=jnp.float32)
    feat = jnp.maximum(acc + bt_ref[0, :], 0.0)          # (H, W*Cb) f32
    feat_ref[0] = feat.astype(feat_ref.dtype)            # lane-dense bf16 store

    # RoI adaptive max-pool on the lane-dense layout.
    # TODO(synk): reference RoiPooling.forward ignores the predicted boxes.
    for i, (ys, ye) in enumerate(h_bins):                # row bins -> scratch
        rows_ref[pl.ds(i, 1), :] = jnp.max(feat[ys:ye], axis=0, keepdims=True)
    rows = rows_ref[...]                                 # (O, W*Cb)
    for j, (xs, xe) in enumerate(w_bins):                # column bins -> output
        m = rows[:, xs * Cb:(xs + 1) * Cb]
        for x in range(xs + 1, xe):
            m = jnp.maximum(m, rows[:, x * Cb:(x + 1) * Cb])
        roi_ref[0, :, pl.ds(j * Cb, Cb)] = m


def backbone_roi(x2d, wband, bias_t, *, H, W, Cin, Cb, O):
    N = x2d.shape[0]
    kernel = functools.partial(
        _backbone_roi_kernel, H=H, W=W, Cin=Cin, Cb=Cb,
        h_bins=_adaptive_bins(H, O), w_bins=_adaptive_bins(W, O))
    return pl.pallas_call(
        kernel,
        out_shape=(jax.ShapeDtypeStruct((N, H, W * Cb), jnp.bfloat16),
                   jax.ShapeDtypeStruct((N, O, O * Cb), jnp.float32)),
        grid=(N,),
        in_specs=[
            pl.BlockSpec((1, H, W * Cin), lambda n: (n, 0, 0)),
            pl.BlockSpec(wband.shape, lambda n: (0, 0, 0)),
            pl.BlockSpec(bias_t.shape, lambda n: (0, 0)),
        ],
        out_specs=(pl.BlockSpec((1, H, W * Cb), lambda n: (n, 0, 0)),
                   pl.BlockSpec((1, O, O * Cb), lambda n: (n, 0, 0))),
        scratch_shapes=[pltpu.VMEM((H + 2, (W + 2) * Cin), jnp.bfloat16),
                        pltpu.VMEM((O, W * Cb), jnp.float32)],
        compiler_params=pltpu.CompilerParams(dimension_semantics=("parallel",)),
    )(x2d, wband, bias_t)


# ----------------------------------------------------------------------------
# Kernel 2: RPN conv3x3+ReLU (banded, bf16 MXU) + per-image BN partial sums.
#           Per-image partials keep the batch axis "parallel" (v7x megacore).
# ----------------------------------------------------------------------------
def _rpn_conv_bn_kernel(f_ref, wb_ref, bt_ref, h_ref, sum_ref, sq_ref, fp_ref,
                        *, H, W, Cin, Cout):
    fp_ref[...] = jnp.zeros_like(fp_ref)
    fp_ref[pl.ds(1, H), pl.ds(Cin, W * Cin)] = f_ref[0]

    acc = jnp.zeros((H, W * Cout), jnp.float32)
    for dy in range(3):
        acc += jnp.dot(fp_ref[pl.ds(dy, H), :], wb_ref[dy],
                       preferred_element_type=jnp.float32)
    h = jnp.maximum(acc + bt_ref[0, :], 0.0)             # (H, W*Cout) f32
    h_ref[0] = h.astype(h_ref.dtype)                     # lane-dense bf16 store

    # per-image, per-channel sum / sum-of-squares (lane-group accumulation)
    hs = jnp.sum(h, axis=0, keepdims=True)               # (1, W*Cout)
    hq = jnp.sum(h * h, axis=0, keepdims=True)           # (1, W*Cout)
    s = hs[:, 0:Cout]
    q = hq[:, 0:Cout]
    for x in range(1, W):
        s = s + hs[:, x * Cout:(x + 1) * Cout]
        q = q + hq[:, x * Cout:(x + 1) * Cout]
    sum_ref[0] = s
    sq_ref[0] = q


def rpn_conv_bn(feat2d, wband, bias_t, *, H, W, Cb, Cr):
    N = feat2d.shape[0]
    kernel = functools.partial(_rpn_conv_bn_kernel, H=H, W=W, Cin=Cb, Cout=Cr)
    return pl.pallas_call(
        kernel,
        out_shape=(jax.ShapeDtypeStruct((N, H, W * Cr), jnp.bfloat16),
                   jax.ShapeDtypeStruct((N, 1, Cr), jnp.float32),
                   jax.ShapeDtypeStruct((N, 1, Cr), jnp.float32)),
        grid=(N,),
        in_specs=[
            pl.BlockSpec((1, H, W * Cb), lambda n: (n, 0, 0)),
            pl.BlockSpec(wband.shape, lambda n: (0, 0, 0)),
            pl.BlockSpec(bias_t.shape, lambda n: (0, 0)),
        ],
        out_specs=(pl.BlockSpec((1, H, W * Cr), lambda n: (n, 0, 0)),
                   pl.BlockSpec((1, 1, Cr), lambda n: (n, 0, 0)),
                   pl.BlockSpec((1, 1, Cr), lambda n: (n, 0, 0))),
        scratch_shapes=[pltpu.VMEM((H + 2, (W + 2) * Cb), jnp.bfloat16)],
        compiler_params=pltpu.CompilerParams(dimension_semantics=("parallel",)),
    )(feat2d, wband, bias_t)


# ----------------------------------------------------------------------------
# Kernel 3: BatchNorm apply + fused 1x1 (cls | reg) conv via block-diagonal
#           weight, entirely in the (H, W*C) layout.  Output channels padded
#           to 56 so the per-row store is 896 = 7*128 lanes.
# ----------------------------------------------------------------------------
def _rpn_head_kernel(h_ref, sc_ref, sh_ref, w_ref, b_ref, o_ref):
    xn = h_ref[0].astype(jnp.float32) * sc_ref[0, :] + sh_ref[0, :]
    o = jnp.dot(xn.astype(jnp.bfloat16), w_ref[...],
                preferred_element_type=jnp.float32) + b_ref[0, :]
    o_ref[0] = o


def rpn_head(h2d, scale_t, shift_t, wk, bk, *, H, W, Cr, Cp):
    N = h2d.shape[0]
    return pl.pallas_call(
        _rpn_head_kernel,
        out_shape=jax.ShapeDtypeStruct((N, H, W * Cp), jnp.float32),
        grid=(N,),
        in_specs=[
            pl.BlockSpec((1, H, W * Cr), lambda n: (n, 0, 0)),
            pl.BlockSpec(scale_t.shape, lambda n: (0, 0)),
            pl.BlockSpec(shift_t.shape, lambda n: (0, 0)),
            pl.BlockSpec(wk.shape, lambda n: (0, 0)),
            pl.BlockSpec(bk.shape, lambda n: (0, 0)),
        ],
        out_specs=pl.BlockSpec((1, H, W * Cp), lambda n: (n, 0, 0)),
        compiler_params=pltpu.CompilerParams(dimension_semantics=("parallel",)),
    )(h2d, scale_t, shift_t, wk, bk)


# ----------------------------------------------------------------------------
# Kernel 4: detection head (fc -> fused cls|reg) run once with M = N.
# ----------------------------------------------------------------------------
def _det_head_kernel(roi_ref, fcw_ref, fcb_ref, hw_ref, hb_ref, o_ref):
    fc = jnp.dot(roi_ref[...].astype(jnp.bfloat16), fcw_ref[...],
                 preferred_element_type=jnp.float32) + fcb_ref[0, :]
    o_ref[...] = jnp.dot(fc.astype(jnp.bfloat16), hw_ref[...],
                         preferred_element_type=jnp.float32) + hb_ref[0, :]


def det_head(roi_flat, fc_w, fc_b, head_w, head_b):
    N = roi_flat.shape[0]
    n_out = head_w.shape[1]
    return pl.pallas_call(
        _det_head_kernel,
        out_shape=jax.ShapeDtypeStruct((N, n_out), jnp.float32),
    )(roi_flat, fc_w, fc_b, head_w, head_b)


# ----------------------------------------------------------------------------
# Parameters & full forward
# ----------------------------------------------------------------------------
def init_params(key, in_ch, backbone_ch, rpn_ch, k_anchors, roi_out,
                fc_hidden, num_classes):
    keys = jax.random.split(key, 16)
    std = 0.01

    def nrm(k, shape):
        return (std * jax.random.normal(k, shape)).astype(jnp.float32)

    return {
        # backbone stand-in (conv3x3 + ReLU)
        "bb_w": nrm(keys[0], (3, 3, in_ch, backbone_ch)),
        "bb_b": nrm(keys[1], (backbone_ch,)),
        # RPN conv3x3
        "rpn_w": nrm(keys[2], (3, 3, backbone_ch, rpn_ch)),
        "rpn_b": nrm(keys[3], (rpn_ch,)),
        # BatchNorm2d(rpn_ch)
        "bn_gamma": jnp.ones((rpn_ch,), jnp.float32),
        "bn_beta": nrm(keys[4], (rpn_ch,)),
        # RPN heads (1x1 convs)
        "rpn_cls_w": nrm(keys[5], (rpn_ch, 2 * k_anchors)),
        "rpn_cls_b": nrm(keys[6], (2 * k_anchors,)),
        "rpn_reg_w": nrm(keys[7], (rpn_ch, 4 * k_anchors)),
        "rpn_reg_b": nrm(keys[8], (4 * k_anchors,)),
        # fc / cls / reg heads
        "fc_w": nrm(keys[9], (backbone_ch * roi_out * roi_out, fc_hidden)),
        "fc_b": nrm(keys[10], (fc_hidden,)),
        "cls_w": nrm(keys[11], (fc_hidden, num_classes)),
        "cls_b": nrm(keys[12], (num_classes,)),
        "reg_w": nrm(keys[13], (fc_hidden, 4 * num_classes)),
        "reg_b": nrm(keys[14], (4 * num_classes,)),
    }


@functools.partial(jax.jit, static_argnames=("roi_out",))
def faster_rcnn_forward(x_nchw, params, roi_out=7):
    # accept NCHW (PyTorch convention), compute in NHWC (channels on lanes)
    x = jnp.transpose(x_nchw, (0, 2, 3, 1)).astype(jnp.float32)     # (N,H,W,C)
    N, H, W, Cin = x.shape
    Cb = params["bb_w"].shape[-1]
    Cr = params["rpn_w"].shape[-1]
    num_classes = params["cls_w"].shape[1]
    Ccls = params["rpn_cls_w"].shape[1]
    Creg = params["rpn_reg_w"].shape[1]
    O = roi_out

    # lane-dense bf16 input slab; banded bf16 conv weights; lane-tiled biases
    x2d = x.reshape(N, H, W * Cin).astype(jnp.bfloat16)
    bb_band = conv3x3_banded(params["bb_w"], W).astype(jnp.bfloat16)
    rpn_band = conv3x3_banded(params["rpn_w"], W).astype(jnp.bfloat16)
    bb_bt = jnp.tile(params["bb_b"], W).reshape(1, W * Cb)
    rpn_bt = jnp.tile(params["rpn_b"], W).reshape(1, W * Cr)

    # --- K1: backbone conv + RoI adaptive max-pool --------------------------
    feat2d, roi3 = backbone_roi(x2d, bb_band, bb_bt,
                                H=H, W=W, Cin=Cin, Cb=Cb, O=O)

    # --- K2: RPN conv3x3 + ReLU + per-image BN partials ---------------------
    h2d, psum, psq = rpn_conv_bn(feat2d, rpn_band, rpn_bt,
                                 H=H, W=W, Cb=Cb, Cr=Cr)

    count = N * H * W
    bn_sum = jnp.sum(psum[:, 0, :], axis=0, keepdims=True)
    bn_sq = jnp.sum(psq[:, 0, :], axis=0, keepdims=True)
    mean = bn_sum / count
    var = jnp.maximum(bn_sq / count - mean * mean, 0.0)
    eps = 1e-5
    scale = params["bn_gamma"].reshape(1, -1) / jnp.sqrt(var + eps)
    shift = params["bn_beta"].reshape(1, -1) - mean * scale
    scale_t = jnp.tile(scale[0], W).reshape(1, W * Cr)
    shift_t = jnp.tile(shift[0], W).reshape(1, W * Cr)

    # fused (cls | reg) 1x1 head, zero-padded 54 -> 56 channels (lane-dense),
    # expressed as a block-diagonal (W*Cr, W*56) weight so K3 stays in the
    # (H, W*C) layout end-to-end.
    n_rpn = Ccls + Creg
    n_rpn_p = ((n_rpn + 7) // 8) * 8
    rpn_head_w = jnp.concatenate([params["rpn_cls_w"], params["rpn_reg_w"]], 1)
    rpn_head_w = jnp.pad(rpn_head_w, ((0, 0), (0, n_rpn_p - n_rpn)))
    rpn_head_b = jnp.concatenate([params["rpn_cls_b"], params["rpn_reg_b"]])
    rpn_head_b = jnp.pad(rpn_head_b, (0, n_rpn_p - n_rpn))
    wk = jnp.kron(jnp.eye(W, dtype=rpn_head_w.dtype),
                  rpn_head_w).astype(jnp.bfloat16)
    bk = jnp.tile(rpn_head_b, W).reshape(1, W * n_rpn_p)

    # --- K3: BN apply + fused 1x1 cls+reg conv -------------------------------
    rpn2d = rpn_head(h2d, scale_t, shift_t, wk, bk, H=H, W=W, Cr=Cr, Cp=n_rpn_p)
    rpn_out = rpn2d.reshape(N, H, W, n_rpn_p)
    cls_score = rpn_out[..., :Ccls]
    bbox_pred = rpn_out[..., Ccls:n_rpn]

    # --- K4: fc -> fused (cls | reg) detection head, one M=N matmul pair ----
    roi_flat = roi3.reshape(N, O * O * Cb)
    fc_head_w = jnp.concatenate([params["cls_w"], params["reg_w"]], axis=1)
    fc_head_b = jnp.concatenate([params["cls_b"], params["reg_b"]])
    cls_reg = det_head(roi_flat,
                       params["fc_w"].astype(jnp.bfloat16),
                       params["fc_b"].reshape(1, -1),
                       fc_head_w.astype(jnp.bfloat16),
                       fc_head_b.reshape(1, -1))
    cls = cls_reg[:, :num_classes]
    reg = cls_reg[:, num_classes:]

    return cls, reg, cls_score, bbox_pred


if __name__ == "__main__":
    # small, deterministic example shapes
    N, C_IN, H, W = 2, 4, 16, 16
    BACKBONE_CH = 8
    RPN_CH = 16
    K_ANCHORS = 9
    ROI_OUT = 7
    FC_HIDDEN = 32
    NUM_CLASSES = 8

    key = jax.random.PRNGKey(0)
    x = jax.random.normal(key, (N, C_IN, H, W), dtype=jnp.float32)  # NCHW input

    params = init_params(jax.random.PRNGKey(42), C_IN, BACKBONE_CH, RPN_CH,
                         K_ANCHORS, ROI_OUT, FC_HIDDEN, NUM_CLASSES)

    cls, reg, cls_score, bbox_pred = faster_rcnn_forward(x, params,
                                                         roi_out=ROI_OUT)
    jax.block_until_ready((cls, reg, cls_score, bbox_pred))

    assert cls.shape == (N, NUM_CLASSES)
    assert reg.shape == (N, 4 * NUM_CLASSES)
    assert cls_score.shape == (N, H, W, 2 * K_ANCHORS)
    assert bbox_pred.shape == (N, H, W, 4 * K_ANCHORS)
    print("KERNEL_OK")
</pallas_src>

<mosaic_0001>
module attributes {stable_mosaic.version = 11 : i64} {
  func.func @_backbone_roi_kernel(%arg0: i32, %arg1: memref<1x16x64xbf16, #tpu.memory_space<vmem>>, %arg2: memref<3x72x128xbf16, #tpu.memory_space<vmem>>, %arg3: memref<1x128xf32, #tpu.memory_space<vmem>>, %arg4: memref<1x16x128xbf16, #tpu.memory_space<vmem>>, %arg5: memref<1x7x56xf32, #tpu.memory_space<vmem>>, %arg6: memref<18x72xbf16, #tpu.memory_space<vmem>>, %arg7: memref<7x128xf32, #tpu.memory_space<vmem>>) attributes {dimension_semantics = [#tpu.dimension_semantics<parallel>], iteration_bounds = array<i64: 2>, scalar_prefetch = 0 : i64, scratch_operands = 2 : i64, tpu.core_type = #tpu.core_type<tc>, window_params = [{transform_indices = @transform_0, window_bounds = array<i64: 1, 16, 64>}, {pipeline_mode = #tpu.pipeline_mode<synchronous>, transform_indices = @transform_1, window_bounds = array<i64: 3, 72, 128>}, {pipeline_mode = #tpu.pipeline_mode<synchronous>, transform_indices = @transform_2, window_bounds = array<i64: 1, 128>}, {transform_indices = @transform_3, window_bounds = array<i64: 1, 16, 128>}, {transform_indices = @transform_4, window_bounds = array<i64: 1, 7, 56>}]} {
    %cst = arith.constant 0.000000e+00 : bf16
    %0 = vector.broadcast %cst : bf16 to vector<18x72xbf16>
    %c0 = arith.constant 0 : index
    %c0_0 = arith.constant 0 : index
    %1 = vector.load %arg6[%c0, %c0_0] : memref<18x72xbf16, #tpu.memory_space<vmem>>, vector<18x72xbf16>
    tpu.vector_store %arg6[%c0, %c0_0], %0 {strides = array<i32>} : memref<18x72xbf16, #tpu.memory_space<vmem>>, vector<18x72xbf16>,
    %c0_1 = arith.constant 0 : index
    %c0_2 = arith.constant 0 : index
    %c0_3 = arith.constant 0 : index
    %2 = vector.load %arg1[%c0_1, %c0_2, %c0_3] : memref<1x16x64xbf16, #tpu.memory_space<vmem>>, vector<1x16x64xbf16>
    %3 = vector.shape_cast %2 : vector<1x16x64xbf16> to vector<16x64xbf16>
    %c1 = arith.constant 1 : index
    %c4 = arith.constant 4 : index
    %4 = vector.load %arg6[%c1, %c4] : memref<18x72xbf16, #tpu.memory_space<vmem>>, vector<16x64xbf16>
    tpu.vector_store %arg6[%c1, %c4], %3 {strides = array<i32>} : memref<18x72xbf16, #tpu.memory_space<vmem>>, vector<16x64xbf16>,
    %cst_4 = arith.constant 0.000000e+00 : f32
    %5 = vector.broadcast %cst_4 : f32 to vector<16x128xf32>
    %c0_5 = arith.constant 0 : index
    %c0_6 = arith.constant 0 : index
    %6 = vector.load %arg6[%c0_5, %c0_6] : memref<18x72xbf16, #tpu.memory_space<vmem>>, vector<16x72xbf16>
    %c0_7 = arith.constant 0 : index
    %c0_8 = arith.constant 0 : index
    %c0_9 = arith.constant 0 : index
    %7 = vector.load %arg2[%c0_7, %c0_8, %c0_9] : memref<3x72x128xbf16, #tpu.memory_space<vmem>>, vector<1x72x128xbf16>
    %8 = vector.shape_cast %7 : vector<1x72x128xbf16> to vector<72x128xbf16>
    %cst_10 = arith.constant dense<0.000000e+00> : vector<16x128xf32>
    %9 = tpu.matmul %6, %8, %cst_10 {dimension_numbers = #tpu.dot_dimension_numbers<[1], [0], [0], [1], [0, 0, 1, 1], [], []>} : vector<16x72xbf16>, vector<72x128xbf16>, vector<16x128xf32> -> vector<16x128xf32>
    %10 = arith.addf %5, %9 : vector<16x128xf32>
    %c1_11 = arith.constant 1 : index
    %c0_12 = arith.constant 0 : index
    %11 = vector.load %arg6[%c1_11, %c0_12] : memref<18x72xbf16, #tpu.memory_space<vmem>>, vector<16x72xbf16>
    %c1_13 = arith.constant 1 : index
    %c0_14 = arith.constant 0 : index
    %c0_15 = arith.constant 0 : index
    %12 = vector.load %arg2[%c1_13, %c0_14, %c0_15] : memref<3x72x128xbf16, #tpu.memory_space<vmem>>, vector<1x72x128xbf16>
    %13 = vector.shape_cast %12 : vector<1x72x128xbf16> to vector<72x128xbf16>
    %cst_16 = arith.constant dense<0.000000e+00> : vector<16x128xf32>
    %14 = tpu.matmul %11, %13, %cst_16 {dimension_numbers = #tpu.dot_dimension_numbers<[1], [0], [0], [1], [0, 0, 1, 1], [], []>} : vector<16x72xbf16>, vector<72x128xbf16>, vector<16x128xf32> -> vector<16x128xf32>
    %15 = arith.addf %10, %14 : vector<16x128xf32>
    %c2 = arith.constant 2 : index
    %c0_17 = arith.constant 0 : index
    %16 = vector.load %arg6[%c2, %c0_17] : memref<18x72xbf16, #tpu.memory_space<vmem>>, vector<16x72xbf16>
    %c2_18 = arith.constant 2 : index
    %c0_19 = arith.constant 0 : index
    %c0_20 = arith.constant 0 : index
    %17 = vector.load %arg2[%c2_18, %c0_19, %c0_20] : memref<3x72x128xbf16, #tpu.memory_space<vmem>>, vector<1x72x128xbf16>
    %18 = vector.shape_cast %17 : vector<1x72x128xbf16> to vector<72x128xbf16>
    %cst_21 = arith.constant dense<0.000000e+00> : vector<16x128xf32>
    %19 = tpu.matmul %16, %18, %cst_21 {dimension_numbers = #tpu.dot_dimension_numbers<[1], [0], [0], [1], [0, 0, 1, 1], [], []>} : vector<16x72xbf16>, vector<72x128xbf16>, vector<16x128xf32> -> vector<16x128xf32>
    %20 = arith.addf %15, %19 : vector<16x128xf32>
    %c0_22 = arith.constant 0 : index
    %c0_23 = arith.constant 0 : index
    %21 = vector.load %arg3[%c0_22, %c0_23] : memref<1x128xf32, #tpu.memory_space<vmem>>, vector<1x128xf32>
    %22 = vector.shape_cast %21 : vector<1x128xf32> to vector<128xf32>
    %23 = vector.shape_cast %22 : vector<128xf32> to vector<1x128xf32>
    %24 = vector.broadcast %23 : vector<1x128xf32> to vector<16x128xf32>
    %25 = arith.addf %20, %24 : vector<16x128xf32>
    %cst_24 = arith.constant 0.000000e+00 : f32
    %26 = vector.broadcast %cst_24 : f32 to vector<16x128xf32>
    %27 = arith.maximumf %25, %26 : vector<16x128xf32>
    %28 = arith.truncf %27 : vector<16x128xf32> to vector<16x128xbf16>
    %c0_25 = arith.constant 0 : index
    %c0_26 = arith.constant 0 : index
    %c0_27 = arith.constant 0 : index
    %29 = vector.load %arg4[%c0_25, %c0_26, %c0_27] : memref<1x16x128xbf16, #tpu.memory_space<vmem>>, vector<1x16x128xbf16>
    %30 = vector.shape_cast %29 : vector<1x16x128xbf16> to vector<16x128xbf16>
    %31 = vector.shape_cast %28 : vector<16x128xbf16> to vector<1x16x128xbf16>
    tpu.vector_store %arg4[%c0_25, %c0_26, %c0_27], %31 {strides = array<i32>} : memref<1x16x128xbf16, #tpu.memory_space<vmem>>, vector<1x16x128xbf16>,
    %32 = vector.extract_strided_slice %27 {offsets = [0, 0], sizes = [3, 128], strides = [1, 1]} : vector<16x128xf32> to vector<3x128xf32>
    %cst_28 = arith.constant dense<0xFF800000> : vector<128xf32>
    %33 = vector.multi_reduction <maximumf>, %32, %cst_28 [0] : vector<3x128xf32> to vector<128xf32>
    %34 = vector.shape_cast %33 : vector<128xf32> to vector<1x128xf32>
    %c0_29 = arith.constant 0 : index
    %c0_30 = arith.constant 0 : index
    %35 = vector.load %arg7[%c0_29, %c0_30] : memref<7x128xf32, #tpu.memory_space<vmem>>, vector<1x128xf32>
    tpu.vector_store %arg7[%c0_29, %c0_30], %34 {strides = array<i32>} : memref<7x128xf32, #tpu.memory_space<vmem>>, vector<1x128xf32>,
    %36 = vector.extract_strided_slice %27 {offsets = [2, 0], sizes = [3, 128], strides = [1, 1]} : vector<16x128xf32> to vector<3x128xf32>
    %cst_31 = arith.constant dense<0xFF800000> : vector<128xf32>
    %37 = vector.multi_reduction <maximumf>, %36, %cst_31 [0] : vector<3x128xf32> to vector<128xf32>
    %38 = vector.shape_cast %37 : vector<128xf32> to vector<1x128xf32>
    %c1_32 = arith.constant 1 : index
    %c0_33 = arith.constant 0 : index
    %39 = vector.load %arg7[%c1_32, %c0_33] : memref<7x128xf32, #tpu.memory_space<vmem>>, vector<1x128xf32>
    tpu.vector_store %arg7[%c1_32, %c0_33], %38 {strides = array<i32>} : memref<7x128xf32, #tpu.memory_space<vmem>>, vector<1x128xf32>,
    %40 = vector.extract_strided_slice %27 {offsets = [4, 0], sizes = [3, 128], strides = [1, 1]} : vector<16x128xf32> to vector<3x128xf32>
    %cst_34 = arith.constant dense<0xFF800000> : vector<128xf32>
    %41 = vector.multi_reduction <maximumf>, %40, %cst_34 [0] : vector<3x128xf32> to vector<128xf32>
    %42 = vector.shape_cast %41 : vector<128xf32> to vector<1x128xf32>
    %c2_35 = arith.constant 2 : index
    %c0_36 = arith.constant 0 : index
    %43 = vector.load %arg7[%c2_35, %c0_36] : memref<7x128xf32, #tpu.memory_space<vmem>>, vector<1x128xf32>
    tpu.vector_store %arg7[%c2_35, %c0_36], %42 {strides = array<i32>} : memref<7x128xf32, #tpu.memory_space<vmem>>, vector<1x128xf32>,
    %44 = vector.extract_strided_slice %27 {offsets = [6, 0], sizes = [4, 128], strides = [1, 1]} : vector<16x128xf32> to vector<4x128xf32>
    %cst_37 = arith.constant dense<0xFF800000> : vector<128xf32>
    %45 = vector.multi_reduction <maximumf>, %44, %cst_37 [0] : vector<4x128xf32> to vector<128xf32>
    %46 = vector.shape_cast %45 : vector<128xf32> to vector<1x128xf32>
    %c3 = arith.constant 3 : index
    %c0_38 = arith.constant 0 : index
    %47 = vector.load %arg7[%c3, %c0_38] : memref<7x128xf32, #tpu.memory_space<vmem>>, vector<1x128xf32>
    tpu.vector_store %arg7[%c3, %c0_38], %46 {strides = array<i32>} : memref<7x128xf32, #tpu.memory_space<vmem>>, vector<1x128xf32>,
    %48 = vector.extract_strided_slice %27 {offsets = [9, 0], sizes = [3, 128], strides = [1, 1]} : vector<16x128xf32> to vector<3x128xf32>
    %cst_39 = arith.constant dense<0xFF800000> : vector<128xf32>
    %49 = vector.multi_reduction <maximumf>, %48, %cst_39 [0] : vector<3x128xf32> to vector<128xf32>
    %50 = vector.shape_cast %49 : vector<128xf32> to vector<1x128xf32>
    %c4_40 = arith.constant 4 : index
    %c0_41 = arith.constant 0 : index
    %51 = vector.load %arg7[%c4_40, %c0_41] : memref<7x128xf32, #tpu.memory_space<vmem>>, vector<1x128xf32>
    tpu.vector_store %arg7[%c4_40, %c0_41], %50 {strides = array<i32>} : memref<7x128xf32, #tpu.memory_space<vmem>>, vector<1x128xf32>,
    %52 = vector.extract_strided_slice %27 {offsets = [11, 0], sizes = [3, 128], strides = [1, 1]} : vector<16x128xf32> to vector<3x128xf32>
    %cst_42 = arith.constant dense<0xFF800000> : vector<128xf32>
    %53 = vector.multi_reduction <maximumf>, %52, %cst_42 [0] : vector<3x128xf32> to vector<128xf32>
    %54 = vector.shape_cast %53 : vector<128xf32> to vector<1x128xf32>
    %c5 = arith.constant 5 : index
    %c0_43 = arith.constant 0 : index
    %55 = vector.load %arg7[%c5, %c0_43] : memref<7x128xf32, #tpu.memory_space<vmem>>, vector<1x128xf32>
    tpu.vector_store %arg7[%c5, %c0_43], %54 {strides = array<i32>} : memref<7x128xf32, #tpu.memory_space<vmem>>, vector<1x128xf32>,
    %56 = vector.extract_strided_slice %27 {offsets = [13, 0], sizes = [3, 128], strides = [1, 1]} : vector<16x128xf32> to vector<3x128xf32>
    %cst_44 = arith.constant dense<0xFF800000> : vector<128xf32>
    %57 = vector.multi_reduction <maximumf>, %56, %cst_44 [0] : vector<3x128xf32> to vector<128xf32>
    %58 = vector.shape_cast %57 : vector<128xf32> to vector<1x128xf32>
    %c6 = arith.constant 6 : index
    %c0_45 = arith.constant 0 : index
    %59 = vector.load %arg7[%c6, %c0_45] : memref<7x128xf32, #tpu.memory_space<vmem>>, vector<1x128xf32>
    tpu.vector_store %arg7[%c6, %c0_45], %58 {strides = array<i32>} : memref<7x128xf32, #tpu.memory_space<vmem>>, vector<1x128xf32>,
    %c0_46 = arith.constant 0 : index
    %c0_47 = arith.constant 0 : index
    %60 = vector.load %arg7[%c0_46, %c0_47] : memref<7x128xf32, #tpu.memory_space<vmem>>, vector<7x128xf32>
    %61 = vector.extract_strided_slice %60 {offsets = [0, 0], sizes = [7, 8], strides = [1, 1]} : vector<7x128xf32> to vector<7x8xf32>
    %62 = vector.extract_strided_slice %60 {offsets = [0, 8], sizes = [7, 8], strides = [1, 1]} : vector<7x128xf32> to vector<7x8xf32>
    %63 = arith.maximumf %61, %62 : vector<7x8xf32>
    %64 = vector.extract_strided_slice %60 {offsets = [0, 16], sizes = [7, 8], strides = [1, 1]} : vector<7x128xf32> to vector<7x8xf32>
    %65 = arith.maximumf %63, %64 : vector<7x8xf32>
    %c0_48 = arith.constant 0 : index
    %c0_49 = arith.constant 0 : index
    %c0_50 = arith.constant 0 : index
    %66 = vector.load %arg5[%c0_48, %c0_49, %c0_50] : memref<1x7x56xf32, #tpu.memory_space<vmem>>, vector<1x7x8xf32>
    %67 = vector.shape_cast %66 : vector<1x7x8xf32> to vector<7x8xf32>
    %68 = vector.shape_cast %65 : vector<7x8xf32> to vector<1x7x8xf32>
    tpu.vector_store %arg5[%c0_48, %c0_49, %c0_50], %68 {strides = array<i32>} : memref<1x7x56xf32, #tpu.memory_space<vmem>>, vector<1x7x8xf32>,
    %69 = vector.extract_strided_slice %60 {offsets = [0, 16], sizes = [7, 8], strides = [1, 1]} : vector<7x128xf32> to vector<7x8xf32>
    %70 = vector.extract_strided_slice %60 {offsets = [0, 24], sizes = [7, 8], strides = [1, 1]} : vector<7x128xf32> to vector<7x8xf32>
    %71 = arith.maximumf %69, %70 : vector<7x8xf32>
    %72 = vector.extract_strided_slice %60 {offsets = [0, 32], sizes = [7, 8], strides = [1, 1]} : vector<7x128xf32> to vector<7x8xf32>
    %73 = arith.maximumf %71, %72 : vector<7x8xf32>
    %c0_51 = arith.constant 0 : index
    %c0_52 = arith.constant 0 : index
    %c8 = arith.constant 8 : index
    %74 = vector.load %arg5[%c0_51, %c0_52, %c8] : memref<1x7x56xf32, #tpu.memory_space<vmem>>, vector<1x7x8xf32>
    %75 = vector.shape_cast %74 : vector<1x7x8xf32> to vector<7x8xf32>
    %76 = vector.shape_cast %73 : vector<7x8xf32> to vector<1x7x8xf32>
    tpu.vector_store %arg5[%c0_51, %c0_52, %c8], %76 {strides = array<i32>} : memref<1x7x56xf32, #tpu.memory_space<vmem>>, vector<1x7x8xf32>,
    %77 = vector.extract_strided_slice %60 {offsets = [0, 32], sizes = [7, 8], strides = [1, 1]} : vector<7x128xf32> to vector<7x8xf32>
    %78 = vector.extract_strided_slice %60 {offsets = [0, 40], sizes = [7, 8], strides = [1, 1]} : vector<7x128xf32> to vector<7x8xf32>
    %79 = arith.maximumf %77, %78 : vector<7x8xf32>
    %80 = vector.extract_strided_slice %60 {offsets = [0, 48], sizes = [7, 8], strides = [1, 1]} : vector<7x128xf32> to vector<7x8xf32>
    %81 = arith.maximumf %79, %80 : vector<7x8xf32>
    %c0_53 = arith.constant 0 : index
    %c0_54 = arith.constant 0 : index
    %c16 = arith.constant 16 : index
    %82 = vector.load %arg5[%c0_53, %c0_54, %c16] : memref<1x7x56xf32, #tpu.memory_space<vmem>>, vector<1x7x8xf32>
    %83 = vector.shape_cast %82 : vector<1x7x8xf32> to vector<7x8xf32>
    %84 = vector.shape_cast %81 : vector<7x8xf32> to vector<1x7x8xf32>
    tpu.vector_store %arg5[%c0_53, %c0_54, %c16], %84 {strides = array<i32>} : memref<1x7x56xf32, #tpu.memory_space<vmem>>, vector<1x7x8xf32>,
    %85 = vector.extract_strided_slice %60 {offsets = [0, 48], sizes = [7, 8], strides = [1, 1]} : vector<7x128xf32> to vector<7x8xf32>
    %86 = vector.extract_strided_slice %60 {offsets = [0, 56], sizes = [7, 8], strides = [1, 1]} : vector<7x128xf32> to vector<7x8xf32>
    %87 = arith.maximumf %85, %86 : vector<7x8xf32>
    %88 = vector.extract_strided_slice %60 {offsets = [0, 64], sizes = [7, 8], strides = [1, 1]} : vector<7x128xf32> to vector<7x8xf32>
    %89 = arith.maximumf %87, %88 : vector<7x8xf32>
    %90 = vector.extract_strided_slice %60 {offsets = [0, 72], sizes = [7, 8], strides = [1, 1]} : vector<7x128xf32> to vector<7x8xf32>
    %91 = arith.maximumf %89, %90 : vector<7x8xf32>
    %c0_55 = arith.constant 0 : index
    %c0_56 = arith.constant 0 : index
    %c24 = arith.constant 24 : index
    %92 = vector.load %arg5[%c0_55, %c0_56, %c24] : memref<1x7x56xf32, #tpu.memory_space<vmem>>, vector<1x7x8xf32>
    %93 = vector.shape_cast %92 : vector<1x7x8xf32> to vector<7x8xf32>
    %94 = vector.shape_cast %91 : vector<7x8xf32> to vector<1x7x8xf32>
    tpu.vector_store %arg5[%c0_55, %c0_56, %c24], %94 {strides = array<i32>} : memref<1x7x56xf32, #tpu.memory_space<vmem>>, vector<1x7x8xf32>,
    %95 = vector.extract_strided_slice %60 {offsets = [0, 72], sizes = [7, 8], strides = [1, 1]} : vector<7x128xf32> to vector<7x8xf32>
    %96 = vector.extract_strided_slice %60 {offsets = [0, 80], sizes = [7, 8], strides = [1, 1]} : vector<7x128xf32> to vector<7x8xf32>
    %97 = arith.maximumf %95, %96 : vector<7x8xf32>
    %98 = vector.extract_strided_slice %60 {offsets = [0, 88], sizes = [7, 8], strides = [1, 1]} : vector<7x128xf32> to vector<7x8xf32>
    %99 = arith.maximumf %97, %98 : vector<7x8xf32>
    %c0_57 = arith.constant 0 : index
    %c0_58 = arith.constant 0 : index
    %c32 = arith.constant 32 : index
    %100 = vector.load %arg5[%c0_57, %c0_58, %c32] : memref<1x7x56xf32, #tpu.memory_space<vmem>>, vector<1x7x8xf32>
    %101 = vector.shape_cast %100 : vector<1x7x8xf32> to vector<7x8xf32>
    %102 = vector.shape_cast %99 : vector<7x8xf32> to vector<1x7x8xf32>
    tpu.vector_store %arg5[%c0_57, %c0_58, %c32], %102 {strides = array<i32>} : memref<1x7x56xf32, #tpu.memory_space<vmem>>, vector<1x7x8xf32>,
    %103 = vector.extract_strided_slice %60 {offsets = [0, 88], sizes = [7, 8], strides = [1, 1]} : vector<7x128xf32> to vector<7x8xf32>
    %104 = vector.extract_strided_slice %60 {offsets = [0, 96], sizes = [7, 8], strides = [1, 1]} : vector<7x128xf32> to vector<7x8xf32>
    %105 = arith.maximumf %103, %104 : vector<7x8xf32>
    %106 = vector.extract_strided_slice %60 {offsets = [0, 104], sizes = [7, 8], strides = [1, 1]} : vector<7x128xf32> to vector<7x8xf32>
    %107 = arith.maximumf %105, %106 : vector<7x8xf32>
    %c0_59 = arith.constant 0 : index
    %c0_60 = arith.constant 0 : index
    %c40 = arith.constant 40 : index
    %108 = vector.load %arg5[%c0_59, %c0_60, %c40] : memref<1x7x56xf32, #tpu.memory_space<vmem>>, vector<1x7x8xf32>
    %109 = vector.shape_cast %108 : vector<1x7x8xf32> to vector<7x8xf32>
    %110 = vector.shape_cast %107 : vector<7x8xf32> to vector<1x7x8xf32>
    tpu.vector_store %arg5[%c0_59, %c0_60, %c40], %110 {strides = array<i32>} : memref<1x7x56xf32, #tpu.memory_space<vmem>>, vector<1x7x8xf32>,
    %111 = vector.extract_strided_slice %60 {offsets = [0, 104], sizes = [7, 8], strides = [1, 1]} : vector<7x128xf32> to vector<7x8xf32>
    %112 = vector.extract_strided_slice %60 {offsets = [0, 112], sizes = [7, 8], strides = [1, 1]} : vector<7x128xf32> to vector<7x8xf32>
    %113 = arith.maximumf %111, %112 : vector<7x8xf32>
    %114 = vector.extract_strided_slice %60 {offsets = [0, 120], sizes = [7, 8], strides = [1, 1]} : vector<7x128xf32> to vector<7x8xf32>
    %115 = arith.maximumf %113, %114 : vector<7x8xf32>
    %c0_61 = arith.constant 0 : index
    %c0_62 = arith.constant 0 : index
    %c48 = arith.constant 48 : index
    %116 = vector.load %arg5[%c0_61, %c0_62, %c48] : memref<1x7x56xf32, #tpu.memory_space<vmem>>, vector<1x7x8xf32>
    %117 = vector.shape_cast %116 : vector<1x7x8xf32> to vector<7x8xf32>
    %118 = vector.shape_cast %115 : vector<7x8xf32> to vector<1x7x8xf32>
    tpu.vector_store %arg5[%c0_61, %c0_62, %c48], %118 {strides = array<i32>} : memref<1x7x56xf32, #tpu.memory_space<vmem>>, vector<1x7x8xf32>,
    return
  }
  func.func @transform_0(%arg0: i32) -> (i32, i32, i32) {
    %c0_i32 = arith.constant 0 : i32
    %c0_i32_0 = arith.constant 0 : i32
    %c0_i32_1 = arith.constant 0 : i32
    return %arg0, %c0_i32, %c0_i32_0 : i32, i32, i32
  }
  func.func @transform_1(%arg0: i32) -> (i32, i32, i32) {
    %c0_i32 = arith.constant 0 : i32
    %c0_i32_0 = arith.constant 0 : i32
    %c0_i32_1 = arith.constant 0 : i32
    %c0_i32_2 = arith.constant 0 : i32
    return %c0_i32, %c0_i32_0, %c0_i32_1 : i32, i32, i32
  }
  func.func @transform_2(%arg0: i32) -> (i32, i32) {
    %c0_i32 = arith.constant 0 : i32
    %c0_i32_0 = arith.constant 0 : i32
    %c0_i32_1 = arith.constant 0 : i32
    return %c0_i32, %c0_i32_0 : i32, i32
  }
  func.func @transform_3(%arg0: i32) -> (i32, i32, i32) {
    %c0_i32 = arith.constant 0 : i32
    %c0_i32_0 = arith.constant 0 : i32
    %c0_i32_1 = arith.constant 0 : i32
    return %arg0, %c0_i32, %c0_i32_0 : i32, i32, i32
  }
  func.func @transform_4(%arg0: i32) -> (i32, i32, i32) {
    %c0_i32 = arith.constant 0 : i32
    %c0_i32_0 = arith.constant 0 : i32
    %c0_i32_1 = arith.constant 0 : i32
    return %arg0, %c0_i32, %c0_i32_0 : i32, i32, i32
  }
}

module attributes {stable_mosaic.version = 11 : i64} {
  func.func @_det_head_kernel(%arg0: memref<2x392xf32, #tpu.memory_space<vmem>>, %arg1: memref<392x32xbf16, #tpu.memory_space<vmem>>, %arg2: memref<1x32xf32, #tpu.memory_space<vmem>>, %arg3: memref<32x40xbf16, #tpu.memory_space<vmem>>, %arg4: memref<1x40xf32, #tpu.memory_space<vmem>>, %arg5: memref<2x40xf32, #tpu.memory_space<vmem>>) attributes {dimension_semantics = [], scalar_prefetch = 0 : i64, scratch_operands = 0 : i64, tpu.core_type = #tpu.core_type<tc>} {
    %c0 = arith.constant 0 : index
    %c0_0 = arith.constant 0 : index
    %0 = vector.load %arg0[%c0, %c0_0] : memref<2x392xf32, #tpu.memory_space<vmem>>, vector<2x392xf32>
    %1 = arith.truncf %0 : vector<2x392xf32> to vector<2x392xbf16>
    %c0_1 = arith.constant 0 : index
    %c0_2 = arith.constant 0 : index
    %2 = vector.load %arg1[%c0_1, %c0_2] : memref<392x32xbf16, #tpu.memory_space<vmem>>, vector<392x32xbf16>
    %cst = arith.constant dense<0.000000e+00> : vector<2x32xf32>
    %3 = tpu.matmul %1, %2, %cst {dimension_numbers = #tpu.dot_dimension_numbers<[1], [0], [0], [1], [0, 0, 1, 1], [], []>} : vector<2x392xbf16>, vector<392x32xbf16>, vector<2x32xf32> -> vector<2x32xf32>
    %c0_3 = arith.constant 0 : index
    %c0_4 = arith.constant 0 : index
    %4 = vector.load %arg2[%c0_3, %c0_4] : memref<1x32xf32, #tpu.memory_space<vmem>>, vector<1x32xf32>
    %5 = vector.shape_cast %4 : vector<1x32xf32> to vector<32xf32>
    %6 = vector.shape_cast %5 : vector<32xf32> to vector<1x32xf32>
    %7 = vector.broadcast %6 : vector<1x32xf32> to vector<2x32xf32>
    %8 = arith.addf %3, %7 : vector<2x32xf32>
    %9 = arith.truncf %8 : vector<2x32xf32> to vector<2x32xbf16>
    %c0_5 = arith.constant 0 : index
    %c0_6 = arith.constant 0 : index
    %10 = vector.load %arg3[%c0_5, %c0_6] : memref<32x40xbf16, #tpu.memory_space<vmem>>, vector<32x40xbf16>
    %cst_7 = arith.constant dense<0.000000e+00> : vector<2x40xf32>
    %11 = tpu.matmul %9, %10, %cst_7 {dimension_numbers = #tpu.dot_dimension_numbers<[1], [0], [0], [1], [0, 0, 1, 1], [], []>} : vector<2x32xbf16>, vector<32x40xbf16>, vector<2x40xf32> -> vector<2x40xf32>
    %c0_8 = arith.constant 0 : index
    %c0_9 = arith.constant 0 : index
    %12 = vector.load %arg4[%c0_8, %c0_9] : memref<1x40xf32, #tpu.memory_space<vmem>>, vector<1x40xf32>
    %13 = vector.shape_cast %12 : vector<1x40xf32> to vector<40xf32>
    %14 = vector.shape_cast %13 : vector<40xf32> to vector<1x40xf32>
    %15 = vector.broadcast %14 : vector<1x40xf32> to vector<2x40xf32>
    %16 = arith.addf %11, %15 : vector<2x40xf32>
    %c0_10 = arith.constant 0 : index
    %c0_11 = arith.constant 0 : index
    %17 = vector.load %arg5[%c0_10, %c0_11] : memref<2x40xf32, #tpu.memory_space<vmem>>, vector<2x40xf32>
    tpu.vector_store %arg5[%c0_10, %c0_11], %16 {strides = array<i32>} : memref<2x40xf32, #tpu.memory_space<vmem>>, vector<2x40xf32>,
    return
  }
}

module attributes {stable_mosaic.version = 11 : i64} {
  func.func @_rpn_conv_bn_kernel(%arg0: i32, %arg1: memref<1x16x128xbf16, #tpu.memory_space<vmem>>, %arg2: memref<3x144x256xbf16, #tpu.memory_space<vmem>>, %arg3: memref<1x256xf32, #tpu.memory_space<vmem>>, %arg4: memref<1x16x256xbf16, #tpu.memory_space<vmem>>, %arg5: memref<1x1x16xf32, #tpu.memory_space<vmem>>, %arg6: memref<1x1x16xf32, #tpu.memory_space<vmem>>, %arg7: memref<18x144xbf16, #tpu.memory_space<vmem>>) attributes {dimension_semantics = [#tpu.dimension_semantics<parallel>], iteration_bounds = array<i64: 2>, scalar_prefetch = 0 : i64, scratch_operands = 1 : i64, tpu.core_type = #tpu.core_type<tc>, window_params = [{transform_indices = @transform_0, window_bounds = array<i64: 1, 16, 128>}, {pipeline_mode = #tpu.pipeline_mode<synchronous>, transform_indices = @transform_1, window_bounds = array<i64: 3, 144, 256>}, {pipeline_mode = #tpu.pipeline_mode<synchronous>, transform_indices = @transform_2, window_bounds = array<i64: 1, 256>}, {transform_indices = @transform_3, window_bounds = array<i64: 1, 16, 256>}, {transform_indices = @transform_4, window_bounds = array<i64: 1, 1, 16>}, {transform_indices = @transform_5, window_bounds = array<i64: 1, 1, 16>}]} {
    %cst = arith.constant 0.000000e+00 : bf16
    %0 = vector.broadcast %cst : bf16 to vector<18x144xbf16>
    %c0 = arith.constant 0 : index
    %c0_0 = arith.constant 0 : index
    %1 = vector.load %arg7[%c0, %c0_0] : memref<18x144xbf16, #tpu.memory_space<vmem>>, vector<18x144xbf16>
    tpu.vector_store %arg7[%c0, %c0_0], %0 {strides = array<i32>} : memref<18x144xbf16, #tpu.memory_space<vmem>>, vector<18x144xbf16>,
    %c0_1 = arith.constant 0 : index
    %c0_2 = arith.constant 0 : index
    %c0_3 = arith.constant 0 : index
    %2 = vector.load %arg1[%c0_1, %c0_2, %c0_3] : memref<1x16x128xbf16, #tpu.memory_space<vmem>>, vector<1x16x128xbf16>
    %3 = vector.shape_cast %2 : vector<1x16x128xbf16> to vector<16x128xbf16>
    %c1 = arith.constant 1 : index
    %c8 = arith.constant 8 : index
    %4 = vector.load %arg7[%c1, %c8] : memref<18x144xbf16, #tpu.memory_space<vmem>>, vector<16x128xbf16>
    tpu.vector_store %arg7[%c1, %c8], %3 {strides = array<i32>} : memref<18x144xbf16, #tpu.memory_space<vmem>>, vector<16x128xbf16>,
    %cst_4 = arith.constant 0.000000e+00 : f32
    %5 = vector.broadcast %cst_4 : f32 to vector<16x256xf32>
    %c0_5 = arith.constant 0 : index
    %c0_6 = arith.constant 0 : index
    %6 = vector.load %arg7[%c0_5, %c0_6] : memref<18x144xbf16, #tpu.memory_space<vmem>>, vector<16x144xbf16>
    %c0_7 = arith.constant 0 : index
    %c0_8 = arith.constant 0 : index
    %c0_9 = arith.constant 0 : index
    %7 = vector.load %arg2[%c0_7, %c0_8, %c0_9] : memref<3x144x256xbf16, #tpu.memory_space<vmem>>, vector<1x144x256xbf16>
    %8 = vector.shape_cast %7 : vector<1x144x256xbf16> to vector<144x256xbf16>
    %cst_10 = arith.constant dense<0.000000e+00> : vector<16x256xf32>
    %9 = tpu.matmul %6, %8, %cst_10 {dimension_numbers = #tpu.dot_dimension_numbers<[1], [0], [0], [1], [0, 0, 1, 1], [], []>} : vector<16x144xbf16>, vector<144x256xbf16>, vector<16x256xf32> -> vector<16x256xf32>
    %10 = arith.addf %5, %9 : vector<16x256xf32>
    %c1_11 = arith.constant 1 : index
    %c0_12 = arith.constant 0 : index
    %11 = vector.load %arg7[%c1_11, %c0_12] : memref<18x144xbf16, #tpu.memory_space<vmem>>, vector<16x144xbf16>
    %c1_13 = arith.constant 1 : index
    %c0_14 = arith.constant 0 : index
    %c0_15 = arith.constant 0 : index
    %12 = vector.load %arg2[%c1_13, %c0_14, %c0_15] : memref<3x144x256xbf16, #tpu.memory_space<vmem>>, vector<1x144x256xbf16>
    %13 = vector.shape_cast %12 : vector<1x144x256xbf16> to vector<144x256xbf16>
    %cst_16 = arith.constant dense<0.000000e+00> : vector<16x256xf32>
    %14 = tpu.matmul %11, %13, %cst_16 {dimension_numbers = #tpu.dot_dimension_numbers<[1], [0], [0], [1], [0, 0, 1, 1], [], []>} : vector<16x144xbf16>, vector<144x256xbf16>, vector<16x256xf32> -> vector<16x256xf32>
    %15 = arith.addf %10, %14 : vector<16x256xf32>
    %c2 = arith.constant 2 : index
    %c0_17 = arith.constant 0 : index
    %16 = vector.load %arg7[%c2, %c0_17] : memref<18x144xbf16, #tpu.memory_space<vmem>>, vector<16x144xbf16>
    %c2_18 = arith.constant 2 : index
    %c0_19 = arith.constant 0 : index
    %c0_20 = arith.constant 0 : index
    %17 = vector.load %arg2[%c2_18, %c0_19, %c0_20] : memref<3x144x256xbf16, #tpu.memory_space<vmem>>, vector<1x144x256xbf16>
    %18 = vector.shape_cast %17 : vector<1x144x256xbf16> to vector<144x256xbf16>
    %cst_21 = arith.constant dense<0.000000e+00> : vector<16x256xf32>
    %19 = tpu.matmul %16, %18, %cst_21 {dimension_numbers = #tpu.dot_dimension_numbers<[1], [0], [0], [1], [0, 0, 1, 1], [], []>} : vector<16x144xbf16>, vector<144x256xbf16>, vector<16x256xf32> -> vector<16x256xf32>
    %20 = arith.addf %15, %19 : vector<16x256xf32>
    %c0_22 = arith.constant 0 : index
    %c0_23 = arith.constant 0 : index
    %21 = vector.load %arg3[%c0_22, %c0_23] : memref<1x256xf32, #tpu.memory_space<vmem>>, vector<1x256xf32>
    %22 = vector.shape_cast %21 : vector<1x256xf32> to vector<256xf32>
    %23 = vector.shape_cast %22 : vector<256xf32> to vector<1x256xf32>
    %24 = vector.broadcast %23 : vector<1x256xf32> to vector<16x256xf32>
    %25 = arith.addf %20, %24 : vector<16x256xf32>
    %cst_24 = arith.constant 0.000000e+00 : f32
    %26 = vector.broadcast %cst_24 : f32 to vector<16x256xf32>
    %27 = arith.maximumf %25, %26 : vector<16x256xf32>
    %28 = arith.truncf %27 : vector<16x256xf32> to vector<16x256xbf16>
    %c0_25 = arith.constant 0 : index
    %c0_26 = arith.constant 0 : index
    %c0_27 = arith.constant 0 : index
    %29 = vector.load %arg4[%c0_25, %c0_26, %c0_27] : memref<1x16x256xbf16, #tpu.memory_space<vmem>>, vector<1x16x256xbf16>
    %30 = vector.shape_cast %29 : vector<1x16x256xbf16> to vector<16x256xbf16>
    %31 = vector.shape_cast %28 : vector<16x256xbf16> to vector<1x16x256xbf16>
    tpu.vector_store %arg4[%c0_25, %c0_26, %c0_27], %31 {strides = array<i32>} : memref<1x16x256xbf16, #tpu.memory_space<vmem>>, vector<1x16x256xbf16>,
    %cst_28 = arith.constant dense<0.000000e+00> : vector<256xf32>
    %32 = vector.multi_reduction <add>, %27, %cst_28 [0] : vector<16x256xf32> to vector<256xf32>
    %33 = vector.shape_cast %32 : vector<256xf32> to vector<1x256xf32>
    %34 = arith.mulf %27, %27 : vector<16x256xf32>
    %cst_29 = arith.constant dense<0.000000e+00> : vector<256xf32>
    %35 = vector.multi_reduction <add>, %34, %cst_29 [0] : vector<16x256xf32> to vector<256xf32>
    %36 = vector.shape_cast %35 : vector<256xf32> to vector<1x256xf32>
    %37 = vector.extract_strided_slice %33 {offsets = [0, 0], sizes = [1, 16], strides = [1, 1]} : vector<1x256xf32> to vector<1x16xf32>
    %38 = vector.extract_strided_slice %36 {offsets = [0, 0], sizes = [1, 16], strides = [1, 1]} : vector<1x256xf32> to vector<1x16xf32>
    %39 = vector.extract_strided_slice %33 {offsets = [0, 16], sizes = [1, 16], strides = [1, 1]} : vector<1x256xf32> to vector<1x16xf32>
    %40 = arith.addf %37, %39 : vector<1x16xf32>
    %41 = vector.extract_strided_slice %36 {offsets = [0, 16], sizes = [1, 16], strides = [1, 1]} : vector<1x256xf32> to vector<1x16xf32>
    %42 = arith.addf %38, %41 : vector<1x16xf32>
    %43 = vector.extract_strided_slice %33 {offsets = [0, 32], sizes = [1, 16], strides = [1, 1]} : vector<1x256xf32> to vector<1x16xf32>
    %44 = arith.addf %40, %43 : vector<1x16xf32>
    %45 = vector.extract_strided_slice %36 {offsets = [0, 32], sizes = [1, 16], strides = [1, 1]} : vector<1x256xf32> to vector<1x16xf32>
    %46 = arith.addf %42, %45 : vector<1x16xf32>
    %47 = vector.extract_strided_slice %33 {offsets = [0, 48], sizes = [1, 16], strides = [1, 1]} : vector<1x256xf32> to vector<1x16xf32>
    %48 = arith.addf %44, %47 : vector<1x16xf32>
    %49 = vector.extract_strided_slice %36 {offsets = [0, 48], sizes = [1, 16], strides = [1, 1]} : vector<1x256xf32> to vector<1x16xf32>
    %50 = arith.addf %46, %49 : vector<1x16xf32>
    %51 = vector.extract_strided_slice %33 {offsets = [0, 64], sizes = [1, 16], strides = [1, 1]} : vector<1x256xf32> to vector<1x16xf32>
    %52 = arith.addf %48, %51 : vector<1x16xf32>
    %53 = vector.extract_strided_slice %36 {offsets = [0, 64], sizes = [1, 16], strides = [1, 1]} : vector<1x256xf32> to vector<1x16xf32>
    %54 = arith.addf %50, %53 : vector<1x16xf32>
    %55 = vector.extract_strided_slice %33 {offsets = [0, 80], sizes = [1, 16], strides = [1, 1]} : vector<1x256xf32> to vector<1x16xf32>
    %56 = arith.addf %52, %55 : vector<1x16xf32>
    %57 = vector.extract_strided_slice %36 {offsets = [0, 80], sizes = [1, 16], strides = [1, 1]} : vector<1x256xf32> to vector<1x16xf32>
    %58 = arith.addf %54, %57 : vector<1x16xf32>
    %59 = vector.extract_strided_slice %33 {offsets = [0, 96], sizes = [1, 16], strides = [1, 1]} : vector<1x256xf32> to vector<1x16xf32>
    %60 = arith.addf %56, %59 : vector<1x16xf32>
    %61 = vector.extract_strided_slice %36 {offsets = [0, 96], sizes = [1, 16], strides = [1, 1]} : vector<1x256xf32> to vector<1x16xf32>
    %62 = arith.addf %58, %61 : vector<1x16xf32>
    %63 = vector.extract_strided_slice %33 {offsets = [0, 112], sizes = [1, 16], strides = [1, 1]} : vector<1x256xf32> to vector<1x16xf32>
    %64 = arith.addf %60, %63 : vector<1x16xf32>
    %65 = vector.extract_strided_slice %36 {offsets = [0, 112], sizes = [1, 16], strides = [1, 1]} : vector<1x256xf32> to vector<1x16xf32>
    %66 = arith.addf %62, %65 : vector<1x16xf32>
    %67 = vector.extract_strided_slice %33 {offsets = [0, 128], sizes = [1, 16], strides = [1, 1]} : vector<1x256xf32> to vector<1x16xf32>
    %68 = arith.addf %64, %67 : vector<1x16xf32>
    %69 = vector.extract_strided_slice %36 {offsets = [0, 128], sizes = [1, 16], strides = [1, 1]} : vector<1x256xf32> to vector<1x16xf32>
    %70 = arith.addf %66, %69 : vector<1x16xf32>
    %71 = vector.extract_strided_slice %33 {offsets = [0, 144], sizes = [1, 16], strides = [1, 1]} : vector<1x256xf32> to vector<1x16xf32>
    %72 = arith.addf %68, %71 : vector<1x16xf32>
    %73 = vector.extract_strided_slice %36 {offsets = [0, 144], sizes = [1, 16], strides = [1, 1]} : vector<1x256xf32> to vector<1x16xf32>
    %74 = arith.addf %70, %73 : vector<1x16xf32>
    %75 = vector.extract_strided_slice %33 {offsets = [0, 160], sizes = [1, 16], strides = [1, 1]} : vector<1x256xf32> to vector<1x16xf32>
    %76 = arith.addf %72, %75 : vector<1x16xf32>
    %77 = vector.extract_strided_slice %36 {offsets = [0, 160], sizes = [1, 16], strides = [1, 1]} : vector<1x256xf32> to vector<1x16xf32>
    %78 = arith.addf %74, %77 : vector<1x16xf32>
    %79 = vector.extract_strided_slice %33 {offsets = [0, 176], sizes = [1, 16], strides = [1, 1]} : vector<1x256xf32> to vector<1x16xf32>
    %80 = arith.addf %76, %79 : vector<1x16xf32>
    %81 = vector.extract_strided_slice %36 {offsets = [0, 176], sizes = [1, 16], strides = [1, 1]} : vector<1x256xf32> to vector<1x16xf32>
    %82 = arith.addf %78, %81 : vector<1x16xf32>
    %83 = vector.extract_strided_slice %33 {offsets = [0, 192], sizes = [1, 16], strides = [1, 1]} : vector<1x256xf32> to vector<1x16xf32>
    %84 = arith.addf %80, %83 : vector<1x16xf32>
    %85 = vector.extract_strided_slice %36 {offsets = [0, 192], sizes = [1, 16], strides = [1, 1]} : vector<1x256xf32> to vector<1x16xf32>
    %86 = arith.addf %82, %85 : vector<1x16xf32>
    %87 = vector.extract_strided_slice %33 {offsets = [0, 208], sizes = [1, 16], strides = [1, 1]} : vector<1x256xf32> to vector<1x16xf32>
    %88 = arith.addf %84, %87 : vector<1x16xf32>
    %89 = vector.extract_strided_slice %36 {offsets = [0, 208], sizes = [1, 16], strides = [1, 1]} : vector<1x256xf32> to vector<1x16xf32>
    %90 = arith.addf %86, %89 : vector<1x16xf32>
    %91 = vector.extract_strided_slice %33 {offsets = [0, 224], sizes = [1, 16], strides = [1, 1]} : vector<1x256xf32> to vector<1x16xf32>
    %92 = arith.addf %88, %91 : vector<1x16xf32>
    %93 = vector.extract_strided_slice %36 {offsets = [0, 224], sizes = [1, 16], strides = [1, 1]} : vector<1x256xf32> to vector<1x16xf32>
    %94 = arith.addf %90, %93 : vector<1x16xf32>
    %95 = vector.extract_strided_slice %33 {offsets = [0, 240], sizes = [1, 16], strides = [1, 1]} : vector<1x256xf32> to vector<1x16xf32>
    %96 = arith.addf %92, %95 : vector<1x16xf32>
    %97 = vector.extract_strided_slice %36 {offsets = [0, 240], sizes = [1, 16], strides = [1, 1]} : vector<1x256xf32> to vector<1x16xf32>
    %98 = arith.addf %94, %97 : vector<1x16xf32>
    %c0_30 = arith.constant 0 : index
    %c0_31 = arith.constant 0 : index
    %c0_32 = arith.constant 0 : index
    %99 = vector.load %arg5[%c0_30, %c0_31, %c0_32] : memref<1x1x16xf32, #tpu.memory_space<vmem>>, vector<1x1x16xf32>
    %100 = vector.shape_cast %99 : vector<1x1x16xf32> to vector<1x16xf32>
    %101 = vector.shape_cast %96 : vector<1x16xf32> to vector<1x1x16xf32>
    tpu.vector_store %arg5[%c0_30, %c0_31, %c0_32], %101 {strides = array<i32>} : memref<1x1x16xf32, #tpu.memory_space<vmem>>, vector<1x1x16xf32>,
    %c0_33 = arith.constant 0 : index
    %c0_34 = arith.constant 0 : index
    %c0_35 = arith.constant 0 : index
    %102 = vector.load %arg6[%c0_33, %c0_34, %c0_35] : memref<1x1x16xf32, #tpu.memory_space<vmem>>, vector<1x1x16xf32>
    %103 = vector.shape_cast %102 : vector<1x1x16xf32> to vector<1x16xf32>
    %104 = vector.shape_cast %98 : vector<1x16xf32> to vector<1x1x16xf32>
    tpu.vector_store %arg6[%c0_33, %c0_34, %c0_35], %104 {strides = array<i32>} : memref<1x1x16xf32, #tpu.memory_space<vmem>>, vector<1x1x16xf32>,
    return
  }
  func.func @transform_0(%arg0: i32) -> (i32, i32, i32) {
    %c0_i32 = arith.constant 0 : i32
    %c0_i32_0 = arith.constant 0 : i32
    %c0_i32_1 = arith.constant 0 : i32
    return %arg0, %c0_i32, %c0_i32_0 : i32, i32, i32
  }
  func.func @transform_1(%arg0: i32) -> (i32, i32, i32) {
    %c0_i32 = arith.constant 0 : i32
    %c0_i32_0 = arith.constant 0 : i32
    %c0_i32_1 = arith.constant 0 : i32
    %c0_i32_2 = arith.constant 0 : i32
    return %c0_i32, %c0_i32_0, %c0_i32_1 : i32, i32, i32
  }
  func.func @transform_2(%arg0: i32) -> (i32, i32) {
    %c0_i32 = arith.constant 0 : i32
    %c0_i32_0 = arith.constant 0 : i32
    %c0_i32_1 = arith.constant 0 : i32
    return %c0_i32, %c0_i32_0 : i32, i32
  }
  func.func @transform_3(%arg0: i32) -> (i32, i32, i32) {
    %c0_i32 = arith.constant 0 : i32
    %c0_i32_0 = arith.constant 0 : i32
    %c0_i32_1 = arith.constant 0 : i32
    return %arg0, %c0_i32, %c0_i32_0 : i32, i32, i32
  }
  func.func @transform_4(%arg0: i32) -> (i32, i32, i32) {
    %c0_i32 = arith.constant 0 : i32
    %c0_i32_0 = arith.constant 0 : i32
    %c0_i32_1 = arith.constant 0 : i32
    return %arg0, %c0_i32, %c0_i32_0 : i32, i32, i32
  }
  func.func @transform_5(%arg0: i32) -> (i32, i32, i32) {
    %c0_i32 = arith.constant 0 : i32
    %c0_i32_0 = arith.constant 0 : i32
    %c0_i32_1 = arith.constant 0 : i32
    return %arg0, %c0_i32, %c0_i32_0 : i32, i32, i32
  }
}

module attributes {stable_mosaic.version = 11 : i64} {
  func.func @_rpn_head_kernel(%arg0: i32, %arg1: memref<1x16x256xbf16, #tpu.memory_space<vmem>>, %arg2: memref<1x256xf32, #tpu.memory_space<vmem>>, %arg3: memref<1x256xf32, #tpu.memory_space<vmem>>, %arg4: memref<256x896xbf16, #tpu.memory_space<vmem>>, %arg5: memref<1x896xf32, #tpu.memory_space<vmem>>, %arg6: memref<1x16x896xf32, #tpu.memory_space<vmem>>) attributes {dimension_semantics = [#tpu.dimension_semantics<parallel>], iteration_bounds = array<i64: 2>, scalar_prefetch = 0 : i64, scratch_operands = 0 : i64, tpu.core_type = #tpu.core_type<tc>, window_params = [{transform_indices = @transform_0, window_bounds = array<i64: 1, 16, 256>}, {pipeline_mode = #tpu.pipeline_mode<synchronous>, transform_indices = @transform_1, window_bounds = array<i64: 1, 256>}, {pipeline_mode = #tpu.pipeline_mode<synchronous>, transform_indices = @transform_2, window_bounds = array<i64: 1, 256>}, {pipeline_mode = #tpu.pipeline_mode<synchronous>, transform_indices = @transform_3, window_bounds = array<i64: 256, 896>}, {pipeline_mode = #tpu.pipeline_mode<synchronous>, transform_indices = @transform_4, window_bounds = array<i64: 1, 896>}, {transform_indices = @transform_5, window_bounds = array<i64: 1, 16, 896>}]} {
    %c0 = arith.constant 0 : index
    %c0_0 = arith.constant 0 : index
    %c0_1 = arith.constant 0 : index
    %0 = vector.load %arg1[%c0, %c0_0, %c0_1] : memref<1x16x256xbf16, #tpu.memory_space<vmem>>, vector<1x16x256xbf16>
    %1 = vector.shape_cast %0 : vector<1x16x256xbf16> to vector<16x256xbf16>
    %2 = arith.extf %1 : vector<16x256xbf16> to vector<16x256xf32>
    %c0_2 = arith.constant 0 : index
    %c0_3 = arith.constant 0 : index
    %3 = vector.load %arg2[%c0_2, %c0_3] : memref<1x256xf32, #tpu.memory_space<vmem>>, vector<1x256xf32>
    %4 = vector.shape_cast %3 : vector<1x256xf32> to vector<256xf32>
    %5 = vector.shape_cast %4 : vector<256xf32> to vector<1x256xf32>
    %6 = vector.broadcast %5 : vector<1x256xf32> to vector<16x256xf32>
    %7 = arith.mulf %2, %6 : vector<16x256xf32>
    %c0_4 = arith.constant 0 : index
    %c0_5 = arith.constant 0 : index
    %8 = vector.load %arg3[%c0_4, %c0_5] : memref<1x256xf32, #tpu.memory_space<vmem>>, vector<1x256xf32>
    %9 = vector.shape_cast %8 : vector<1x256xf32> to vector<256xf32>
    %10 = vector.shape_cast %9 : vector<256xf32> to vector<1x256xf32>
    %11 = vector.broadcast %10 : vector<1x256xf32> to vector<16x256xf32>
    %12 = arith.addf %7, %11 : vector<16x256xf32>
    %13 = arith.truncf %12 : vector<16x256xf32> to vector<16x256xbf16>
    %c0_6 = arith.constant 0 : index
    %c0_7 = arith.constant 0 : index
    %14 = vector.load %arg4[%c0_6, %c0_7] : memref<256x896xbf16, #tpu.memory_space<vmem>>, vector<256x896xbf16>
    %cst = arith.constant dense<0.000000e+00> : vector<16x896xf32>
    %15 = tpu.matmul %13, %14, %cst {dimension_numbers = #tpu.dot_dimension_numbers<[1], [0], [0], [1], [0, 0, 1, 1], [], []>} : vector<16x256xbf16>, vector<256x896xbf16>, vector<16x896xf32> -> vector<16x896xf32>
    %c0_8 = arith.constant 0 : index
    %c0_9 = arith.constant 0 : index
    %16 = vector.load %arg5[%c0_8, %c0_9] : memref<1x896xf32, #tpu.memory_space<vmem>>, vector<1x896xf32>
    %17 = vector.shape_cast %16 : vector<1x896xf32> to vector<896xf32>
    %18 = vector.shape_cast %17 : vector<896xf32> to vector<1x896xf32>
    %19 = vector.broadcast %18 : vector<1x896xf32> to vector<16x896xf32>
    %20 = arith.addf %15, %19 : vector<16x896xf32>
    %c0_10 = arith.constant 0 : index
    %c0_11 = arith.constant 0 : index
    %c0_12 = arith.constant 0 : index
    %21 = vector.load %arg6[%c0_10, %c0_11, %c0_12] : memref<1x16x896xf32, #tpu.memory_space<vmem>>, vector<1x16x896xf32>
    %22 = vector.shape_cast %21 : vector<1x16x896xf32> to vector<16x896xf32>
    %23 = vector.shape_cast %20 : vector<16x896xf32> to vector<1x16x896xf32>
    tpu.vector_store %arg6[%c0_10, %c0_11, %c0_12], %23 {strides = array<i32>} : memref<1x16x896xf32, #tpu.memory_space<vmem>>, vector<1x16x896xf32>,
    return
  }
  func.func @transform_0(%arg0: i32) -> (i32, i32, i32) {
    %c0_i32 = arith.constant 0 : i32
    %c0_i32_0 = arith.constant 0 : i32
    %c0_i32_1 = arith.constant 0 : i32
    return %arg0, %c0_i32, %c0_i32_0 : i32, i32, i32
  }
  func.func @transform_1(%arg0: i32) -> (i32, i32) {
    %c0_i32 = arith.constant 0 : i32
    %c0_i32_0 = arith.constant 0 : i32
    %c0_i32_1 = arith.constant 0 : i32
    return %c0_i32, %c0_i32_0 : i32, i32
  }
  func.func @transform_2(%arg0: i32) -> (i32, i32) {
    %c0_i32 = arith.constant 0 : i32
    %c0_i32_0 = arith.constant 0 : i32
    %c0_i32_1 = arith.constant 0 : i32
    return %c0_i32, %c0_i32_0 : i32, i32
  }
  func.func @transform_3(%arg0: i32) -> (i32, i32) {
    %c0_i32 = arith.constant 0 : i32
    %c0_i32_0 = arith.constant 0 : i32
    %c0_i32_1 = arith.constant 0 : i32
    return %c0_i32, %c0_i32_0 : i32, i32
  }
  func.func @transform_4(%arg0: i32) -> (i32, i32) {
    %c0_i32 = arith.constant 0 : i32
    %c0_i32_0 = arith.constant 0 : i32
    %c0_i32_1 = arith.constant 0 : i32
    return %c0_i32, %c0_i32_0 : i32, i32
  }
  func.func @transform_5(%arg0: i32) -> (i32, i32, i32) {
    %c0_i32 = arith.constant 0 : i32
    %c0_i32_0 = arith.constant 0 : i32
    %c0_i32_1 = arith.constant 0 : i32
    return %arg0, %c0_i32, %c0_i32_0 : i32, i32, i32
  }
}

</mosaic_0001>

<llo_original>
// kernel: tile.26
$region0: #{tile.26}
  #allocation0 [shape = 's32[1]{0}', space=sflag, size = 0x4, scoped, tag = 'scoped memory for tile.26']
  %s0 = inlined_call_operand.vmem [shape: f32[8], index: 0, kind: input, shape index: {}]
  %s1 = inlined_call_operand.vmem [shape: f32[16,8], index: 1, kind: output, shape index: {}]
  // Predicated region
  $region2: #{tile.26} parent=0 // pred_check
    _
  $region3: #{tile.26} parent=0 // pred_check_branch
    %3 = sbr.rel (0) target = $region5
  $region4: #{tile.26} parent=0 // pred_region
    _
  $region5: #{tile.26} parent=0 // pred_fallthru
    _
  %v4 = vld [vmem:[%s0] ss:$0 sm:$0xff]
  %5 = vst [vmem:[%s1] sm:$0xff] %v4
  %s6 = scalar_lea.vmem %s1, 8
  %7 = vst [vmem:[%s6] sm:$0xff] %v4

// kernel: tile.27
$region0: #{tile.27}
  %s0 = inlined_call_operand.vmem [shape: f32[16,8], index: 0, kind: input, shape index: {}]
  %s1 = inlined_call_operand.vmem [shape: f32[1,128], index: 1, kind: output, shape index: {}]
  $region1: #{tile.27} parent=0
    #allocation0 [shape = 'u8[4096]{0}', space=vmem, size = 0x1000, scoped, tag = 'scoped mem for output reshape']
    %v2 = vld [vmem:[%s0] sm:$0x1]
    %vm3 = vcmask 64512
    %4 = vst.msk [vmem:[#allocation0] sm:$0x1] %vm3, %v2
    %s5 = scalar_lea.vmem %s0, 15
    %v6 = vld [vmem:[%s5] sm:$0x1]
    %7 = vrot.lane.b32.xlu0 %v6, 120
    %v8 = vpop.permute.xlu0 %7
    %vm9 = vcmask 1048512
    %10 = vst.msk [vmem:[#allocation0] sm:$0x1] %vm9, %v8
    %s11 = scalar_lea.vmem %s0, 14
    %v12 = vld [vmem:[%s11] sm:$0x1]
    %13 = vrot.lane.b32.xlu0 %v12, 112
    %v14 = vpop.permute.xlu0 %13
    %vm15 = vcmask 982912
    %16 = vst.msk [vmem:[#allocation0] sm:$0x1] %vm15, %v14
    %s17 = scalar_lea.vmem %s0, 13
    %v18 = vld [vmem:[%s17] sm:$0x1]
    %19 = vrot.lane.b32.xlu0 %v18, 104
    %v20 = vpop.permute.xlu0 %19
    %vm21 = vcmask 917312
    %22 = vst.msk [vmem:[#allocation0] sm:$0x1] %vm21, %v20
    %s23 = scalar_lea.vmem %s0, 12
    %v24 = vld [vmem:[%s23] sm:$0x1]
    %25 = vrot.lane.b32.xlu0 %v24, 96
    %v26 = vpop.permute.xlu0 %25
    %vm27 = vcmask 851712
    %28 = vst.msk [vmem:[#allocation0] sm:$0x1] %vm27, %v26
    %s29 = scalar_lea.vmem %s0, 11
    %v30 = vld [vmem:[%s29] sm:$0x1]
    %31 = vrot.lane.b32.xlu0 %v30, 88
    %v32 = vpop.permute.xlu0 %31
    %vm33 = vcmask 786112
    %34 = vst.msk [vmem:[#allocation0] sm:$0x1] %vm33, %v32
    %s35 = scalar_lea.vmem %s0, 10
    %v36 = vld [vmem:[%s35] sm:$0x1]
    %37 = vrot.lane.b32.xlu0 %v36, 80
    %v38 = vpop.permute.xlu0 %37
    %vm39 = vcmask 720512
    %40 = vst.msk [vmem:[#allocation0] sm:$0x1] %vm39, %v38
    %s41 = scalar_lea.vmem %s0, 9
    %v42 = vld [vmem:[%s41] sm:$0x1]
    %43 = vrot.lane.b32.xlu0 %v42, 72
    %v44 = vpop.permute.xlu0 %43
    %vm45 = vcmask 654912
    %46 = vst.msk [vmem:[#allocation0] sm:$0x1] %vm45, %v44
    %s47 = scalar_lea.vmem %s0, 8
    %v48 = vld [vmem:[%s47] sm:$0x1]
    %49 = vrot.lane.b32.xlu0 %v48, 64
    %v50 = vpop.permute.xlu0 %49
    %vm51 = vcmask 589312
    %52 = vst.msk [vmem:[#allocation0] sm:$0x1] %vm51, %v50
    %s53 = scalar_lea.vmem %s0, 7
    %v54 = vld [vmem:[%s53] sm:$0x1]
    %55 = vrot.lane.b32.xlu0 %v54, 56
    %v56 = vpop.permute.xlu0 %55
    %vm57 = vcmask 523712
    %58 = vst.msk [vmem:[#allocation0] sm:$0x1] %vm57, %v56
    %s59 = scalar_lea.vmem %s0, 6
    %v60 = vld [vmem:[%s59] sm:$0x1]
    %61 = vrot.lane.b32.xlu0 %v60, 48
    %v62 = vpop.permute.xlu0 %61
    %vm63 = vcmask 458112
    %64 = vst.msk [vmem:[#allocation0] sm:$0x1] %vm63, %v62
    %s65 = scalar_lea.vmem %s0, 5
    %v66 = vld [vmem:[%s65] sm:$0x1]
    %67 = vrot.lane.b32.xlu0 %v66, 40
    %v68 = vpop.permute.xlu0 %67
    %vm69 = vcmask 392512
    %70 = vst.msk [vmem:[#allocation0] sm:$0x1] %vm69, %v68
    %s71 = scalar_lea.vmem %s0, 4
    %v72 = vld [vmem:[%s71] sm:$0x1]
    %73 = vrot.lane.b32.xlu0 %v72, 32
    %v74 = vpop.permute.xlu0 %73
    %vm75 = vcmask 326912
    %76 = vst.msk [vmem:[#allocation0] sm:$0x1] %vm75, %v74
    %s77 = scalar_lea.vmem %s0, 3
    %v78 = vld [vmem:[%s77] sm:$0x1]
    %79 = vrot.lane.b32.xlu0 %v78, 24
    %v80 = vpop.permute.xlu0 %79
    %vm81 = vcmask 261312
    %82 = vst.msk [vmem:[#allocation0] sm:$0x1] %vm81, %v80
    %s83 = scalar_lea.vmem %s0, 2
    %v84 = vld [vmem:[%s83] sm:$0x1]
    %85 = vrot.lane.b32.xlu0 %v84, 16
    %v86 = vpop.permute.xlu0 %85
    %vm87 = vcmask 195712
    %88 = vst.msk [vmem:[#allocation0] sm:$0x1] %vm87, %v86
    %s89 = scalar_lea.vmem %s0, 1
    %v90 = vld [vmem:[%s89] sm:$0x1]
    %91 = vrot.lane.b32.xlu0 %v90, 8
    %v92 = vpop.permute.xlu0 %91
    %vm93 = vcmask 130112
    %94 = vst.msk [vmem:[#allocation0] sm:$0x1] %vm93, %v92
    %s96 = sshll.u32 1, 1
    %s97 = ssub.s32 %s96, 1
    %v99 = vld [vmem:[#allocation0] sm:%s97]
    %s100 = sshll.u32 1, 1
    %s101 = ssub.s32 %s100, 1
    %102 = vst [vmem:[%s1] sm:%s101] %v99

// kernel: faster_rcnn_forward.4
$region0: #{faster_rcnn_forward.4}
  #allocation0 [shape = 'u32[]', space=smem, size = 0x4, offset = 0x4, fixed_abs, tag = 'smem constant byte address 0x4 - core index']
  #allocation1 [shape = 'u32[144,128]{1,0:T(1,128)}', space=vmem, size = 0x12000, scoped, tag = 'internal scratch']
  #allocation2 [shape = 'bf16[18,72]{1,0:T(8,128)(2,1)}', space=vmem, size = 0x1800, scoped, tag = 'scratch operand']
  #allocation3 [shape = 'f32[7,128]{1,0:T(8,128)}', space=vmem, size = 0x1000, scoped, tag = 'scratch operand']
  %s0 = inlined_call_operand.vmem [shape: bf16[2,16,64], index: 0, kind: input, shape index: {}]
  %s1 = inlined_call_operand.vmem [shape: bf16[3,72,128], index: 1, kind: input, shape index: {}]
  %s2 = inlined_call_operand.vmem [shape: f32[1,128], index: 2, kind: input, shape index: {}]
  %s3 = inlined_call_operand.vmem [shape: bf16[2,16,128], index: 3, kind: output, shape index: {0}]
  %s4 = inlined_call_operand.vmem [shape: f32[2,7,56], index: 4, kind: output, shape index: {1}]
  %5 = xla_tuple %s3, %s4
  %s6 = sld [smem:[#allocation0]]
  $region53: #{faster_rcnn_forward.4} parent=0
    _
  %s8 = ssub.s32 1, %s6
  %s9 = scalar_select 0, %s8, %s6
  loop: start=0, step=1, limit=4
  $region2: #{faster_rcnn_forward.4} parent=0 // loop_pre_header
    _
  $region3: #{faster_rcnn_forward.4} parent=0 // loop_header
    %s11 = sphi 0, %s15
    %p12 = scmp.ge.s32.totalorder %s11, 4
    %s21 = sphi 0, %s23
    %s24 = sphi 0, %s21
    %s25 = sphi 0, %s24
    %s41 = sphi 0, %s25
    %s45 = sphi 0, %s45
    %s47 = sphi 0, %s45
    %s48 = sphi 0, %s47
    %s62 = sphi 0, %s48
    %s66 = sphi 0, %s66
    %s68 = sphi 0, %s66
    %s69 = sphi 0, %s68
    %s83 = sphi 0, %s69
    %s89 = sphi 0, %s91
    %s92 = sphi 0, %s89
    %s93 = sphi 0, %s92
    %s109 = sphi 0, %s93
    %s115 = sphi 0, %s117
    %s118 = sphi 0, %s115
    %s119 = sphi 0, %s118
    %s135 = sphi 0, %s119
  $region4: #{faster_rcnn_forward.4} parent=0 // loop_header_branch
    %14 = sbr.rel (%p12) target = $region8
  $region5: #{faster_rcnn_forward.4} parent=0 // loop_body
    %s16 = ssub.s32 %s11, 1
    %s17 = ssub.s32 %s11, 2
    %s18 = sadd.s32 %s11, 1
    %s19 = ssub.s32 %s11, %s18
    %p20 = scmp.eq.s32.totalorder %s19, 0
    %s22 = sadd.s32 %s21, 1
    %s23 = scalar_select %p20, %s21, %s22
    %p26 = pneg %p20
    %p27 = scmp.eq.s32.totalorder %s11, 1
    %p28 = por %p26, %p27
    %p29 = scmp.ne.s32.totalorder %s21, %s24
    %p30 = scmp.eq.s32.totalorder %s11, 0
    %p31 = por %p29, %p30
    %p32 = scmp.ne.s32.totalorder %s21, %s24
    %p33 = scmp.eq.s32.totalorder %s16, 1
    %p34 = por %p32, %p33
    %p35 = scmp.ne.s32.totalorder %s24, %s25
    %p36 = scmp.eq.s32.totalorder %s16, 0
    %p37 = por %p35, %p36
    %p38 = scmp.ne.s32.totalorder %s24, %s25
    %p39 = scmp.eq.s32.totalorder %s17, 1
    %p40 = por %p38, %p39
    %p42 = scmp.ne.s32.totalorder %s25, %s41
    %p43 = scmp.eq.s32.totalorder %s17, 0
    %p44 = por %p42, %p43
    %s46 = sadd.s32 %s45, 1
    %p49 = scmp.eq.s32.totalorder %s11, 1
    %p50 = scmp.ne.s32.totalorder %s45, %s47
    %p51 = scmp.eq.s32.totalorder %s11, 0
    %p52 = por %p50, %p51
    %p53 = scmp.ne.s32.totalorder %s45, %s47
    %p54 = scmp.eq.s32.totalorder %s16, 1
    %p55 = por %p53, %p54
    %p56 = scmp.ne.s32.totalorder %s47, %s48
    %p57 = scmp.eq.s32.totalorder %s16, 0
    %p58 = por %p56, %p57
    %p59 = scmp.ne.s32.totalorder %s47, %s48
    %p60 = scmp.eq.s32.totalorder %s17, 1
    %p61 = por %p59, %p60
    %p63 = scmp.ne.s32.totalorder %s48, %s62
    %p64 = scmp.eq.s32.totalorder %s17, 0
    %p65 = por %p63, %p64
    %s67 = sadd.s32 %s66, 1
    %p70 = scmp.eq.s32.totalorder %s11, 1
    %p71 = scmp.ne.s32.totalorder %s66, %s68
    %p72 = scmp.eq.s32.totalorder %s11, 0
    %p73 = por %p71, %p72
    %p74 = scmp.ne.s32.totalorder %s66, %s68
    %p75 = scmp.eq.s32.totalorder %s16, 1
    %p76 = por %p74, %p75
    %p77 = scmp.ne.s32.totalorder %s68, %s69
    %p78 = scmp.eq.s32.totalorder %s16, 0
    %p79 = por %p77, %p78
    %p80 = scmp.ne.s32.totalorder %s68, %s69
    %p81 = scmp.eq.s32.totalorder %s17, 1
    %p82 = por %p80, %p81
    %p84 = scmp.ne.s32.totalorder %s69, %s83
    %p85 = scmp.eq.s32.totalorder %s17, 0
    %p86 = por %p84, %p85
    %s87 = ssub.s32 %s11, %s18
    %p88 = scmp.eq.s32.totalorder %s87, 0
    %s90 = sadd.s32 %s89, 1
    %s91 = scalar_select %p88, %s89, %s90
    %p94 = pneg %p88
    %p95 = scmp.eq.s32.totalorder %s11, 1
    %p96 = por %p94, %p95
    %p97 = scmp.ne.s32.totalorder %s89, %s92
    %p98 = scmp.eq.s32.totalorder %s11, 0
    %p99 = por %p97, %p98
    %p100 = scmp.ne.s32.totalorder %s89, %s92
    %p101 = scmp.eq.s32.totalorder %s16, 1
    %p102 = por %p100, %p101
    %p103 = scmp.ne.s32.totalorder %s92, %s93
    %p104 = scmp.eq.s32.totalorder %s16, 0
    %p105 = por %p103, %p104
    %p106 = scmp.ne.s32.totalorder %s92, %s93
    %p107 = scmp.eq.s32.totalorder %s17, 1
    %p108 = por %p106, %p107
    %p110 = scmp.ne.s32.totalorder %s93, %s109
    %p111 = scmp.eq.s32.totalorder %s17, 0
    %p112 = por %p110, %p111
    %s113 = ssub.s32 %s11, %s18
    %p114 = scmp.eq.s32.totalorder %s113, 0
    %s116 = sadd.s32 %s115, 1
    %s117 = scalar_select %p114, %s115, %s116
    %p120 = pneg %p114
    %p121 = scmp.eq.s32.totalorder %s11, 1
    %p122 = por %p120, %p121
    %p123 = scmp.ne.s32.totalorder %s115, %s118
    %p124 = scmp.eq.s32.totalorder %s11, 0
    %p125 = por %p123, %p124
    %p126 = scmp.ne.s32.totalorder %s115, %s118
    %p127 = scmp.eq.s32.totalorder %s16, 1
    %p128 = por %p126, %p127
    %p129 = scmp.ne.s32.totalorder %s118, %s119
    %p130 = scmp.eq.s32.totalorder %s16, 0
    %p131 = por %p129, %p130
    %p132 = scmp.ne.s32.totalorder %s118, %s119
    %p133 = scmp.eq.s32.totalorder %s17, 1
    %p134 = por %p132, %p133
    %p136 = scmp.ne.s32.totalorder %s119, %s135
    %p137 = scmp.eq.s32.totalorder %s17, 0
    %p138 = por %p136, %p137
    %p139 = scmp.le.s32.totalorder 1, %s11
    %p140 = scmp.lt.s32.totalorder %s11, 3
    %p141 = pnand %p139, %p140
    %p142 = pneg %p141
    // Predicated region
    $region9: #{faster_rcnn_forward.4} parent=5 // pred_check
      _
    $region10: #{faster_rcnn_forward.4} parent=5 // pred_check_branch
      %144 = sbr.rel (%p141) target = $region12
    $region11: #{faster_rcnn_forward.4} parent=5 // pred_region
      %s145 = ssub.s32 %s11, 1
      // Predicated region
      $region13: #{faster_rcnn_forward.4} parent=11 // pred_check
        %p146 = pneg %p58
      $region14: #{faster_rcnn_forward.4} parent=11 // pred_check_branch
        %148 = sbr.rel (%p146) target = $region16
      $region15: #{faster_rcnn_forward.4} parent=11 // pred_region
        _
      $region16: #{faster_rcnn_forward.4} parent=11 // pred_fallthru
        _
      // Predicated region
      $region17: #{faster_rcnn_forward.4} parent=11 // pred_check
        %p149 = pneg %p79
      $region18: #{faster_rcnn_forward.4} parent=11 // pred_check_branch
        %151 = sbr.rel (%p149) target = $region20
      $region19: #{faster_rcnn_forward.4} parent=11 // pred_region
        _
      $region20: #{faster_rcnn_forward.4} parent=11 // pred_fallthru
        _
    $region12: #{faster_rcnn_forward.4} parent=5 // pred_fallthru
      _
    %p152 = scmp.lt.s32.totalorder %s11, 2
    // Predicated region
    $region21: #{faster_rcnn_forward.4} parent=5 // pred_check
      %p153 = pneg %p152
    $region22: #{faster_rcnn_forward.4} parent=5 // pred_check_branch
      %155 = sbr.rel (%p153) target = $region24
    $region23: #{faster_rcnn_forward.4} parent=5 // pred_region
      // Predicated region
      $region25: #{faster_rcnn_forward.4} parent=23 // pred_check
        %p156 = pneg %p31
      $region26: #{faster_rcnn_forward.4} parent=23 // pred_check_branch
        %158 = sbr.rel (%p156) target = $region28
      $region27: #{faster_rcnn_forward.4} parent=23 // pred_region
        %p159 = scmp.lt.s32.totalorder %s11, 1
        %s160 = scalar_select %p159, %s11, 1
        %s161 = smul.addr %s160, 2
        %s162 = smul.addr %s161, 4
        %s163 = scalar_lea.vmem %s0, %s162
      $region28: #{faster_rcnn_forward.4} parent=23 // pred_fallthru
        _
    $region24: #{faster_rcnn_forward.4} parent=5 // pred_fallthru
      _
    %p164 = scmp.le.s32.totalorder 1, %s11
    %p165 = scmp.lt.s32.totalorder %s11, 3
    %p166 = pnand %p164, %p165
    %p167 = pneg %p166
    // Predicated region
    $region29: #{faster_rcnn_forward.4} parent=5 // pred_check
      _
    $region30: #{faster_rcnn_forward.4} parent=5 // pred_check_branch
      %169 = sbr.rel (%p166) target = $region32
    $region31: #{faster_rcnn_forward.4} parent=5 // pred_region
      %s170 = ssub.s32 %s11, 1
      %p171 = scmp.lt.s32.totalorder %s16, 1
      %s172 = scalar_select %p171, %s16, 1
      %s173 = smul.addr %s172, 2
      %s174 = smul.addr %s173, 4
      %s175 = scalar_lea.vmem %s0, %s174
      %p176 = pneg %p37
      %p177 = pneg %p34
      %p178 = pneg %p58
      %p179 = pneg %p55
      %p180 = pneg %p79
      %p181 = pneg %p76
      %p182 = pneg %p105
      %p183 = pneg %p102
      %p184 = scmp.lt.s32.totalorder %s16, 1
      %s185 = scalar_select %p184, %s16, 1
      %s186 = smul.addr %s185, 2
      %s187 = smul.addr %s186, 4
      %s188 = scalar_lea.vmem %s3, %s187
      %p189 = pneg %p131
      %p190 = pneg %p128
      %p191 = scmp.lt.s32.totalorder %s16, 1
      %s192 = scalar_select %p191, %s16, 1
      %s193 = smul.addr %s192, 8
      %s194 = scalar_lea.vmem %s4, %s193
      %p195 = scmp.lt.s32.totalorder %s16, 1
      %s196 = scalar_select %p195, %s16, 1
      %s197 = smul.addr %s196, 2
      %s198 = smul.addr %s197, 4
      %s199 = scalar_lea.vmem %s0, %s198
      %p200 = scmp.lt.s32.totalorder %s16, 1
      %s201 = scalar_select %p200, %s16, 1
      %s202 = smul.addr %s201, 2
      %s203 = smul.addr %s202, 4
      %s204 = scalar_lea.vmem %s3, %s203
      %p205 = scmp.lt.s32.totalorder %s16, 1
      %s206 = scalar_select %p205, %s16, 1
      %s207 = smul.addr %s206, 8
      %s208 = scalar_lea.vmem %s4, %s207
      %vm210 = vcmask 584704
      %211 = vst.msk [vmem:[#allocation2] sm:$0xf] %vm210, 0
      %212 = vst.msk [vmem:[#allocation2 + $0x4] sm:$0xf] %vm210, 0
      %vm213 = vcmask 581632
      %214 = vst.msk [vmem:[#allocation2 + $0x8] sm:$0x1] %vm213, 0
      %v215 = vld [vmem:[%s199] sm:$0xf]
      %v216 = vld [vmem:[%s199 + $0x4] sm:$0xf]
      %vm217 = vsmask.f32 256
      %vm218 = vsmask.f32 4368
      %vm219 = vmor %vm217, %vm218
      %v221 = vshrl.u32 %v215, 16
      %v223 = vrot.slane %v221, 7
      %v224 = vshll.u32 %v215, 16
      %v226 = vor.u32 %v223, %v224
      %v227 = vrot.slane %v223, 4
      %v229 = vshrl.u32 %v216, 16
      %v231 = vrot.slane %v229, 7
      %v232 = vshll.u32 %v216, 16
      %v234 = vor.u32 %v231, %v232
      %v235 = vsel %vm219, %v227, %v234
      %v236 = vrot.slane %v231, 4
      %237 = vrot.lane.b32.xlu0 %v226, 4
      %v238 = vpop.permute.xlu0 %237
      %239 = vrot.lane.b32.xlu0 %v235, 4
      %v240 = vpop.permute.xlu0 %239
      %241 = vrot.lane.b32.xlu0 %v236, 4
      %v242 = vpop.permute.xlu0 %241
      %vm246 = vcmask 551968
      %vm247 = vsmask.f32 7938
      %vm248 = vmand %vm246, %vm247
      %v249 = vld [vmem:[#allocation2] sm:$0xf]
      %v250 = vsel %vm248, %v238, %v249
      %251 = vst [vmem:[#allocation2] sm:$0xf] %v250
      %vm252 = vcmask 551968
      %253 = vst.msk [vmem:[#allocation2 + $0x4] sm:$0xf] %vm252, %v240
      %vm254 = vcmask 548896
      %vm255 = vmand %vm254, %vm217
      %v256 = vld [vmem:[#allocation2 + $0x8] sm:$0x1]
      %v257 = vsel %vm255, %v242, %v256
      %258 = vst [vmem:[#allocation2 + $0x8] sm:$0x1] %v257
      %v259 = vld [vmem:[#allocation2] sm:$0xf]
      %v260 = vld [vmem:[#allocation2 + $0x4] sm:$0xf]
      %v261 = vld [vmem:[%s1] sm:$0xf]
      %v262 = vld [vmem:[%s1 + $0x4] sm:$0xf]
      %v263 = vld [vmem:[%s1 + $0x8] sm:$0xf]
      %v264 = vld [vmem:[%s1 + $0xc] sm:$0xf]
      %v265 = vld [vmem:[%s1 + $0x10] sm:$0xf]
      %v266 = vld [vmem:[%s1 + $0x14] sm:$0xf]
      %v267 = vld [vmem:[%s1 + $0x18] sm:$0xf]
      %v268 = vld [vmem:[%s1 + $0x1c] sm:$0xf]
      %v269 = vld [vmem:[%s1 + $0x20] sm:$0xf]
      %v270 = vld [vmem:[#allocation2 + $0x8] sm:$0x1]
      %s271 = scalar_lea.vmem %s1, 36
      %v272 = vld [vmem:[%s271] sm:$0xf]
      %v273 = vld [vmem:[%s271 + $0x4] sm:$0xf]
      %v274 = vld [vmem:[%s271 + $0x8] sm:$0xf]
      %v275 = vld [vmem:[%s271 + $0xc] sm:$0xf]
      %v276 = vld [vmem:[%s271 + $0x10] sm:$0xf]
      %v277 = vld [vmem:[%s271 + $0x14] sm:$0xf]
      %v278 = vld [vmem:[%s271 + $0x18] sm:$0xf]
      %v279 = vld [vmem:[%s271 + $0x1c] sm:$0xf]
      %v280 = vld [vmem:[%s271 + $0x20] sm:$0xf]
      %v284 = vunpack.c.l.b16 %v259
      %v285 = vunpack.c.l.b16 %v260
      %v286 = vunpack.c.l.b16 %v270
      %v287 = vpack.c.b16 %v285, %v284
      %v288 = vpack.c.b16 %v286, %v286
      %vm289 = vsmask.f32 7424
      %v291 = vshrl.u32 %v287, 16
      %v293 = vshll.u32 %v287, 16
      %v295 = vrot.slane %v293, 1
      %v296 = vor.u32 %v291, %v295
      %v298 = vshll.u32 %v288, 16
      %v300 = vrot.slane %v298, 1
      %v301 = vsel %vm289, %v296, %v300
      %v311 = vunpack.c.l.b16 %v272
      %v312 = vunpack.c.l.b16 %v273
      %v313 = vunpack.c.l.b16 %v274
      %v314 = vunpack.c.l.b16 %v275
      %v315 = vunpack.c.l.b16 %v276
      %v316 = vunpack.c.l.b16 %v277
      %v317 = vunpack.c.l.b16 %v278
      %v318 = vunpack.c.l.b16 %v279
      %v319 = vunpack.c.l.b16 %v280
      %v320 = vpack.c.b16 %v312, %v311
      %v321 = vpack.c.b16 %v314, %v313
      %v322 = vpack.c.b16 %v316, %v315
      %v323 = vpack.c.b16 %v318, %v317
      %v324 = vpack.c.b16 %v319, %v319
      %vm329 = vcmask 588800
      %v331 = vsel %vm329, %v301, 0
      %vm333 = vcmask 1043456
      %v335 = vsel %vm333, %v324, 0
      %337 = vmatprep.subr.bf16.mxu0 0
      %338 = vmatpush1.bf16.msra.mxu0 0
      %339 = vmatprep.subr.bf16.mxu0 0
      %340 = vmatpush1.bf16.msra.mxu0 0
      %341 = vmatprep.subr.bf16.mxu0 0
      %342 = vmatpush1.bf16.msra.mxu0 0
      %343 = vmatprep.subr.bf16.mxu0 0
      %344 = vmatpush1.bf16.msra.mxu0 %v335
      %345 = vmatprep.subr.bf16.mxu0 0
      %346 = vmatpush1.bf16.msra.mxu0 %v323
      %347 = vmatprep.subr.bf16.mxu0 0
      %348 = vmatpush1.bf16.msra.mxu0 %v322
      %349 = vmatprep.subr.bf16.mxu0 0
      %350 = vmatpush1.bf16.msra.mxu0 %v321
      %351 = vmatprep.subr.bf16.mxu0 0
      %352 = vmatpush1.bf16.msra.mxu0 %v320
      %353 = vmatprep.subr.bf16.mxu0 0
      %354 = vmatpush2.bf16.msra.mxu0 0
      %355 = vmatprep.subr.bf16.mxu0 0
      %356 = vmatpush2.bf16.msra.mxu0 0
      %357 = vmatprep.subr.bf16.mxu0 0
      %358 = vmatpush2.bf16.msra.mxu0 0
      %359 = vmatprep.subr.bf16.mxu0 0
      %360 = vmatpush2.bf16.msra.mxu0 0
      %361 = vmatprep.subr.bf16.mxu0 0
      %362 = vmatpush2.bf16.msra.mxu0 0
      %363 = vmatprep.subr.bf16.mxu0 0
      %364 = vmatpush2.bf16.msra.mxu0 0
      %365 = vmatprep.subr.bf16.mxu0 0
      %366 = vmatpush2.bf16.msra.mxu0 0
      %367 = vmatprep.subr.bf16.mxu0 0
      %368 = vmatpush2.bf16.msra.mxu0 0
      %369 = vmatprep.mubr.bf16.mxu0 0
      %370 = vmatmul.mubr.bf16.gmra.mxu0 %v331
      %v371 = vpop.f32.mrf.mxu0
      %v372 = vadd.f32 0.0, %v371
      %v373 = vpop.f32.mrf.mxu0
      %v374 = vpop.f32.mrf.mxu0
      %v375 = vadd.f32 0.0, %v374
      %v376 = vpop.f32.mrf.mxu0
      %377 = vdwg.mxu0
      %v387 = vunpack.c.l.b16 %v261
      %v388 = vunpack.c.l.b16 %v262
      %v389 = vunpack.c.l.b16 %v263
      %v390 = vunpack.c.l.b16 %v264
      %v391 = vunpack.c.l.b16 %v265
      %v392 = vunpack.c.l.b16 %v266
      %v393 = vunpack.c.l.b16 %v267
      %v394 = vunpack.c.l.b16 %v268
      %v395 = vunpack.c.l.b16 %v269
      %v396 = vpack.c.b16 %v388, %v387
      %v397 = vpack.c.b16 %v390, %v389
      %v398 = vpack.c.b16 %v392, %v391
      %v399 = vpack.c.b16 %v394, %v393
      %v400 = vpack.c.b16 %v395, %v395
      %v405 = vsel %vm329, %v287, 0
      %v408 = vsel %vm333, %v400, 0
      %410 = vmatprep.subr.bf16.mxu0 0
      %411 = vmatpush1.bf16.msra.mxu0 0
      %412 = vmatprep.subr.bf16.mxu0 0
      %413 = vmatpush1.bf16.msra.mxu0 0
      %414 = vmatprep.subr.bf16.mxu0 0
      %415 = vmatpush1.bf16.msra.mxu0 0
      %416 = vmatprep.subr.bf16.mxu0 0
      %417 = vmatpush1.bf16.msra.mxu0 %v408
      %418 = vmatprep.subr.bf16.mxu0 0
      %419 = vmatpush1.bf16.msra.mxu0 %v399
      %420 = vmatprep.subr.bf16.mxu0 0
      %421 = vmatpush1.bf16.msra.mxu0 %v398
      %422 = vmatprep.subr.bf16.mxu0 0
      %423 = vmatpush1.bf16.msra.mxu0 %v397
      %424 = vmatprep.subr.bf16.mxu0 0
      %425 = vmatpush1.bf16.msra.mxu0 %v396
      %426 = vmatprep.subr.bf16.mxu0 0
      %427 = vmatpush2.bf16.msra.mxu0 0
      %428 = vmatprep.subr.bf16.mxu0 0
      %429 = vmatpush2.bf16.msra.mxu0 0
      %430 = vmatprep.subr.bf16.mxu0 0
      %431 = vmatpush2.bf16.msra.mxu0 0
      %432 = vmatprep.subr.bf16.mxu0 0
      %433 = vmatpush2.bf16.msra.mxu0 0
      %434 = vmatprep.subr.bf16.mxu0 0
      %435 = vmatpush2.bf16.msra.mxu0 0
      %436 = vmatprep.subr.bf16.mxu0 0
      %437 = vmatpush2.bf16.msra.mxu0 0
      %438 = vmatprep.subr.bf16.mxu0 0
      %439 = vmatpush2.bf16.msra.mxu0 0
      %440 = vmatprep.subr.bf16.mxu0 0
      %441 = vmatpush2.bf16.msra.mxu0 0
      %442 = vmatprep.mubr.bf16.mxu0 0
      %443 = vmatmul.mubr.bf16.gmra.mxu0 %v405
      %v444 = vpop.f32.mrf.mxu0
      %v445 = vadd.f32 %v372, %v444
      %v446 = vpop.f32.mrf.mxu0
      %v447 = vpop.f32.mrf.mxu0
      %v448 = vadd.f32 %v375, %v447
      %v449 = vpop.f32.mrf.mxu0
      %450 = vdwg.mxu0
      %v451 = vld [vmem:[#allocation2] sm:$0xe]
      %s452 = scalar_lea.vmem %s1, 72
      %v453 = vld [vmem:[%s452] sm:$0xf]
      %v454 = vld [vmem:[%s452 + $0x4] sm:$0xf]
      %v455 = vld [vmem:[%s452 + $0x8] sm:$0xf]
      %v456 = vld [vmem:[%s452 + $0xc] sm:$0xf]
      %v457 = vld [vmem:[%s452 + $0x10] sm:$0xf]
      %v458 = vld [vmem:[%s452 + $0x14] sm:$0xf]
      %v459 = vld [vmem:[%s452 + $0x18] sm:$0xf]
      %v460 = vld [vmem:[%s452 + $0x1c] sm:$0xf]
      %v461 = vld [vmem:[%s452 + $0x20] sm:$0xf]
      %v463 = vunpack.c.l.b16 %v451
      %v464 = vpack.c.b16 %v285, %v463
      %vm465 = vcmask 1046528
      %v466 = vrot.slane %v464, 1
      %v467 = vrot.slane %v288, 1
      %v468 = vsel %vm465, %v466, %v467
      %v478 = vunpack.c.l.b16 %v453
      %v479 = vunpack.c.l.b16 %v454
      %v480 = vunpack.c.l.b16 %v455
      %v481 = vunpack.c.l.b16 %v456
      %v482 = vunpack.c.l.b16 %v457
      %v483 = vunpack.c.l.b16 %v458
      %v484 = vunpack.c.l.b16 %v459
      %v485 = vunpack.c.l.b16 %v460
      %v486 = vunpack.c.l.b16 %v461
      %v487 = vpack.c.b16 %v479, %v478
      %v488 = vpack.c.b16 %v481, %v480
      %v489 = vpack.c.b16 %v483, %v482
      %v490 = vpack.c.b16 %v485, %v484
      %v491 = vpack.c.b16 %v486, %v486
      %v497 = vsel %vm329, %v468, 0
      %v500 = vsel %vm333, %v491, 0
      %502 = vmatprep.subr.bf16.mxu0 0
      %503 = vmatpush1.bf16.msra.mxu0 0
      %504 = vmatprep.subr.bf16.mxu0 0
      %505 = vmatpush1.bf16.msra.mxu0 0
      %506 = vmatprep.subr.bf16.mxu0 0
      %507 = vmatpush1.bf16.msra.mxu0 0
      %508 = vmatprep.subr.bf16.mxu0 0
      %509 = vmatpush1.bf16.msra.mxu0 %v500
      %510 = vmatprep.subr.bf16.mxu0 0
      %511 = vmatpush1.bf16.msra.mxu0 %v490
      %512 = vmatprep.subr.bf16.mxu0 0
      %513 = vmatpush1.bf16.msra.mxu0 %v489
      %514 = vmatprep.subr.bf16.mxu0 0
      %515 = vmatpush1.bf16.msra.mxu0 %v488
      %516 = vmatprep.subr.bf16.mxu0 0
      %517 = vmatpush1.bf16.msra.mxu0 %v487
      %518 = vmatprep.subr.bf16.mxu0 0
      %519 = vmatpush2.bf16.msra.mxu0 0
      %520 = vmatprep.subr.bf16.mxu0 0
      %521 = vmatpush2.bf16.msra.mxu0 0
      %522 = vmatprep.subr.bf16.mxu0 0
      %523 = vmatpush2.bf16.msra.mxu0 0
      %524 = vmatprep.subr.bf16.mxu0 0
      %525 = vmatpush2.bf16.msra.mxu0 0
      %526 = vmatprep.subr.bf16.mxu0 0
      %527 = vmatpush2.bf16.msra.mxu0 0
      %528 = vmatprep.subr.bf16.mxu0 0
      %529 = vmatpush2.bf16.msra.mxu0 0
      %530 = vmatprep.subr.bf16.mxu0 0
      %531 = vmatpush2.bf16.msra.mxu0 0
      %532 = vmatprep.subr.bf16.mxu0 0
      %533 = vmatpush2.bf16.msra.mxu0 0
      %534 = vmatprep.mubr.bf16.mxu0 0
      %535 = vmatmul.mubr.bf16.gmra.mxu0 %v497
      %v536 = vpop.f32.mrf.mxu0
      %v537 = vadd.f32 0.0, %v536
      %v538 = vpop.f32.mrf.mxu0
      %v539 = vpop.f32.mrf.mxu0
      %v540 = vadd.f32 0.0, %v539
      %v541 = vpop.f32.mrf.mxu0
      %542 = vdwg.mxu0
      %v543 = vadd.f32 %v445, %v537
      %v544 = vadd.f32 %v448, %v540
      %v545 = vld [vmem:[%s2] sm:$0x1]
      %v547 = vlaneseq
      %v548 = vshrl.u32 %v547, 7
      %v549 = vsub.s32 0, %v548
      %v550 = vrot.slane %v545, %v549
      %v552 = vadd.f32 %v543, %v550
      %v553 = vadd.f32 %v544, %v550
      %v554 = vmax.f32 %v552, 0.0
      %v555 = vmax.f32 %v553, 0.0
      %v556 = vpack.c.bf16 %v555, %v554
      %v558 = vunpack.c.l.b16 %v556
      %v559 = vunpack.c.h.b16 %v556
      %v560 = vpack.c.b16 %v558, %v558
      %v561 = vpack.c.b16 %v559, %v559
      %564 = vst [vmem:[%s204] sm:$0xf] %v560
      %565 = vst [vmem:[%s204 + $0x4] sm:$0xf] %v561
      %vm566 = vcmask 1042432
      %v567 = vsel %vm566, %v554, -inf
      %v568 = vrot.slane %v567, 4
      %v569 = vmax.f32 %v567, %v568
      %v570 = vrot.slane %v569, 2
      %v571 = vmax.f32 %v569, %v570
      %v572 = vrot.slane %v571, 1
      %v573 = vmax.f32 %v571, %v572
      %574 = vst [vmem:[#allocation3] sm:$0x1] %v573
      %vm575 = vcmask 1044482
      %v576 = vsel %vm575, %v554, -inf
      %v577 = vrot.slane %v576, 4
      %v578 = vmax.f32 %v576, %v577
      %v579 = vrot.slane %v578, 2
      %v580 = vmax.f32 %v578, %v579
      %v581 = vrot.slane %v580, 1
      %v582 = vmax.f32 %v580, %v581
      %583 = vst [vmem:[#allocation3 + $0x1] sm:$0x1] %v582
      %vm584 = vcmask 1046532
      %v585 = vsel %vm584, %v554, -inf
      %v586 = vrot.slane %v585, 4
      %v587 = vmax.f32 %v585, %v586
      %v588 = vrot.slane %v587, 2
      %v589 = vmax.f32 %v587, %v588
      %v590 = vrot.slane %v589, 1
      %v591 = vmax.f32 %v589, %v590
      %592 = vst [vmem:[#allocation3 + $0x2] sm:$0x1] %v591
      %vm593 = vcmask 1047558
      %v594 = vsel %vm593, %v554, -inf
      %vm595 = vcmask 1041408
      %v596 = vsel %vm595, %v555, -inf
      %v597 = vmax.f32 %v594, %v596
      %v598 = vrot.slane %v597, 4
      %v599 = vmax.f32 %v597, %v598
      %v600 = vrot.slane %v599, 2
      %v601 = vmax.f32 %v599, %v600
      %v602 = vrot.slane %v601, 1
      %v603 = vmax.f32 %v601, %v602
      %604 = vst [vmem:[#allocation3 + $0x3] sm:$0x1] %v603
      %vm605 = vcmask 1043457
      %v606 = vsel %vm605, %v555, -inf
      %v607 = vrot.slane %v606, 4
      %v608 = vmax.f32 %v606, %v607
      %v609 = vrot.slane %v608, 2
      %v610 = vmax.f32 %v608, %v609
      %v611 = vrot.slane %v610, 1
      %v612 = vmax.f32 %v610, %v611
      %613 = vst [vmem:[#allocation3 + $0x4] sm:$0x1] %v612
      %vm614 = vcmask 1045507
      %v615 = vsel %vm614, %v555, -inf
      %v616 = vrot.slane %v615, 4
      %v617 = vmax.f32 %v615, %v616
      %v618 = vrot.slane %v617, 2
      %v619 = vmax.f32 %v617, %v618
      %v620 = vrot.slane %v619, 1
      %v621 = vmax.f32 %v619, %v620
      %622 = vst [vmem:[#allocation3 + $0x5] sm:$0x1] %v621
      %vm623 = vcmask 1047557
      %v624 = vsel %vm623, %v555, -inf
      %v625 = vrot.slane %v624, 4
      %v626 = vmax.f32 %v624, %v625
      %v627 = vrot.slane %v626, 2
      %v628 = vmax.f32 %v626, %v627
      %v629 = vrot.slane %v628, 1
      %v630 = vmax.f32 %v628, %v629
      %631 = vst [vmem:[#allocation3 + $0x6] sm:$0x1] %v630
      %v632 = vld [vmem:[#allocation3] sm:$0x7f]
      %634 = vrot.lane.b32.xlu0 %v632, 120
      %v635 = vpop.permute.xlu0 %634
      %v637 = vmax.f32 %v632, %v635
      %638 = vrot.lane.b32.xlu0 %v632, 112
      %v639 = vpop.permute.xlu0 %638
      %v641 = vmax.f32 %v637, %v639
      %vm642 = vcmask 63488
      %643 = vst.msk [vmem:[%s208] sm:$0x7f] %vm642, %v641
      %645 = vrot.lane.b32.xlu0 %v641, 120
      %v646 = vpop.permute.xlu0 %645
      %vm648 = vcmask 129088
      %649 = vst.msk [vmem:[%s208] sm:$0x7f] %vm648, %v646
      %650 = vrot.lane.b32.xlu0 %v641, 112
      %v651 = vpop.permute.xlu0 %650
      %vm653 = vcmask 194688
      %654 = vst.msk [vmem:[%s208] sm:$0x7f] %vm653, %v651
      %655 = vrot.lane.b32.xlu0 %v632, 104
      %v656 = vpop.permute.xlu0 %655
      %v658 = vmax.f32 %v641, %v656
      %660 = vrot.lane.b32.xlu0 %v658, 104
      %v661 = vpop.permute.xlu0 %660
      %vm663 = vcmask 260288
      %664 = vst.msk [vmem:[%s208] sm:$0x7f] %vm663, %v661
      %665 = vrot.lane.b32.xlu0 %v641, 88
      %v666 = vpop.permute.xlu0 %665
      %vm668 = vcmask 325888
      %669 = vst.msk [vmem:[%s208] sm:$0x7f] %vm668, %v666
      %670 = vrot.lane.b32.xlu0 %v641, 80
      %v671 = vpop.permute.xlu0 %670
      %vm673 = vcmask 391488
      %674 = vst.msk [vmem:[%s208] sm:$0x7f] %vm673, %v671
      %675 = vrot.lane.b32.xlu0 %v641, 72
      %v676 = vpop.permute.xlu0 %675
      %vm678 = vcmask 457088
      %679 = vst.msk [vmem:[%s208] sm:$0x7f] %vm678, %v676
      %p680 = scmp.lt.s32.totalorder %s16, 1
      %s681 = scalar_select %p680, %s16, 1
      %s682 = smul.addr %s681, 2
      %s683 = smul.addr %s682, 4
      %s684 = scalar_lea.vmem %s3, %s683
      %p685 = scmp.lt.s32.totalorder %s16, 1
      %s686 = scalar_select %p685, %s16, 1
      %s687 = smul.addr %s686, 8
      %s688 = scalar_lea.vmem %s4, %s687
      // Predicated region
      $region33: #{faster_rcnn_forward.4} parent=31 // pred_check
        %p689 = pneg %p102
      $region34: #{faster_rcnn_forward.4} parent=31 // pred_check_branch
        %691 = sbr.rel (%p689) target = $region36
      $region35: #{faster_rcnn_forward.4} parent=31 // pred_region
        _
      $region36: #{faster_rcnn_forward.4} parent=31 // pred_fallthru
        _
      // Predicated region
      $region37: #{faster_rcnn_forward.4} parent=31 // pred_check
        %p692 = pneg %p128
      $region38: #{faster_rcnn_forward.4} parent=31 // pred_check_branch
        %694 = sbr.rel (%p692) target = $region40
      $region39: #{faster_rcnn_forward.4} parent=31 // pred_region
        _
      $region40: #{faster_rcnn_forward.4} parent=31 // pred_fallthru
        _
    $region32: #{faster_rcnn_forward.4} parent=5 // pred_fallthru
      _
    %p695 = scmp.le.s32.totalorder 2, %s11
    // Predicated region
    $region41: #{faster_rcnn_forward.4} parent=5 // pred_check
      %p696 = pneg %p695
    $region42: #{faster_rcnn_forward.4} parent=5 // pred_check_branch
      %698 = sbr.rel (%p696) target = $region44
    $region43: #{faster_rcnn_forward.4} parent=5 // pred_region
      %s699 = ssub.s32 %s11, 2
      // Predicated region
      $region45: #{faster_rcnn_forward.4} parent=43 // pred_check
        %p700 = pneg %p108
      $region46: #{faster_rcnn_forward.4} parent=43 // pred_check_branch
        %702 = sbr.rel (%p700) target = $region48
      $region47: #{faster_rcnn_forward.4} parent=43 // pred_region
        %p703 = scmp.lt.s32.totalorder %s17, 1
        %s704 = scalar_select %p703, %s17, 1
        %s705 = smul.addr %s704, 2
        %s706 = smul.addr %s705, 4
        %s707 = scalar_lea.vmem %s3, %s706
      $region48: #{faster_rcnn_forward.4} parent=43 // pred_fallthru
        _
      // Predicated region
      $region49: #{faster_rcnn_forward.4} parent=43 // pred_check
        %p708 = pneg %p134
      $region50: #{faster_rcnn_forward.4} parent=43 // pred_check_branch
        %710 = sbr.rel (%p708) target = $region52
      $region51: #{faster_rcnn_forward.4} parent=43 // pred_region
        %p711 = scmp.lt.s32.totalorder %s17, 1
        %s712 = scalar_select %p711, %s17, 1
        %s713 = smul.addr %s712, 8
        %s714 = scalar_lea.vmem %s4, %s713
      $region52: #{faster_rcnn_forward.4} parent=43 // pred_fallthru
        _
    $region44: #{faster_rcnn_forward.4} parent=5 // pred_fallthru
      _
  $region6: #{faster_rcnn_forward.4} parent=0 // loop_footer
    %s15 = sadd.s32 1, %s11
  $region7: #{faster_rcnn_forward.4} parent=0 // loop_footer_branch
    %10 = sbr.rel target = $region3
  $region8: #{faster_rcnn_forward.4} parent=0 // loop_exit
    _

// kernel: faster_rcnn_forward.7
$region0: #{faster_rcnn_forward.7}
  #allocation0 [shape = 'u32[]', space=smem, size = 0x4, offset = 0x4, fixed_abs, tag = 'smem constant byte address 0x4 - core index']
  #allocation1 [shape = 'u32[144,128]{1,0:T(1,128)}', space=vmem, size = 0x12000, scoped, tag = 'internal scratch']
  %s0 = inlined_call_operand.vmem [shape: f32[2,392], index: 0, kind: input, shape index: {}]
  %s1 = inlined_call_operand.vmem [shape: bf16[392,32], index: 1, kind: input, shape index: {}]
  %s2 = inlined_call_operand.vmem [shape: f32[1,32], index: 2, kind: input, shape index: {}]
  %s3 = inlined_call_operand.vmem [shape: bf16[32,40], index: 3, kind: input, shape index: {}]
  %s4 = inlined_call_operand.vmem [shape: f32[1,40], index: 4, kind: input, shape index: {}]
  %s5 = inlined_call_operand.vmem [shape: f32[2,40], index: 5, kind: output, shape index: {}]
  %s6 = sld [smem:[#allocation0]]
  $region30: #{faster_rcnn_forward.7} parent=0
    _
  %s8 = ssub.s32 1, %s6
  %s9 = scalar_select 0, %s8, %s6
  // Predicated region
  $region2: #{faster_rcnn_forward.7} parent=0 // pred_check
    _
  $region3: #{faster_rcnn_forward.7} parent=0 // pred_check_branch
    %11 = sbr.rel (0) target = $region5
  $region4: #{faster_rcnn_forward.7} parent=0 // pred_region
    _
  $region5: #{faster_rcnn_forward.7} parent=0 // pred_fallthru
    _
  // Predicated region
  $region6: #{faster_rcnn_forward.7} parent=0 // pred_check
    _
  $region7: #{faster_rcnn_forward.7} parent=0 // pred_check_branch
    %13 = sbr.rel (0) target = $region9
  $region8: #{faster_rcnn_forward.7} parent=0 // pred_region
    _
  $region9: #{faster_rcnn_forward.7} parent=0 // pred_fallthru
    _
  // Predicated region
  $region10: #{faster_rcnn_forward.7} parent=0 // pred_check
    _
  $region11: #{faster_rcnn_forward.7} parent=0 // pred_check_branch
    %15 = sbr.rel (0) target = $region13
  $region12: #{faster_rcnn_forward.7} parent=0 // pred_region
    _
  $region13: #{faster_rcnn_forward.7} parent=0 // pred_fallthru
    _
  // Predicated region
  $region14: #{faster_rcnn_forward.7} parent=0 // pred_check
    _
  $region15: #{faster_rcnn_forward.7} parent=0 // pred_check_branch
    %17 = sbr.rel (0) target = $region17
  $region16: #{faster_rcnn_forward.7} parent=0 // pred_region
    _
  $region17: #{faster_rcnn_forward.7} parent=0 // pred_fallthru
    _
  // Predicated region
  $region18: #{faster_rcnn_forward.7} parent=0 // pred_check
    _
  $region19: #{faster_rcnn_forward.7} parent=0 // pred_check_branch
    %19 = sbr.rel (0) target = $region21
  $region20: #{faster_rcnn_forward.7} parent=0 // pred_region
    _
  $region21: #{faster_rcnn_forward.7} parent=0 // pred_fallthru
    _
  %v21 = vld [vmem:[%s0] sm:$0xff]
  %v23 = vcombine.high %v21, %v21
  %v25 = vunpack.c.l.s4 1983009808
  %v26 = vunpack.c.0.s8 %v25
  %v27 = vlaneseq
  %v28 = vshrl.u32 %v27, 7
  %v29 = vsub.s32 %v26, %v28
  %v30 = vrot.slane %v21, %v29
  %v32 = vunpack.c.l.s4 1983009808
  %v33 = vunpack.c.0.s8 %v32
  %v34 = vlaneseq
  %v35 = vshrl.u32 %v34, 7
  %v36 = vsub.s32 %v33, %v35
  %v37 = vrot.slane %v23, %v36
  %v38 = vcombine.high %v30, %v30
  %v39 = vcombine.high %v37, %v37
  %v44 = vpack.c.bf16 %v30, %v30
  %v45 = vpack.c.bf16 %v38, %v38
  %v46 = vpack.c.bf16 %v37, %v37
  %v47 = vpack.c.bf16 %v39, %v39
  %v48 = vld [vmem:[%s1] sm:$0xf]
  %v49 = vld [vmem:[%s1 + $0x4] sm:$0xf]
  %v50 = vld [vmem:[%s1 + $0x8] sm:$0xf]
  %v51 = vld [vmem:[%s1 + $0xc] sm:$0xf]
  %v52 = vld [vmem:[%s1 + $0x10] sm:$0xf]
  %v53 = vld [vmem:[%s1 + $0x14] sm:$0xf]
  %v54 = vld [vmem:[%s1 + $0x18] sm:$0xf]
  %v55 = vld [vmem:[%s1 + $0x1c] sm:$0xf]
  %v56 = vld [vmem:[%s1 + $0x20] sm:$0xf]
  %v57 = vld [vmem:[%s1 + $0x24] sm:$0xf]
  %v58 = vld [vmem:[%s1 + $0x28] sm:$0xf]
  %v59 = vld [vmem:[%s1 + $0x2c] sm:$0xf]
  %v60 = vld [vmem:[%s1 + $0x30] sm:$0xf]
  %v61 = vld [vmem:[%s1 + $0x34] sm:$0xf]
  %v62 = vld [vmem:[%s1 + $0x38] sm:$0xf]
  %v63 = vld [vmem:[%s1 + $0x3c] sm:$0xf]
  %v64 = vld [vmem:[%s1 + $0x40] sm:$0xf]
  %v65 = vld [vmem:[%s1 + $0x44] sm:$0xf]
  %v66 = vld [vmem:[%s1 + $0x48] sm:$0xf]
  %v67 = vld [vmem:[%s1 + $0x4c] sm:$0xf]
  %v68 = vld [vmem:[%s1 + $0x50] sm:$0xf]
  %v69 = vld [vmem:[%s1 + $0x54] sm:$0xf]
  %v70 = vld [vmem:[%s1 + $0x58] sm:$0xf]
  %v71 = vld [vmem:[%s1 + $0x5c] sm:$0xf]
  %v72 = vld [vmem:[%s1 + $0x60] sm:$0xf]
  %v73 = vld [vmem:[%s1 + $0x64] sm:$0xf]
  %v74 = vld [vmem:[%s1 + $0x68] sm:$0xf]
  %v75 = vld [vmem:[%s1 + $0x6c] sm:$0xf]
  %v76 = vld [vmem:[%s1 + $0x70] sm:$0xf]
  %v77 = vld [vmem:[%s1 + $0x74] sm:$0xf]
  %v78 = vld [vmem:[%s1 + $0x78] sm:$0xf]
  %v79 = vld [vmem:[%s1 + $0x7c] sm:$0xf]
  %v80 = vld [vmem:[%s1 + $0x80] sm:$0xf]
  %v81 = vld [vmem:[%s1 + $0x84] sm:$0xf]
  %v82 = vld [vmem:[%s1 + $0x88] sm:$0xf]
  %v83 = vld [vmem:[%s1 + $0x8c] sm:$0xf]
  %v84 = vld [vmem:[%s1 + $0x90] sm:$0xf]
  %v85 = vld [vmem:[%s1 + $0x94] sm:$0xf]
  %v86 = vld [vmem:[%s1 + $0x98] sm:$0xf]
  %v87 = vld [vmem:[%s1 + $0x9c] sm:$0xf]
  %v88 = vld [vmem:[%s1 + $0xa0] sm:$0xf]
  %v89 = vld [vmem:[%s1 + $0xa4] sm:$0xf]
  %v90 = vld [vmem:[%s1 + $0xa8] sm:$0xf]
  %v91 = vld [vmem:[%s1 + $0xac] sm:$0xf]
  %v92 = vld [vmem:[%s1 + $0xb0] sm:$0xf]
  %v93 = vld [vmem:[%s1 + $0xb4] sm:$0xf]
  %v94 = vld [vmem:[%s1 + $0xb8] sm:$0xf]
  %v95 = vld [vmem:[%s1 + $0xbc] sm:$0xf]
  %v96 = vld [vmem:[%s1 + $0xc0] sm:$0xf]
  %v97 = vld [vmem:[%s2] sm:$0x1]
  %v99 = vlaneseq
  %v100 = vshrl.u32 %v99, 7
  %v101 = vsub.s32 0, %v100
  %v102 = vrot.slane %v97, %v101
  %v153 = vunpack.c.l.b16 %v48
  %v154 = vunpack.c.l.b16 %v49
  %v155 = vunpack.c.l.b16 %v50
  %v156 = vunpack.c.l.b16 %v51
  %v157 = vunpack.c.l.b16 %v52
  %v158 = vunpack.c.l.b16 %v53
  %v159 = vunpack.c.l.b16 %v54
  %v160 = vunpack.c.l.b16 %v55
  %v161 = vunpack.c.l.b16 %v56
  %v162 = vunpack.c.l.b16 %v57
  %v163 = vunpack.c.l.b16 %v58
  %v164 = vunpack.c.l.b16 %v59
  %v165 = vunpack.c.l.b16 %v60
  %v166 = vunpack.c.l.b16 %v61
  %v167 = vunpack.c.l.b16 %v62
  %v168 = vunpack.c.l.b16 %v63
  %v169 = vunpack.c.l.b16 %v64
  %v170 = vunpack.c.l.b16 %v65
  %v171 = vunpack.c.l.b16 %v66
  %v172 = vunpack.c.l.b16 %v67
  %v173 = vunpack.c.l.b16 %v68
  %v174 = vunpack.c.l.b16 %v69
  %v175 = vunpack.c.l.b16 %v70
  %v176 = vunpack.c.l.b16 %v71
  %v177 = vunpack.c.l.b16 %v72
  %v178 = vunpack.c.l.b16 %v73
  %v179 = vunpack.c.l.b16 %v74
  %v180 = vunpack.c.l.b16 %v75
  %v181 = vunpack.c.l.b16 %v76
  %v182 = vunpack.c.l.b16 %v77
  %v183 = vunpack.c.l.b16 %v78
  %v184 = vunpack.c.l.b16 %v79
  %v185 = vunpack.c.l.b16 %v80
  %v186 = vunpack.c.l.b16 %v81
  %v187 = vunpack.c.l.b16 %v82
  %v188 = vunpack.c.l.b16 %v83
  %v189 = vunpack.c.l.b16 %v84
  %v190 = vunpack.c.l.b16 %v85
  %v191 = vunpack.c.l.b16 %v86
  %v192 = vunpack.c.l.b16 %v87
  %v193 = vunpack.c.l.b16 %v88
  %v194 = vunpack.c.l.b16 %v89
  %v195 = vunpack.c.l.b16 %v90
  %v196 = vunpack.c.l.b16 %v91
  %v197 = vunpack.c.l.b16 %v92
  %v198 = vunpack.c.l.b16 %v93
  %v199 = vunpack.c.l.b16 %v94
  %v200 = vunpack.c.l.b16 %v95
  %v201 = vunpack.c.l.b16 %v96
  %v202 = vpack.c.b16 %v154, %v153
  %v203 = vpack.c.b16 %v156, %v155
  %v204 = vpack.c.b16 %v158, %v157
  %v205 = vpack.c.b16 %v160, %v159
  %v206 = vpack.c.b16 %v162, %v161
  %v207 = vpack.c.b16 %v164, %v163
  %v208 = vpack.c.b16 %v166, %v165
  %v209 = vpack.c.b16 %v168, %v167
  %v210 = vpack.c.b16 %v170, %v169
  %v211 = vpack.c.b16 %v172, %v171
  %v212 = vpack.c.b16 %v174, %v173
  %v213 = vpack.c.b16 %v176, %v175
  %v214 = vpack.c.b16 %v178, %v177
  %v215 = vpack.c.b16 %v180, %v179
  %v216 = vpack.c.b16 %v182, %v181
  %v217 = vpack.c.b16 %v184, %v183
  %v218 = vpack.c.b16 %v186, %v185
  %v219 = vpack.c.b16 %v188, %v187
  %v220 = vpack.c.b16 %v190, %v189
  %v221 = vpack.c.b16 %v192, %v191
  %v222 = vpack.c.b16 %v194, %v193
  %v223 = vpack.c.b16 %v196, %v195
  %v224 = vpack.c.b16 %v198, %v197
  %v225 = vpack.c.b16 %v200, %v199
  %v226 = vpack.c.b16 %v201, %v201
  %vm251 = vcmask 64512
  %v253 = vsel %vm251, %v47, 0
  %vm255 = vcmask 1043456
  %v257 = vsel %vm255, %v226, 0
  %259 = vmatprep.subr.bf16.mxu0 0
  %260 = vmatpush1.bf16.msra.mxu0 %v209
  %261 = vmatprep.subr.bf16.mxu0 0
  %262 = vmatpush1.bf16.msra.mxu0 %v208
  %263 = vmatprep.subr.bf16.mxu0 0
  %264 = vmatpush1.bf16.msra.mxu0 %v207
  %265 = vmatprep.subr.bf16.mxu0 0
  %266 = vmatpush1.bf16.msra.mxu0 %v206
  %267 = vmatprep.subr.bf16.mxu0 0
  %268 = vmatpush1.bf16.msra.mxu0 %v205
  %269 = vmatprep.subr.bf16.mxu0 0
  %270 = vmatpush1.bf16.msra.mxu0 %v204
  %271 = vmatprep.subr.bf16.mxu0 0
  %272 = vmatpush1.bf16.msra.mxu0 %v203
  %273 = vmatprep.subr.bf16.mxu0 0
  %274 = vmatpush1.bf16.msra.mxu0 %v202
  %275 = vmatprep.subr.bf16.mxu0 0
  %276 = vmatpush2.bf16.msra.mxu0 %v217
  %277 = vmatprep.subr.bf16.mxu0 0
  %278 = vmatpush2.bf16.msra.mxu0 %v216
  %279 = vmatprep.subr.bf16.mxu0 0
  %280 = vmatpush2.bf16.msra.mxu0 %v215
  %281 = vmatprep.subr.bf16.mxu0 0
  %282 = vmatpush2.bf16.msra.mxu0 %v214
  %283 = vmatprep.subr.bf16.mxu0 0
  %284 = vmatpush2.bf16.msra.mxu0 %v213
  %285 = vmatprep.subr.bf16.mxu0 0
  %286 = vmatpush2.bf16.msra.mxu0 %v212
  %287 = vmatprep.subr.bf16.mxu0 0
  %288 = vmatpush2.bf16.msra.mxu0 %v211
  %289 = vmatprep.subr.bf16.mxu0 0
  %290 = vmatpush2.bf16.msra.mxu0 %v210
  %291 = vmatprep.mubr.bf16.mxu0 %v45
  %292 = vmatmul.mubr.bf16.gmra.mxu0 %v44
  %v293 = vpop.f32.mrf.mxu0
  %v294 = vadd.f32 %v102, %v293
  %v295 = vpop.f32.mrf.mxu0
  %v296 = vpop.f32.mrf.mxu0
  %v297 = vpop.f32.mrf.mxu0
  %298 = vdwg.mxu0
  %299 = vmatprep.subr.bf16.mxu0 0
  %300 = vmatpush1.bf16.msra.mxu0 %v225
  %301 = vmatprep.subr.bf16.mxu0 0
  %302 = vmatpush1.bf16.msra.mxu0 %v224
  %303 = vmatprep.subr.bf16.mxu0 0
  %304 = vmatpush1.bf16.msra.mxu0 %v223
  %305 = vmatprep.subr.bf16.mxu0 0
  %306 = vmatpush1.bf16.msra.mxu0 %v222
  %307 = vmatprep.subr.bf16.mxu0 0
  %308 = vmatpush1.bf16.msra.mxu0 %v221
  %309 = vmatprep.subr.bf16.mxu0 0
  %310 = vmatpush1.bf16.msra.mxu0 %v220
  %311 = vmatprep.subr.bf16.mxu0 0
  %312 = vmatpush1.bf16.msra.mxu0 %v219
  %313 = vmatprep.subr.bf16.mxu0 0
  %314 = vmatpush1.bf16.msra.mxu0 %v218
  %315 = vmatprep.subr.bf16.mxu0 0
  %316 = vmatpush2.bf16.msra.mxu0 0
  %317 = vmatprep.subr.bf16.mxu0 0
  %318 = vmatpush2.bf16.msra.mxu0 0
  %319 = vmatprep.subr.bf16.mxu0 0
  %320 = vmatpush2.bf16.msra.mxu0 0
  %321 = vmatprep.subr.bf16.mxu0 0
  %322 = vmatpush2.bf16.msra.mxu0 0
  %323 = vmatprep.subr.bf16.mxu0 0
  %324 = vmatpush2.bf16.msra.mxu0 0
  %325 = vmatprep.subr.bf16.mxu0 0
  %326 = vmatpush2.bf16.msra.mxu0 0
  %327 = vmatprep.subr.bf16.mxu0 0
  %328 = vmatpush2.bf16.msra.mxu0 0
  %329 = vmatprep.subr.bf16.mxu0 0
  %330 = vmatpush2.bf16.msra.mxu0 %v257
  %331 = vmatprep.mubr.bf16.mxu0 %v253
  %332 = vmatmul.mubr.bf16.gmra.mxu0 %v46
  %v333 = vpop.f32.mrf.mxu0
  %v334 = vadd.f32 %v294, %v333
  %v335 = vpop.f32.mrf.mxu0
  %v336 = vpop.f32.mrf.mxu0
  %v337 = vpop.f32.mrf.mxu0
  %338 = vdwg.mxu0
  %v339 = vpack.c.bf16 %v334, %v334
  %v340 = vld [vmem:[%s3] sm:$0xf]
  %v341 = vld [vmem:[%s3 + $0x4] sm:$0xf]
  %v342 = vld [vmem:[%s3 + $0x8] sm:$0xf]
  %v343 = vld [vmem:[%s3 + $0xc] sm:$0xf]
  %v344 = vld [vmem:[%s4] sm:$0x1]
  %v346 = vlaneseq
  %v347 = vshrl.u32 %v346, 7
  %v348 = vsub.s32 0, %v347
  %v349 = vrot.slane %v344, %v348
  %v355 = vunpack.c.l.b16 %v340
  %v356 = vunpack.c.l.b16 %v341
  %v357 = vunpack.c.l.b16 %v342
  %v358 = vunpack.c.l.b16 %v343
  %v359 = vpack.c.b16 %v356, %v355
  %v360 = vpack.c.b16 %v358, %v357
  %vm363 = vcmask 261120
  %v365 = vsel %vm363, %v339, 0
  %367 = vmatprep.subr.bf16.mxu0 0
  %368 = vmatpush1.bf16.msra.mxu0 0
  %369 = vmatprep.subr.bf16.mxu0 0
  %370 = vmatpush1.bf16.msra.mxu0 0
  %371 = vmatprep.subr.bf16.mxu0 0
  %372 = vmatpush1.bf16.msra.mxu0 0
  %373 = vmatprep.subr.bf16.mxu0 0
  %374 = vmatpush1.bf16.msra.mxu0 0
  %375 = vmatprep.subr.bf16.mxu0 0
  %376 = vmatpush1.bf16.msra.mxu0 0
  %377 = vmatprep.subr.bf16.mxu0 0
  %378 = vmatpush1.bf16.msra.mxu0 0
  %379 = vmatprep.subr.bf16.mxu0 0
  %380 = vmatpush1.bf16.msra.mxu0 %v360
  %381 = vmatprep.subr.bf16.mxu0 0
  %382 = vmatpush1.bf16.msra.mxu0 %v359
  %383 = vmatprep.subr.bf16.mxu0 0
  %384 = vmatpush2.bf16.msra.mxu0 0
  %385 = vmatprep.subr.bf16.mxu0 0
  %386 = vmatpush2.bf16.msra.mxu0 0
  %387 = vmatprep.subr.bf16.mxu0 0
  %388 = vmatpush2.bf16.msra.mxu0 0
  %389 = vmatprep.subr.bf16.mxu0 0
  %390 = vmatpush2.bf16.msra.mxu0 0
  %391 = vmatprep.subr.bf16.mxu0 0
  %392 = vmatpush2.bf16.msra.mxu0 0
  %393 = vmatprep.subr.bf16.mxu0 0
  %394 = vmatpush2.bf16.msra.mxu0 0
  %395 = vmatprep.subr.bf16.mxu0 0
  %396 = vmatpush2.bf16.msra.mxu0 0
  %397 = vmatprep.subr.bf16.mxu0 0
  %398 = vmatpush2.bf16.msra.mxu0 0
  %399 = vmatprep.mubr.bf16.mxu0 0
  %400 = vmatmul.mubr.bf16.gmra.mxu0 %v365
  %v401 = vpop.f32.mrf.mxu0
  %v402 = vadd.f32 %v349, %v401
  %v403 = vpop.f32.mrf.mxu0
  %v404 = vpop.f32.mrf.mxu0
  %v405 = vpop.f32.mrf.mxu0
  %406 = vdwg.mxu0
  %vm407 = vcmask 320512
  %408 = vst.msk [vmem:[%s5] sm:$0x3] %vm407, %v402
  // Predicated region
  $region22: #{faster_rcnn_forward.7} parent=0 // pred_check
    _
  $region23: #{faster_rcnn_forward.7} parent=0 // pred_check_branch
    %410 = sbr.rel (0) target = $region25
  $region24: #{faster_rcnn_forward.7} parent=0 // pred_region
    _
  $region25: #{faster_rcnn_forward.7} parent=0 // pred_fallthru
    _
  // Predicated region
  $region26: #{faster_rcnn_forward.7} parent=0 // pred_check
    _
  $region27: #{faster_rcnn_forward.7} parent=0 // pred_check_branch
    %412 = sbr.rel (0) target = $region29
  $region28: #{faster_rcnn_forward.7} parent=0 // pred_region
    _
  $region29: #{faster_rcnn_forward.7} parent=0 // pred_fallthru
    _

// kernel: tile.31
$region0: #{tile.31}
  #allocation0 [shape = 's32[1]{0}', space=sflag, size = 0x4, scoped, tag = 'scoped memory for tile.31']
  %s0 = inlined_call_operand.vmem [shape: f32[16], index: 0, kind: input, shape index: {}]
  %s1 = inlined_call_operand.vmem [shape: f32[16,16], index: 1, kind: output, shape index: {}]
  // Predicated region
  $region2: #{tile.31} parent=0 // pred_check
    _
  $region3: #{tile.31} parent=0 // pred_check_branch
    %3 = sbr.rel (0) target = $region5
  $region4: #{tile.31} parent=0 // pred_region
    _
  $region5: #{tile.31} parent=0 // pred_fallthru
    _
  %v4 = vld [vmem:[%s0] ss:$0 sm:$0xff]
  %5 = vst [vmem:[%s1] sm:$0xff] %v4
  %s6 = scalar_lea.vmem %s1, 8
  %7 = vst [vmem:[%s6] sm:$0xff] %v4

// kernel: tile.32
$region0: #{tile.32}
  %s0 = inlined_call_operand.vmem [shape: f32[16,16], index: 0, kind: input, shape index: {}]
  %s1 = inlined_call_operand.vmem [shape: f32[1,256], index: 1, kind: output, shape index: {}]
  $region1: #{tile.32} parent=0
    #allocation0 [shape = 'u8[8192]{0}', space=vmem, size = 0x2000, scoped, tag = 'scoped mem for output reshape']
    %s2 = smov 3
    %v3 = vld [vmem:[%s0] ss:$8 sm:%s2]
    %vm4 = vcmask 130048
    %5 = vst.msk [vmem:[#allocation0] ss:$8 sm:$0x3] %vm4, %v3
    %s6 = scalar_lea.vmem %s0, 7
    %s7 = smov 3
    %v8 = vld [vmem:[%s6] ss:$8 sm:%s7]
    %9 = vrot.lane.b32.xlu0 %v8, 112
    %v10 = vpop.permute.xlu0 %9
    %vm11 = vcmask 1048448
    %12 = vst.msk [vmem:[#allocation0] ss:$8 sm:$0x3] %vm11, %v10
    %s13 = scalar_lea.vmem %s0, 6
    %s14 = smov 3
    %v15 = vld [vmem:[%s13] ss:$8 sm:%s14]
    %16 = vrot.lane.b32.xlu0 %v15, 96
    %v17 = vpop.permute.xlu0 %16
    %vm18 = vcmask 917248
    %19 = vst.msk [vmem:[#allocation0] ss:$8 sm:$0x3] %vm18, %v17
    %s20 = scalar_lea.vmem %s0, 5
    %s21 = smov 3
    %v22 = vld [vmem:[%s20] ss:$8 sm:%s21]
    %23 = vrot.lane.b32.xlu0 %v22, 80
    %v24 = vpop.permute.xlu0 %23
    %vm25 = vcmask 786048
    %26 = vst.msk [vmem:[#allocation0] ss:$8 sm:$0x3] %vm25, %v24
    %s27 = scalar_lea.vmem %s0, 4
    %s28 = smov 3
    %v29 = vld [vmem:[%s27] ss:$8 sm:%s28]
    %30 = vrot.lane.b32.xlu0 %v29, 64
    %v31 = vpop.permute.xlu0 %30
    %vm32 = vcmask 654848
    %33 = vst.msk [vmem:[#allocation0] ss:$8 sm:$0x3] %vm32, %v31
    %s34 = scalar_lea.vmem %s0, 3
    %s35 = smov 3
    %v36 = vld [vmem:[%s34] ss:$8 sm:%s35]
    %37 = vrot.lane.b32.xlu0 %v36, 48
    %v38 = vpop.permute.xlu0 %37
    %vm39 = vcmask 523648
    %40 = vst.msk [vmem:[#allocation0] ss:$8 sm:$0x3] %vm39, %v38
    %s41 = scalar_lea.vmem %s0, 2
    %s42 = smov 3
    %v43 = vld [vmem:[%s41] ss:$8 sm:%s42]
    %44 = vrot.lane.b32.xlu0 %v43, 32
    %v45 = vpop.permute.xlu0 %44
    %vm46 = vcmask 392448
    %47 = vst.msk [vmem:[#allocation0] ss:$8 sm:$0x3] %vm46, %v45
    %s48 = scalar_lea.vmem %s0, 1
    %s49 = smov 3
    %v50 = vld [vmem:[%s48] ss:$8 sm:%s49]
    %51 = vrot.lane.b32.xlu0 %v50, 16
    %v52 = vpop.permute.xlu0 %51
    %vm53 = vcmask 261248
    %54 = vst.msk [vmem:[#allocation0] ss:$8 sm:$0x3] %vm53, %v52
    %s56 = sshll.u32 1, 1
    %s57 = ssub.s32 %s56, 1
    %v59 = vld [vmem:[#allocation0] sm:%s57]
    %s60 = sshll.u32 1, 1
    %s61 = ssub.s32 %s60, 1
    %62 = vst [vmem:[%s1] sm:%s61] %v59
    %s63 = scalar_lea.vmem [#allocation0], 8
    %v64 = vld [vmem:[%s63] sm:%s57]
    %s65 = sshll.u32 1, 1
    %s66 = ssub.s32 %s65, 1
    %s67 = scalar_lea.vmem %s1, 1
    %68 = vst [vmem:[%s67] sm:%s66] %v64

// kernel: tile.44
$region0: #{tile.44}
  #allocation0 [shape = 's32[1]{0}', space=sflag, size = 0x4, scoped, tag = 'scoped memory for tile.44']
  %s0 = inlined_call_operand.vmem [shape: f32[56], index: 0, kind: input, shape index: {}]
  %s1 = inlined_call_operand.vmem [shape: f32[16,56], index: 1, kind: output, shape index: {}]
  // Predicated region
  $region2: #{tile.44} parent=0 // pred_check
    _
  $region3: #{tile.44} parent=0 // pred_check_branch
    %3 = sbr.rel (0) target = $region5
  $region4: #{tile.44} parent=0 // pred_region
    _
  $region5: #{tile.44} parent=0 // pred_fallthru
    _
  %v4 = vld [vmem:[%s0] ss:$0 sm:$0xff]
  %5 = vst [vmem:[%s1] sm:$0xff] %v4
  %s6 = scalar_lea.vmem %s1, 8
  %7 = vst [vmem:[%s6] sm:$0xff] %v4

// kernel: tile.45
$region0: #{tile.45}
  %s0 = inlined_call_operand.vmem [shape: f32[16,56], index: 0, kind: input, shape index: {}]
  %s1 = inlined_call_operand.vmem [shape: f32[1,896], index: 1, kind: output, shape index: {}]
  $region1: #{tile.45} parent=0
    #allocation0 [shape = 'u8[28672]{0}', space=vmem, size = 0x7000, scoped, tag = 'scoped mem for output reshape']
    %v2 = vld [vmem:[%s0] sm:$0x1]
    %vm3 = vcmask 457728
    %4 = vst.msk [vmem:[#allocation0] sm:$0x1] %vm3, %v2
    %s5 = scalar_lea.vmem %s0, 9
    %v6 = vld [vmem:[%s5] sm:$0x1]
    %s7 = scalar_lea.vmem %s0, 9
    %v8 = vld [vmem:[%s7] sm:$0x1]
    %vm9 = vcmask 64512
    %v10 = vsel %vm9, %v8, %v6
    %11 = vrot.lane.b32.xlu0 %v10, 120
    %v12 = vpop.permute.xlu0 %11
    %vm13 = vcmask 392192
    %s14 = scalar_lea.vmem [#allocation0], 32
    %15 = vst.msk [vmem:[%s14] sm:$0x1] %vm13, %v12
    %vm16 = vcmask 1048512
    %s17 = scalar_lea.vmem [#allocation0], 24
    %18 = vst.msk [vmem:[%s17] sm:$0x1] %vm16, %v12
    %s19 = scalar_lea.vmem %s0, 2
    %v20 = vld [vmem:[%s19] sm:$0x1]
    %s21 = scalar_lea.vmem %s0, 2
    %v22 = vld [vmem:[%s21] sm:$0x1]
    %vm23 = vcmask 130048
    %v24 = vsel %vm23, %v22, %v20
    %25 = vrot.lane.b32.xlu0 %v24, 112
    %v26 = vpop.permute.xlu0 %25
    %vm27 = vcmask 326656
    %s28 = scalar_lea.vmem [#allocation0], 8
    %29 = vst.msk [vmem:[%s28] sm:$0x1] %vm27, %v26
    %vm30 = vcmask 1048448
    %31 = vst.msk [vmem:[#allocation0] sm:$0x1] %vm30, %v26
    %s32 = scalar_lea.vmem %s0, 11
    %v33 = vld [vmem:[%s32] sm:$0x1]
    %s34 = scalar_lea.vmem %s0, 11
    %v35 = vld [vmem:[%s34] sm:$0x1]
    %vm36 = vcmask 195584
    %v37 = vsel %vm36, %v35, %v33
    %38 = vrot.lane.b32.xlu0 %v37, 104
    %v39 = vpop.permute.xlu0 %38
    %vm40 = vcmask 261120
    %s41 = scalar_lea.vmem [#allocation0], 40
    %42 = vst.msk [vmem:[%s41] sm:$0x1] %vm40, %v39
    %vm43 = vcmask 1048384
    %s44 = scalar_lea.vmem [#allocation0], 32
    %45 = vst.msk [vmem:[%s44] sm:$0x1] %vm43, %v39
    %s46 = scalar_lea.vmem %s0, 4
    %v47 = vld [vmem:[%s46] sm:$0x1]
    %s48 = scalar_lea.vmem %s0, 4
    %v49 = vld [vmem:[%s48] sm:$0x1]
    %vm50 = vcmask 261120
    %v51 = vsel %vm50, %v49, %v47
    %52 = vrot.lane.b32.xlu0 %v51, 96
    %v53 = vpop.permute.xlu0 %52
    %vm54 = vcmask 195584
    %s55 = scalar_lea.vmem [#allocation0], 16
    %56 = vst.msk [vmem:[%s55] sm:$0x1] %vm54, %v53
    %vm57 = vcmask 1048320
    %s58 = scalar_lea.vmem [#allocation0], 8
    %59 = vst.msk [vmem:[%s58] sm:$0x1] %vm57, %v53
    %s60 = scalar_lea.vmem %s0, 13
    %v61 = vld [vmem:[%s60] sm:$0x1]
    %s62 = scalar_lea.vmem %s0, 13
    %v63 = vld [vmem:[%s62] sm:$0x1]
    %vm64 = vcmask 326656
    %v65 = vsel %vm64, %v63, %v61
    %66 = vrot.lane.b32.xlu0 %v65, 88
    %v67 = vpop.permute.xlu0 %66
    %vm68 = vcmask 130048
    %s69 = scalar_lea.vmem [#allocation0], 48
    %70 = vst.msk [vmem:[%s69] sm:$0x1] %vm68, %v67
    %vm71 = vcmask 1048256
    %s72 = scalar_lea.vmem [#allocation0], 40
    %73 = vst.msk [vmem:[%s72] sm:$0x1] %vm71, %v67
    %s74 = scalar_lea.vmem %s0, 6
    %v75 = vld [vmem:[%s74] sm:$0x1]
    %s76 = scalar_lea.vmem %s0, 6
    %v77 = vld [vmem:[%s76] sm:$0x1]
    %vm78 = vcmask 392192
    %v79 = vsel %vm78, %v77, %v75
    %80 = vrot.lane.b32.xlu0 %v79, 80
    %v81 = vpop.permute.xlu0 %80
    %vm82 = vcmask 64512
    %s83 = scalar_lea.vmem [#allocation0], 24
    %84 = vst.msk [vmem:[%s83] sm:$0x1] %vm82, %v81
    %vm85 = vcmask 1048192
    %s86 = scalar_lea.vmem [#allocation0], 16
    %87 = vst.msk [vmem:[%s86] sm:$0x1] %vm85, %v81
    %s88 = scalar_lea.vmem %s0, 15
    %v89 = vld [vmem:[%s88] sm:$0x1]
    %90 = vrot.lane.b32.xlu0 %v89, 72
    %v91 = vpop.permute.xlu0 %90
    %vm92 = vcmask 1048128
    %s93 = scalar_lea.vmem [#allocation0], 48
    %94 = vst.msk [vmem:[%s93] sm:$0x1] %vm92, %v91
    %s95 = scalar_lea.vmem %s0, 8
    %v96 = vld [vmem:[%s95] sm:$0x1]
    %97 = vrot.lane.b32.xlu0 %v96, 64
    %v98 = vpop.permute.xlu0 %97
    %vm99 = vcmask 982528
    %s100 = scalar_lea.vmem [#allocation0], 24
    %101 = vst.msk [vmem:[%s100] sm:$0x1] %vm99, %v98
    %s102 = scalar_lea.vmem %s0, 1
    %v103 = vld [vmem:[%s102] sm:$0x1]
    %104 = vrot.lane.b32.xlu0 %v103, 56
    %v105 = vpop.permute.xlu0 %104
    %vm106 = vcmask 916928
    %107 = vst.msk [vmem:[#allocation0] sm:$0x1] %vm106, %v105
    %s108 = scalar_lea.vmem %s0, 10
    %v109 = vld [vmem:[%s108] sm:$0x1]
    %110 = vrot.lane.b32.xlu0 %v109, 48
    %v111 = vpop.permute.xlu0 %110
    %vm112 = vcmask 851328
    %s113 = scalar_lea.vmem [#allocation0], 32
    %114 = vst.msk [vmem:[%s113] sm:$0x1] %vm112, %v111
    %s115 = scalar_lea.vmem %s0, 3
    %v116 = vld [vmem:[%s115] sm:$0x1]
    %117 = vrot.lane.b32.xlu0 %v116, 40
    %v118 = vpop.permute.xlu0 %117
    %vm119 = vcmask 785728
    %s120 = scalar_lea.vmem [#allocation0], 8
    %121 = vst.msk [vmem:[%s120] sm:$0x1] %vm119, %v118
    %s122 = scalar_lea.vmem %s0, 12
    %v123 = vld [vmem:[%s122] sm:$0x1]
    %124 = vrot.lane.b32.xlu0 %v123, 32
    %v125 = vpop.permute.xlu0 %124
    %vm126 = vcmask 720128
    %s127 = scalar_lea.vmem [#allocation0], 40
    %128 = vst.msk [vmem:[%s127] sm:$0x1] %vm126, %v125
    %s129 = scalar_lea.vmem %s0, 5
    %v130 = vld [vmem:[%s129] sm:$0x1]
    %131 = vrot.lane.b32.xlu0 %v130, 24
    %v132 = vpop.permute.xlu0 %131
    %vm133 = vcmask 654528
    %s134 = scalar_lea.vmem [#allocation0], 16
    %135 = vst.msk [vmem:[%s134] sm:$0x1] %vm133, %v132
    %s136 = scalar_lea.vmem %s0, 14
    %v137 = vld [vmem:[%s136] sm:$0x1]
    %138 = vrot.lane.b32.xlu0 %v137, 16
    %v139 = vpop.permute.xlu0 %138
    %vm140 = vcmask 588928
    %s141 = scalar_lea.vmem [#allocation0], 48
    %142 = vst.msk [vmem:[%s141] sm:$0x1] %vm140, %v139
    %s143 = scalar_lea.vmem %s0, 7
    %v144 = vld [vmem:[%s143] sm:$0x1]
    %145 = vrot.lane.b32.xlu0 %v144, 8
    %v146 = vpop.permute.xlu0 %145
    %vm147 = vcmask 523328
    %s148 = scalar_lea.vmem [#allocation0], 24
    %149 = vst.msk [vmem:[%s148] sm:$0x1] %vm147, %v146
    %s151 = sshll.u32 1, 1
    %s152 = ssub.s32 %s151, 1
    %v154 = vld [vmem:[#allocation0] sm:%s152]
    %s155 = sshll.u32 1, 1
    %s156 = ssub.s32 %s155, 1
    %157 = vst [vmem:[%s1] sm:%s156] %v154
    %s158 = scalar_lea.vmem [#allocation0], 8
    %v159 = vld [vmem:[%s158] sm:%s152]
    %s160 = sshll.u32 1, 1
    %s161 = ssub.s32 %s160, 1
    %s162 = scalar_lea.vmem %s1, 1
    %163 = vst [vmem:[%s162] sm:%s161] %v159
    %s164 = scalar_lea.vmem [#allocation0], 16
    %v165 = vld [vmem:[%s164] sm:%s152]
    %s166 = sshll.u32 1, 1
    %s167 = ssub.s32 %s166, 1
    %s168 = smul.addr 1, 2
    %s169 = scalar_lea.vmem %s1, %s168
    %170 = vst [vmem:[%s169] sm:%s167] %v165
    %s171 = scalar_lea.vmem [#allocation0], 24
    %v172 = vld [vmem:[%s171] sm:%s152]
    %s173 = sshll.u32 1, 1
    %s174 = ssub.s32 %s173, 1
    %s175 = smul.addr 1, 3
    %s176 = scalar_lea.vmem %s1, %s175
    %177 = vst [vmem:[%s176] sm:%s174] %v172
    %s178 = scalar_lea.vmem [#allocation0], 32
    %v179 = vld [vmem:[%s178] sm:%s152]
    %s180 = sshll.u32 1, 1
    %s181 = ssub.s32 %s180, 1
    %s182 = smul.addr 1, 4
    %s183 = scalar_lea.vmem %s1, %s182
    %184 = vst [vmem:[%s183] sm:%s181] %v179
    %s185 = scalar_lea.vmem [#allocation0], 40
    %v186 = vld [vmem:[%s185] sm:%s152]
    %s187 = sshll.u32 1, 1
    %s188 = ssub.s32 %s187, 1
    %s189 = smul.addr 1, 5
    %s190 = scalar_lea.vmem %s1, %s189
    %191 = vst [vmem:[%s190] sm:%s188] %v186
    %s192 = scalar_lea.vmem [#allocation0], 48
    %v193 = vld [vmem:[%s192] sm:%s152]
    %s194 = sshll.u32 1, 1
    %s195 = ssub.s32 %s194, 1
    %s196 = smul.addr 1, 6
    %s197 = scalar_lea.vmem %s1, %s196
    %198 = vst [vmem:[%s197] sm:%s195] %v193

// kernel: faster_rcnn_forward.5
$region0: #{faster_rcnn_forward.5}
  #allocation0 [shape = 'u32[]', space=smem, size = 0x4, offset = 0x4, fixed_abs, tag = 'smem constant byte address 0x4 - core index']
  #allocation1 [shape = 'u32[144,128]{1,0:T(1,128)}', space=vmem, size = 0x12000, scoped, tag = 'internal scratch']
  #allocation2 [shape = 'bf16[18,144]{1,0:T(8,128)(2,1)}', space=vmem, size = 0x3000, scoped, tag = 'scratch operand']
  %s0 = inlined_call_operand.vmem [shape: bf16[2,16,128], index: 0, kind: input, shape index: {}]
  %s1 = inlined_call_operand.vmem [shape: bf16[3,144,256], index: 1, kind: input, shape index: {}]
  %s2 = inlined_call_operand.vmem [shape: f32[1,256], index: 2, kind: input, shape index: {}]
  %s3 = inlined_call_operand.vmem [shape: bf16[2,16,256], index: 3, kind: output, shape index: {0}]
  %s4 = inlined_call_operand.vmem [shape: f32[2,1,16], index: 4, kind: output, shape index: {1}]
  %s5 = inlined_call_operand.vmem [shape: f32[2,1,16], index: 5, kind: output, shape index: {2}]
  %6 = xla_tuple %s3, %s4, %s5
  %s7 = sld [smem:[#allocation0]]
  $region61: #{faster_rcnn_forward.5} parent=0
    _
  %s9 = ssub.s32 1, %s7
  %s10 = scalar_select 0, %s9, %s7
  loop: start=0, step=1, limit=4
  $region2: #{faster_rcnn_forward.5} parent=0 // loop_pre_header
    _
  $region3: #{faster_rcnn_forward.5} parent=0 // loop_header
    %s12 = sphi 0, %s16
    %p13 = scmp.ge.s32.totalorder %s12, 4
    %s22 = sphi 0, %s24
    %s25 = sphi 0, %s22
    %s26 = sphi 0, %s25
    %s42 = sphi 0, %s26
    %s46 = sphi 0, %s46
    %s48 = sphi 0, %s46
    %s49 = sphi 0, %s48
    %s63 = sphi 0, %s49
    %s67 = sphi 0, %s67
    %s69 = sphi 0, %s67
    %s70 = sphi 0, %s69
    %s84 = sphi 0, %s70
    %s90 = sphi 0, %s92
    %s93 = sphi 0, %s90
    %s94 = sphi 0, %s93
    %s110 = sphi 0, %s94
    %s116 = sphi 0, %s118
    %s119 = sphi 0, %s116
    %s120 = sphi 0, %s119
    %s136 = sphi 0, %s120
    %s142 = sphi 0, %s144
    %s145 = sphi 0, %s142
    %s146 = sphi 0, %s145
    %s162 = sphi 0, %s146
  $region4: #{faster_rcnn_forward.5} parent=0 // loop_header_branch
    %15 = sbr.rel (%p13) target = $region8
  $region5: #{faster_rcnn_forward.5} parent=0 // loop_body
    %s17 = ssub.s32 %s12, 1
    %s18 = ssub.s32 %s12, 2
    %s19 = sadd.s32 %s12, 1
    %s20 = ssub.s32 %s12, %s19
    %p21 = scmp.eq.s32.totalorder %s20, 0
    %s23 = sadd.s32 %s22, 1
    %s24 = scalar_select %p21, %s22, %s23
    %p27 = pneg %p21
    %p28 = scmp.eq.s32.totalorder %s12, 1
    %p29 = por %p27, %p28
    %p30 = scmp.ne.s32.totalorder %s22, %s25
    %p31 = scmp.eq.s32.totalorder %s12, 0
    %p32 = por %p30, %p31
    %p33 = scmp.ne.s32.totalorder %s22, %s25
    %p34 = scmp.eq.s32.totalorder %s17, 1
    %p35 = por %p33, %p34
    %p36 = scmp.ne.s32.totalorder %s25, %s26
    %p37 = scmp.eq.s32.totalorder %s17, 0
    %p38 = por %p36, %p37
    %p39 = scmp.ne.s32.totalorder %s25, %s26
    %p40 = scmp.eq.s32.totalorder %s18, 1
    %p41 = por %p39, %p40
    %p43 = scmp.ne.s32.totalorder %s26, %s42
    %p44 = scmp.eq.s32.totalorder %s18, 0
    %p45 = por %p43, %p44
    %s47 = sadd.s32 %s46, 1
    %p50 = scmp.eq.s32.totalorder %s12, 1
    %p51 = scmp.ne.s32.totalorder %s46, %s48
    %p52 = scmp.eq.s32.totalorder %s12, 0
    %p53 = por %p51, %p52
    %p54 = scmp.ne.s32.totalorder %s46, %s48
    %p55 = scmp.eq.s32.totalorder %s17, 1
    %p56 = por %p54, %p55
    %p57 = scmp.ne.s32.totalorder %s48, %s49
    %p58 = scmp.eq.s32.totalorder %s17, 0
    %p59 = por %p57, %p58
    %p60 = scmp.ne.s32.totalorder %s48, %s49
    %p61 = scmp.eq.s32.totalorder %s18, 1
    %p62 = por %p60, %p61
    %p64 = scmp.ne.s32.totalorder %s49, %s63
    %p65 = scmp.eq.s32.totalorder %s18, 0
    %p66 = por %p64, %p65
    %s68 = sadd.s32 %s67, 1
    %p71 = scmp.eq.s32.totalorder %s12, 1
    %p72 = scmp.ne.s32.totalorder %s67, %s69
    %p73 = scmp.eq.s32.totalorder %s12, 0
    %p74 = por %p72, %p73
    %p75 = scmp.ne.s32.totalorder %s67, %s69
    %p76 = scmp.eq.s32.totalorder %s17, 1
    %p77 = por %p75, %p76
    %p78 = scmp.ne.s32.totalorder %s69, %s70
    %p79 = scmp.eq.s32.totalorder %s17, 0
    %p80 = por %p78, %p79
    %p81 = scmp.ne.s32.totalorder %s69, %s70
    %p82 = scmp.eq.s32.totalorder %s18, 1
    %p83 = por %p81, %p82
    %p85 = scmp.ne.s32.totalorder %s70, %s84
    %p86 = scmp.eq.s32.totalorder %s18, 0
    %p87 = por %p85, %p86
    %s88 = ssub.s32 %s12, %s19
    %p89 = scmp.eq.s32.totalorder %s88, 0
    %s91 = sadd.s32 %s90, 1
    %s92 = scalar_select %p89, %s90, %s91
    %p95 = pneg %p89
    %p96 = scmp.eq.s32.totalorder %s12, 1
    %p97 = por %p95, %p96
    %p98 = scmp.ne.s32.totalorder %s90, %s93
    %p99 = scmp.eq.s32.totalorder %s12, 0
    %p100 = por %p98, %p99
    %p101 = scmp.ne.s32.totalorder %s90, %s93
    %p102 = scmp.eq.s32.totalorder %s17, 1
    %p103 = por %p101, %p102
    %p104 = scmp.ne.s32.totalorder %s93, %s94
    %p105 = scmp.eq.s32.totalorder %s17, 0
    %p106 = por %p104, %p105
    %p107 = scmp.ne.s32.totalorder %s93, %s94
    %p108 = scmp.eq.s32.totalorder %s18, 1
    %p109 = por %p107, %p108
    %p111 = scmp.ne.s32.totalorder %s94, %s110
    %p112 = scmp.eq.s32.totalorder %s18, 0
    %p113 = por %p111, %p112
    %s114 = ssub.s32 %s12, %s19
    %p115 = scmp.eq.s32.totalorder %s114, 0
    %s117 = sadd.s32 %s116, 1
    %s118 = scalar_select %p115, %s116, %s117
    %p121 = pneg %p115
    %p122 = scmp.eq.s32.totalorder %s12, 1
    %p123 = por %p121, %p122
    %p124 = scmp.ne.s32.totalorder %s116, %s119
    %p125 = scmp.eq.s32.totalorder %s12, 0
    %p126 = por %p124, %p125
    %p127 = scmp.ne.s32.totalorder %s116, %s119
    %p128 = scmp.eq.s32.totalorder %s17, 1
    %p129 = por %p127, %p128
    %p130 = scmp.ne.s32.totalorder %s119, %s120
    %p131 = scmp.eq.s32.totalorder %s17, 0
    %p132 = por %p130, %p131
    %p133 = scmp.ne.s32.totalorder %s119, %s120
    %p134 = scmp.eq.s32.totalorder %s18, 1
    %p135 = por %p133, %p134
    %p137 = scmp.ne.s32.totalorder %s120, %s136
    %p138 = scmp.eq.s32.totalorder %s18, 0
    %p139 = por %p137, %p138
    %s140 = ssub.s32 %s12, %s19
    %p141 = scmp.eq.s32.totalorder %s140, 0
    %s143 = sadd.s32 %s142, 1
    %s144 = scalar_select %p141, %s142, %s143
    %p147 = pneg %p141
    %p148 = scmp.eq.s32.totalorder %s12, 1
    %p149 = por %p147, %p148
    %p150 = scmp.ne.s32.totalorder %s142, %s145
    %p151 = scmp.eq.s32.totalorder %s12, 0
    %p152 = por %p150, %p151
    %p153 = scmp.ne.s32.totalorder %s142, %s145
    %p154 = scmp.eq.s32.totalorder %s17, 1
    %p155 = por %p153, %p154
    %p156 = scmp.ne.s32.totalorder %s145, %s146
    %p157 = scmp.eq.s32.totalorder %s17, 0
    %p158 = por %p156, %p157
    %p159 = scmp.ne.s32.totalorder %s145, %s146
    %p160 = scmp.eq.s32.totalorder %s18, 1
    %p161 = por %p159, %p160
    %p163 = scmp.ne.s32.totalorder %s146, %s162
    %p164 = scmp.eq.s32.totalorder %s18, 0
    %p165 = por %p163, %p164
    %p166 = scmp.le.s32.totalorder 1, %s12
    %p167 = scmp.lt.s32.totalorder %s12, 3
    %p168 = pnand %p166, %p167
    %p169 = pneg %p168
    // Predicated region
    $region9: #{faster_rcnn_forward.5} parent=5 // pred_check
      _
    $region10: #{faster_rcnn_forward.5} parent=5 // pred_check_branch
      %171 = sbr.rel (%p168) target = $region12
    $region11: #{faster_rcnn_forward.5} parent=5 // pred_region
      %s172 = ssub.s32 %s12, 1
      // Predicated region
      $region13: #{faster_rcnn_forward.5} parent=11 // pred_check
        %p173 = pneg %p59
      $region14: #{faster_rcnn_forward.5} parent=11 // pred_check_branch
        %175 = sbr.rel (%p173) target = $region16
      $region15: #{faster_rcnn_forward.5} parent=11 // pred_region
        _
      $region16: #{faster_rcnn_forward.5} parent=11 // pred_fallthru
        _
      // Predicated region
      $region17: #{faster_rcnn_forward.5} parent=11 // pred_check
        %p176 = pneg %p80
      $region18: #{faster_rcnn_forward.5} parent=11 // pred_check_branch
        %178 = sbr.rel (%p176) target = $region20
      $region19: #{faster_rcnn_forward.5} parent=11 // pred_region
        _
      $region20: #{faster_rcnn_forward.5} parent=11 // pred_fallthru
        _
    $region12: #{faster_rcnn_forward.5} parent=5 // pred_fallthru
      _
    %p179 = scmp.lt.s32.totalorder %s12, 2
    // Predicated region
    $region21: #{faster_rcnn_forward.5} parent=5 // pred_check
      %p180 = pneg %p179
    $region22: #{faster_rcnn_forward.5} parent=5 // pred_check_branch
      %182 = sbr.rel (%p180) target = $region24
    $region23: #{faster_rcnn_forward.5} parent=5 // pred_region
      // Predicated region
      $region25: #{faster_rcnn_forward.5} parent=23 // pred_check
        %p183 = pneg %p32
      $region26: #{faster_rcnn_forward.5} parent=23 // pred_check_branch
        %185 = sbr.rel (%p183) target = $region28
      $region27: #{faster_rcnn_forward.5} parent=23 // pred_region
        %p186 = scmp.lt.s32.totalorder %s12, 1
        %s187 = scalar_select %p186, %s12, 1
        %s188 = smul.addr %s187, 2
        %s189 = smul.addr %s188, 4
        %s190 = scalar_lea.vmem %s0, %s189
      $region28: #{faster_rcnn_forward.5} parent=23 // pred_fallthru
        _
    $region24: #{faster_rcnn_forward.5} parent=5 // pred_fallthru
      _
    %p191 = scmp.le.s32.totalorder 1, %s12
    %p192 = scmp.lt.s32.totalorder %s12, 3
    %p193 = pnand %p191, %p192
    %p194 = pneg %p193
    // Predicated region
    $region29: #{faster_rcnn_forward.5} parent=5 // pred_check
      _
    $region30: #{faster_rcnn_forward.5} parent=5 // pred_check_branch
      %196 = sbr.rel (%p193) target = $region32
    $region31: #{faster_rcnn_forward.5} parent=5 // pred_region
      %s197 = ssub.s32 %s12, 1
      %p198 = scmp.lt.s32.totalorder %s17, 1
      %s199 = scalar_select %p198, %s17, 1
      %s200 = smul.addr %s199, 2
      %s201 = smul.addr %s200, 4
      %s202 = scalar_lea.vmem %s0, %s201
      %p203 = pneg %p38
      %p204 = pneg %p35
      %p205 = pneg %p59
      %p206 = pneg %p56
      %p207 = pneg %p80
      %p208 = pneg %p77
      %p209 = pneg %p106
      %p210 = pneg %p103
      %p211 = scmp.lt.s32.totalorder %s17, 1
      %s212 = scalar_select %p211, %s17, 1
      %s213 = smul.addr %s212, 4
      %s214 = smul.addr %s213, 4
      %s215 = scalar_lea.vmem %s3, %s214
      %p216 = pneg %p132
      %p217 = pneg %p129
      %p218 = scmp.lt.s32.totalorder %s17, 1
      %s219 = scalar_select %p218, %s17, 1
      %s220 = scalar_lea.vmem %s4, %s219
      %p221 = pneg %p158
      %p222 = pneg %p155
      %p223 = scmp.lt.s32.totalorder %s17, 1
      %s224 = scalar_select %p223, %s17, 1
      %s225 = scalar_lea.vmem %s5, %s224
      %p226 = scmp.lt.s32.totalorder %s17, 1
      %s227 = scalar_select %p226, %s17, 1
      %s228 = smul.addr %s227, 2
      %s229 = smul.addr %s228, 4
      %s230 = scalar_lea.vmem %s0, %s229
      %p231 = scmp.lt.s32.totalorder %s17, 1
      %s232 = scalar_select %p231, %s17, 1
      %s233 = smul.addr %s232, 4
      %s234 = smul.addr %s233, 4
      %s235 = scalar_lea.vmem %s3, %s234
      %p236 = scmp.lt.s32.totalorder %s17, 1
      %s237 = scalar_select %p236, %s17, 1
      %s238 = scalar_lea.vmem %s4, %s237
      %p239 = scmp.lt.s32.totalorder %s17, 1
      %s240 = scalar_select %p239, %s17, 1
      %s241 = scalar_lea.vmem %s5, %s240
      %vm243 = vcmask 1043456
      %vm244 = vcmask 130052
      %vm245 = vmor %vm244, %vm243
      %246 = vst.msk [vmem:[#allocation2] sm:$0xff] %vm245, 0
      %247 = vst.msk [vmem:[#allocation2 + $0x8] sm:$0xff] %vm245, 0
      %vm248 = vcmask 1040384
      %vm249 = vcmask 126980
      %vm250 = vmor %vm249, %vm248
      %251 = vst.msk [vmem:[#allocation2 + $0x10] sm:$0x11] %vm250, 0
      %v252 = vld [vmem:[%s230] sm:$0xf]
      %v253 = vld [vmem:[%s230 + $0x4] sm:$0xf]
      %vm254 = vsmask.f32 256
      %vm255 = vsmask.f32 4368
      %vm256 = vmor %vm254, %vm255
      %v258 = vshrl.u32 %v252, 16
      %v260 = vrot.slane %v258, 7
      %v261 = vshll.u32 %v252, 16
      %v263 = vor.u32 %v260, %v261
      %v264 = vrot.slane %v260, 4
      %v266 = vshrl.u32 %v253, 16
      %v268 = vrot.slane %v266, 7
      %v269 = vshll.u32 %v253, 16
      %v271 = vor.u32 %v268, %v269
      %v272 = vsel %vm256, %v264, %v271
      %v273 = vrot.slane %v268, 4
      %274 = vrot.lane.b32.xlu0 %v263, 8
      %v275 = vpop.permute.xlu0 %274
      %276 = vrot.lane.b32.xlu0 %v272, 8
      %v277 = vpop.permute.xlu0 %276
      %278 = vrot.lane.b32.xlu0 %v273, 8
      %v279 = vpop.permute.xlu0 %278
      %v280 = vrot.slane %v275, 4
      %v281 = vrot.slane %v277, 4
      %v282 = vrot.slane %v279, 4
      %vm283 = vcmask 64512
      %v284 = vsel %vm283, %v280, %v275
      %v285 = vsel %vm283, %v281, %v277
      %v286 = vsel %vm283, %v282, %v279
      %vm290 = vcmask 1043520
      %vm291 = vsmask.f32 7938
      %vm292 = vmand %vm290, %vm291
      %vm293 = vcmask 64516
      %vm294 = vsmask.f32 7954
      %vm295 = vmand %vm293, %vm294
      %vm296 = vmor %vm295, %vm292
      %v297 = vld [vmem:[#allocation2] sm:$0xff]
      %v298 = vsel %vm296, %v284, %v297
      %299 = vst [vmem:[#allocation2] sm:$0xff] %v298
      %vm300 = vcmask 1043520
      %vm301 = vcmask 64516
      %vm302 = vmor %vm301, %vm300
      %303 = vst.msk [vmem:[#allocation2 + $0x8] sm:$0xff] %vm302, %v285
      %vm304 = vcmask 1040448
      %vm305 = vmand %vm304, %vm254
      %vm306 = vcmask 61444
      %vm307 = vsmask.f32 4352
      %vm308 = vmand %vm306, %vm307
      %vm309 = vmor %vm308, %vm305
      %v310 = vld [vmem:[#allocation2 + $0x10] sm:$0x11]
      %v311 = vsel %vm309, %v286, %v310
      %312 = vst [vmem:[#allocation2 + $0x10] sm:$0x11] %v311
      %v313 = vld [vmem:[#allocation2] sm:$0xff]
      %v314 = vld [vmem:[#allocation2 + $0x8] sm:$0xff]
      %v315 = vld [vmem:[%s1] sm:$0xff]
      %v316 = vld [vmem:[%s1 + $0x8] sm:$0xff]
      %v317 = vld [vmem:[%s1 + $0x10] sm:$0xff]
      %v318 = vld [vmem:[%s1 + $0x18] sm:$0xff]
      %v319 = vld [vmem:[%s1 + $0x20] sm:$0xff]
      %v320 = vld [vmem:[%s1 + $0x28] sm:$0xff]
      %v321 = vld [vmem:[%s1 + $0x30] sm:$0xff]
      %v322 = vld [vmem:[%s1 + $0x38] sm:$0xff]
      %v323 = vld [vmem:[%s1 + $0x40] sm:$0xff]
      %v324 = vld [vmem:[%s1 + $0x48] sm:$0xff]
      %v325 = vld [vmem:[%s1 + $0x50] sm:$0xff]
      %v326 = vld [vmem:[%s1 + $0x58] sm:$0xff]
      %v327 = vld [vmem:[%s1 + $0x60] sm:$0xff]
      %v328 = vld [vmem:[%s1 + $0x68] sm:$0xff]
      %v329 = vld [vmem:[%s1 + $0x70] sm:$0xff]
      %v330 = vld [vmem:[%s1 + $0x78] sm:$0xff]
      %v331 = vld [vmem:[%s1 + $0x80] sm:$0xff]
      %v332 = vld [vmem:[%s1 + $0x88] sm:$0xff]
      %v333 = vld [vmem:[#allocation2 + $0x10] sm:$0x11]
      %s334 = scalar_lea.vmem %s1, 144
      %v335 = vld [vmem:[%s334] sm:$0xff]
      %v336 = vld [vmem:[%s334 + $0x8] sm:$0xff]
      %v337 = vld [vmem:[%s334 + $0x10] sm:$0xff]
      %v338 = vld [vmem:[%s334 + $0x18] sm:$0xff]
      %v339 = vld [vmem:[%s334 + $0x20] sm:$0xff]
      %v340 = vld [vmem:[%s334 + $0x28] sm:$0xff]
      %v341 = vld [vmem:[%s334 + $0x30] sm:$0xff]
      %v342 = vld [vmem:[%s334 + $0x38] sm:$0xff]
      %v343 = vld [vmem:[%s334 + $0x40] sm:$0xff]
      %v344 = vld [vmem:[%s334 + $0x48] sm:$0xff]
      %v345 = vld [vmem:[%s334 + $0x50] sm:$0xff]
      %v346 = vld [vmem:[%s334 + $0x58] sm:$0xff]
      %v347 = vld [vmem:[%s334 + $0x60] sm:$0xff]
      %v348 = vld [vmem:[%s334 + $0x68] sm:$0xff]
      %v349 = vld [vmem:[%s334 + $0x70] sm:$0xff]
      %v350 = vld [vmem:[%s334 + $0x78] sm:$0xff]
      %v351 = vld [vmem:[%s334 + $0x80] sm:$0xff]
      %v352 = vld [vmem:[%s334 + $0x88] sm:$0xff]
      %v356 = vunpack.c.l.b16 %v313
      %v357 = vunpack.c.h.b16 %v313
      %v358 = vunpack.c.l.b16 %v314
      %v359 = vunpack.c.h.b16 %v314
      %v360 = vunpack.c.l.b16 %v333
      %v361 = vunpack.c.h.b16 %v333
      %v362 = vpack.c.b16 %v358, %v356
      %v363 = vpack.c.b16 %v359, %v357
      %v364 = vpack.c.b16 %v360, %v360
      %v365 = vpack.c.b16 %v361, %v361
      %vm366 = vsmask.f32 7424
      %v368 = vshrl.u32 %v362, 16
      %v370 = vshll.u32 %v362, 16
      %v372 = vrot.slane %v370, 1
      %v373 = vor.u32 %v368, %v372
      %v375 = vshll.u32 %v364, 16
      %v377 = vrot.slane %v375, 1
      %v378 = vsel %vm366, %v373, %v377
      %v380 = vshrl.u32 %v363, 16
      %v382 = vshll.u32 %v363, 16
      %v384 = vrot.slane %v382, 1
      %v385 = vor.u32 %v380, %v384
      %v387 = vshll.u32 %v365, 16
      %v389 = vrot.slane %v387, 1
      %v390 = vsel %vm366, %v385, %v389
      %v410 = vunpack.c.l.b16 %v335
      %v411 = vunpack.c.h.b16 %v335
      %v412 = vunpack.c.l.b16 %v336
      %v413 = vunpack.c.h.b16 %v336
      %v414 = vunpack.c.l.b16 %v337
      %v415 = vunpack.c.h.b16 %v337
      %v416 = vunpack.c.l.b16 %v338
      %v417 = vunpack.c.h.b16 %v338
      %v418 = vunpack.c.l.b16 %v339
      %v419 = vunpack.c.h.b16 %v339
      %v420 = vunpack.c.l.b16 %v340
      %v421 = vunpack.c.h.b16 %v340
      %v422 = vunpack.c.l.b16 %v341
      %v423 = vunpack.c.h.b16 %v341
      %v424 = vunpack.c.l.b16 %v342
      %v425 = vunpack.c.h.b16 %v342
      %v426 = vunpack.c.l.b16 %v343
      %v427 = vunpack.c.h.b16 %v343
      %v428 = vunpack.c.l.b16 %v344
      %v429 = vunpack.c.h.b16 %v344
      %v430 = vunpack.c.l.b16 %v345
      %v431 = vunpack.c.h.b16 %v345
      %v432 = vunpack.c.l.b16 %v346
      %v433 = vunpack.c.h.b16 %v346
      %v434 = vunpack.c.l.b16 %v347
      %v435 = vunpack.c.h.b16 %v347
      %v436 = vunpack.c.l.b16 %v348
      %v437 = vunpack.c.h.b16 %v348
      %v438 = vunpack.c.l.b16 %v349
      %v439 = vunpack.c.h.b16 %v349
      %v440 = vunpack.c.l.b16 %v350
      %v441 = vunpack.c.h.b16 %v350
      %v442 = vunpack.c.l.b16 %v351
      %v443 = vunpack.c.h.b16 %v351
      %v444 = vunpack.c.l.b16 %v352
      %v445 = vunpack.c.h.b16 %v352
      %v446 = vpack.c.b16 %v412, %v410
      %v447 = vpack.c.b16 %v413, %v411
      %v448 = vpack.c.b16 %v416, %v414
      %v449 = vpack.c.b16 %v417, %v415
      %v450 = vpack.c.b16 %v420, %v418
      %v451 = vpack.c.b16 %v421, %v419
      %v452 = vpack.c.b16 %v424, %v422
      %v453 = vpack.c.b16 %v425, %v423
      %v454 = vpack.c.b16 %v428, %v426
      %v455 = vpack.c.b16 %v429, %v427
      %v456 = vpack.c.b16 %v432, %v430
      %v457 = vpack.c.b16 %v433, %v431
      %v458 = vpack.c.b16 %v436, %v434
      %v459 = vpack.c.b16 %v437, %v435
      %v460 = vpack.c.b16 %v440, %v438
      %v461 = vpack.c.b16 %v441, %v439
      %v462 = vpack.c.b16 %v444, %v442
      %v463 = vpack.c.b16 %v445, %v443
      %vm482 = vcmask 130048
      %v484 = vsel %vm482, %v390, 0
      %486 = vmatprep.subr.bf16.mxu0 %v461
      %487 = vmatpush1.bf16.msra.mxu0 %v460
      %488 = vmatprep.subr.bf16.mxu0 %v459
      %489 = vmatpush1.bf16.msra.mxu0 %v458
      %490 = vmatprep.subr.bf16.mxu0 %v457
      %491 = vmatpush1.bf16.msra.mxu0 %v456
      %492 = vmatprep.subr.bf16.mxu0 %v455
      %493 = vmatpush1.bf16.msra.mxu0 %v454
      %494 = vmatprep.subr.bf16.mxu0 %v453
      %495 = vmatpush1.bf16.msra.mxu0 %v452
      %496 = vmatprep.subr.bf16.mxu0 %v451
      %497 = vmatpush1.bf16.msra.mxu0 %v450
      %498 = vmatprep.subr.bf16.mxu0 %v449
      %499 = vmatpush1.bf16.msra.mxu0 %v448
      %500 = vmatprep.subr.bf16.mxu0 %v447
      %501 = vmatpush1.bf16.msra.mxu0 %v446
      %502 = vmatprep.subr.bf16.mxu0 0
      %503 = vmatpush2.bf16.msra.mxu0 0
      %504 = vmatprep.subr.bf16.mxu0 0
      %505 = vmatpush2.bf16.msra.mxu0 0
      %506 = vmatprep.subr.bf16.mxu0 0
      %507 = vmatpush2.bf16.msra.mxu0 0
      %508 = vmatprep.subr.bf16.mxu0 0
      %509 = vmatpush2.bf16.msra.mxu0 0
      %510 = vmatprep.subr.bf16.mxu0 0
      %511 = vmatpush2.bf16.msra.mxu0 0
      %512 = vmatprep.subr.bf16.mxu0 0
      %513 = vmatpush2.bf16.msra.mxu0 0
      %514 = vmatprep.subr.bf16.mxu0 0
      %515 = vmatpush2.bf16.msra.mxu0 0
      %516 = vmatprep.subr.bf16.mxu0 %v463
      %517 = vmatpush2.bf16.msra.mxu0 %v462
      %518 = vmatprep.mubr.bf16.mxu0 %v484
      %519 = vmatmul.mubr.bf16.gmra.mxu0 %v378
      %v520 = vpop.f32.mrf.mxu0
      %v521 = vadd.f32 0.0, %v520
      %v522 = vpop.f32.mrf.mxu0
      %v523 = vadd.f32 0.0, %v522
      %v524 = vpop.f32.mrf.mxu0
      %v525 = vadd.f32 0.0, %v524
      %v526 = vpop.f32.mrf.mxu0
      %v527 = vadd.f32 0.0, %v526
      %528 = vdwg.mxu0
      %v548 = vunpack.c.l.b16 %v315
      %v549 = vunpack.c.h.b16 %v315
      %v550 = vunpack.c.l.b16 %v316
      %v551 = vunpack.c.h.b16 %v316
      %v552 = vunpack.c.l.b16 %v317
      %v553 = vunpack.c.h.b16 %v317
      %v554 = vunpack.c.l.b16 %v318
      %v555 = vunpack.c.h.b16 %v318
      %v556 = vunpack.c.l.b16 %v319
      %v557 = vunpack.c.h.b16 %v319
      %v558 = vunpack.c.l.b16 %v320
      %v559 = vunpack.c.h.b16 %v320
      %v560 = vunpack.c.l.b16 %v321
      %v561 = vunpack.c.h.b16 %v321
      %v562 = vunpack.c.l.b16 %v322
      %v563 = vunpack.c.h.b16 %v322
      %v564 = vunpack.c.l.b16 %v323
      %v565 = vunpack.c.h.b16 %v323
      %v566 = vunpack.c.l.b16 %v324
      %v567 = vunpack.c.h.b16 %v324
      %v568 = vunpack.c.l.b16 %v325
      %v569 = vunpack.c.h.b16 %v325
      %v570 = vunpack.c.l.b16 %v326
      %v571 = vunpack.c.h.b16 %v326
      %v572 = vunpack.c.l.b16 %v327
      %v573 = vunpack.c.h.b16 %v327
      %v574 = vunpack.c.l.b16 %v328
      %v575 = vunpack.c.h.b16 %v328
      %v576 = vunpack.c.l.b16 %v329
      %v577 = vunpack.c.h.b16 %v329
      %v578 = vunpack.c.l.b16 %v330
      %v579 = vunpack.c.h.b16 %v330
      %v580 = vunpack.c.l.b16 %v331
      %v581 = vunpack.c.h.b16 %v331
      %v582 = vunpack.c.l.b16 %v332
      %v583 = vunpack.c.h.b16 %v332
      %v584 = vpack.c.b16 %v550, %v548
      %v585 = vpack.c.b16 %v551, %v549
      %v586 = vpack.c.b16 %v554, %v552
      %v587 = vpack.c.b16 %v555, %v553
      %v588 = vpack.c.b16 %v558, %v556
      %v589 = vpack.c.b16 %v559, %v557
      %v590 = vpack.c.b16 %v562, %v560
      %v591 = vpack.c.b16 %v563, %v561
      %v592 = vpack.c.b16 %v566, %v564
      %v593 = vpack.c.b16 %v567, %v565
      %v594 = vpack.c.b16 %v570, %v568
      %v595 = vpack.c.b16 %v571, %v569
      %v596 = vpack.c.b16 %v574, %v572
      %v597 = vpack.c.b16 %v575, %v573
      %v598 = vpack.c.b16 %v578, %v576
      %v599 = vpack.c.b16 %v579, %v577
      %v600 = vpack.c.b16 %v582, %v580
      %v601 = vpack.c.b16 %v583, %v581
      %v620 = vsel %vm482, %v363, 0
      %622 = vmatprep.subr.bf16.mxu0 %v599
      %623 = vmatpush1.bf16.msra.mxu0 %v598
      %624 = vmatprep.subr.bf16.mxu0 %v597
      %625 = vmatpush1.bf16.msra.mxu0 %v596
      %626 = vmatprep.subr.bf16.mxu0 %v595
      %627 = vmatpush1.bf16.msra.mxu0 %v594
      %628 = vmatprep.subr.bf16.mxu0 %v593
      %629 = vmatpush1.bf16.msra.mxu0 %v592
      %630 = vmatprep.subr.bf16.mxu0 %v591
      %631 = vmatpush1.bf16.msra.mxu0 %v590
      %632 = vmatprep.subr.bf16.mxu0 %v589
      %633 = vmatpush1.bf16.msra.mxu0 %v588
      %634 = vmatprep.subr.bf16.mxu0 %v587
      %635 = vmatpush1.bf16.msra.mxu0 %v586
      %636 = vmatprep.subr.bf16.mxu0 %v585
      %637 = vmatpush1.bf16.msra.mxu0 %v584
      %638 = vmatprep.subr.bf16.mxu0 0
      %639 = vmatpush2.bf16.msra.mxu0 0
      %640 = vmatprep.subr.bf16.mxu0 0
      %641 = vmatpush2.bf16.msra.mxu0 0
      %642 = vmatprep.subr.bf16.mxu0 0
      %643 = vmatpush2.bf16.msra.mxu0 0
      %644 = vmatprep.subr.bf16.mxu0 0
      %645 = vmatpush2.bf16.msra.mxu0 0
      %646 = vmatprep.subr.bf16.mxu0 0
      %647 = vmatpush2.bf16.msra.mxu0 0
      %648 = vmatprep.subr.bf16.mxu0 0
      %649 = vmatpush2.bf16.msra.mxu0 0
      %650 = vmatprep.subr.bf16.mxu0 0
      %651 = vmatpush2.bf16.msra.mxu0 0
      %652 = vmatprep.subr.bf16.mxu0 %v601
      %653 = vmatpush2.bf16.msra.mxu0 %v600
      %654 = vmatprep.mubr.bf16.mxu0 %v620
      %655 = vmatmul.mubr.bf16.gmra.mxu0 %v362
      %v656 = vpop.f32.mrf.mxu0
      %v657 = vadd.f32 %v521, %v656
      %v658 = vpop.f32.mrf.mxu0
      %v659 = vadd.f32 %v523, %v658
      %v660 = vpop.f32.mrf.mxu0
      %v661 = vadd.f32 %v525, %v660
      %v662 = vpop.f32.mrf.mxu0
      %v663 = vadd.f32 %v527, %v662
      %664 = vdwg.mxu0
      %v665 = vld [vmem:[#allocation2] sm:$0xee]
      %s666 = scalar_lea.vmem %s1, 288
      %v667 = vld [vmem:[%s666] sm:$0xff]
      %v668 = vld [vmem:[%s666 + $0x8] sm:$0xff]
      %v669 = vld [vmem:[%s666 + $0x10] sm:$0xff]
      %v670 = vld [vmem:[%s666 + $0x18] sm:$0xff]
      %v671 = vld [vmem:[%s666 + $0x20] sm:$0xff]
      %v672 = vld [vmem:[%s666 + $0x28] sm:$0xff]
      %v673 = vld [vmem:[%s666 + $0x30] sm:$0xff]
      %v674 = vld [vmem:[%s666 + $0x38] sm:$0xff]
      %v675 = vld [vmem:[%s666 + $0x40] sm:$0xff]
      %v676 = vld [vmem:[%s666 + $0x48] sm:$0xff]
      %v677 = vld [vmem:[%s666 + $0x50] sm:$0xff]
      %v678 = vld [vmem:[%s666 + $0x58] sm:$0xff]
      %v679 = vld [vmem:[%s666 + $0x60] sm:$0xff]
      %v680 = vld [vmem:[%s666 + $0x68] sm:$0xff]
      %v681 = vld [vmem:[%s666 + $0x70] sm:$0xff]
      %v682 = vld [vmem:[%s666 + $0x78] sm:$0xff]
      %v683 = vld [vmem:[%s666 + $0x80] sm:$0xff]
      %v684 = vld [vmem:[%s666 + $0x88] sm:$0xff]
      %v686 = vunpack.c.l.b16 %v665
      %v687 = vunpack.c.h.b16 %v665
      %v688 = vpack.c.b16 %v358, %v686
      %v689 = vpack.c.b16 %v359, %v687
      %vm690 = vcmask 1046528
      %v691 = vrot.slane %v688, 1
      %v692 = vrot.slane %v364, 1
      %v693 = vsel %vm690, %v691, %v692
      %v694 = vrot.slane %v689, 1
      %v695 = vrot.slane %v365, 1
      %v696 = vsel %vm690, %v694, %v695
      %v716 = vunpack.c.l.b16 %v667
      %v717 = vunpack.c.h.b16 %v667
      %v718 = vunpack.c.l.b16 %v668
      %v719 = vunpack.c.h.b16 %v668
      %v720 = vunpack.c.l.b16 %v669
      %v721 = vunpack.c.h.b16 %v669
      %v722 = vunpack.c.l.b16 %v670
      %v723 = vunpack.c.h.b16 %v670
      %v724 = vunpack.c.l.b16 %v671
      %v725 = vunpack.c.h.b16 %v671
      %v726 = vunpack.c.l.b16 %v672
      %v727 = vunpack.c.h.b16 %v672
      %v728 = vunpack.c.l.b16 %v673
      %v729 = vunpack.c.h.b16 %v673
      %v730 = vunpack.c.l.b16 %v674
      %v731 = vunpack.c.h.b16 %v674
      %v732 = vunpack.c.l.b16 %v675
      %v733 = vunpack.c.h.b16 %v675
      %v734 = vunpack.c.l.b16 %v676
      %v735 = vunpack.c.h.b16 %v676
      %v736 = vunpack.c.l.b16 %v677
      %v737 = vunpack.c.h.b16 %v677
      %v738 = vunpack.c.l.b16 %v678
      %v739 = vunpack.c.h.b16 %v678
      %v740 = vunpack.c.l.b16 %v679
      %v741 = vunpack.c.h.b16 %v679
      %v742 = vunpack.c.l.b16 %v680
      %v743 = vunpack.c.h.b16 %v680
      %v744 = vunpack.c.l.b16 %v681
      %v745 = vunpack.c.h.b16 %v681
      %v746 = vunpack.c.l.b16 %v682
      %v747 = vunpack.c.h.b16 %v682
      %v748 = vunpack.c.l.b16 %v683
      %v749 = vunpack.c.h.b16 %v683
      %v750 = vunpack.c.l.b16 %v684
      %v751 = vunpack.c.h.b16 %v684
      %v752 = vpack.c.b16 %v718, %v716
      %v753 = vpack.c.b16 %v719, %v717
      %v754 = vpack.c.b16 %v722, %v720
      %v755 = vpack.c.b16 %v723, %v721
      %v756 = vpack.c.b16 %v726, %v724
      %v757 = vpack.c.b16 %v727, %v725
      %v758 = vpack.c.b16 %v730, %v728
      %v759 = vpack.c.b16 %v731, %v729
      %v760 = vpack.c.b16 %v734, %v732
      %v761 = vpack.c.b16 %v735, %v733
      %v762 = vpack.c.b16 %v738, %v736
      %v763 = vpack.c.b16 %v739, %v737
      %v764 = vpack.c.b16 %v742, %v740
      %v765 = vpack.c.b16 %v743, %v741
      %v766 = vpack.c.b16 %v746, %v744
      %v767 = vpack.c.b16 %v747, %v745
      %v768 = vpack.c.b16 %v750, %v748
      %v769 = vpack.c.b16 %v751, %v749
      %v789 = vsel %vm482, %v696, 0
      %791 = vmatprep.subr.bf16.mxu0 %v767
      %792 = vmatpush1.bf16.msra.mxu0 %v766
      %793 = vmatprep.subr.bf16.mxu0 %v765
      %794 = vmatpush1.bf16.msra.mxu0 %v764
      %795 = vmatprep.subr.bf16.mxu0 %v763
      %796 = vmatpush1.bf16.msra.mxu0 %v762
      %797 = vmatprep.subr.bf16.mxu0 %v761
      %798 = vmatpush1.bf16.msra.mxu0 %v760
      %799 = vmatprep.subr.bf16.mxu0 %v759
      %800 = vmatpush1.bf16.msra.mxu0 %v758
      %801 = vmatprep.subr.bf16.mxu0 %v757
      %802 = vmatpush1.bf16.msra.mxu0 %v756
      %803 = vmatprep.subr.bf16.mxu0 %v755
      %804 = vmatpush1.bf16.msra.mxu0 %v754
      %805 = vmatprep.subr.bf16.mxu0 %v753
      %806 = vmatpush1.bf16.msra.mxu0 %v752
      %807 = vmatprep.subr.bf16.mxu0 0
      %808 = vmatpush2.bf16.msra.mxu0 0
      %809 = vmatprep.subr.bf16.mxu0 0
      %810 = vmatpush2.bf16.msra.mxu0 0
      %811 = vmatprep.subr.bf16.mxu0 0
      %812 = vmatpush2.bf16.msra.mxu0 0
      %813 = vmatprep.subr.bf16.mxu0 0
      %814 = vmatpush2.bf16.msra.mxu0 0
      %815 = vmatprep.subr.bf16.mxu0 0
      %816 = vmatpush2.bf16.msra.mxu0 0
      %817 = vmatprep.subr.bf16.mxu0 0
      %818 = vmatpush2.bf16.msra.mxu0 0
      %819 = vmatprep.subr.bf16.mxu0 0
      %820 = vmatpush2.bf16.msra.mxu0 0
      %821 = vmatprep.subr.bf16.mxu0 %v769
      %822 = vmatpush2.bf16.msra.mxu0 %v768
      %823 = vmatprep.mubr.bf16.mxu0 %v789
      %824 = vmatmul.mubr.bf16.gmra.mxu0 %v693
      %v825 = vpop.f32.mrf.mxu0
      %v826 = vadd.f32 0.0, %v825
      %v827 = vpop.f32.mrf.mxu0
      %v828 = vadd.f32 0.0, %v827
      %v829 = vpop.f32.mrf.mxu0
      %v830 = vadd.f32 0.0, %v829
      %v831 = vpop.f32.mrf.mxu0
      %v832 = vadd.f32 0.0, %v831
      %833 = vdwg.mxu0
      %v834 = vadd.f32 %v657, %v826
      %v835 = vadd.f32 %v659, %v828
      %v836 = vadd.f32 %v661, %v830
      %v837 = vadd.f32 %v663, %v832
      %v838 = vld [vmem:[%s2] sm:$0x3]
      %v840 = vlaneseq
      %v841 = vshrl.u32 %v840, 7
      %v842 = vsub.s32 0, %v841
      %v843 = vrot.slane %v838, %v842
      %v844 = vlaneseq
      %v845 = vshrl.u32 %v844, 7
      %v846 = vsub.s32 1, %v845
      %v847 = vrot.slane %v838, %v846
      %v850 = vadd.f32 %v834, %v843
      %v851 = vadd.f32 %v835, %v847
      %v852 = vadd.f32 %v836, %v843
      %v853 = vadd.f32 %v837, %v847
      %v854 = vmax.f32 %v850, 0.0
      %v855 = vmax.f32 %v851, 0.0
      %v856 = vmax.f32 %v852, 0.0
      %v857 = vmax.f32 %v853, 0.0
      %v858 = vpack.c.bf16 %v856, %v854
      %v859 = vpack.c.bf16 %v857, %v855
      %v862 = vunpack.c.l.b16 %v858
      %v863 = vunpack.c.l.b16 %v859
      %v864 = vunpack.c.h.b16 %v858
      %v865 = vunpack.c.h.b16 %v859
      %v866 = vpack.c.b16 %v863, %v862
      %v867 = vpack.c.b16 %v865, %v864
      %870 = vst [vmem:[%s235] sm:$0xff] %v866
      %871 = vst [vmem:[%s235 + $0x8] sm:$0xff] %v867
      %v872 = vadd.f32 %v854, %v856
      %v873 = vrot.slane %v872, 4
      %v874 = vadd.f32 %v872, %v873
      %v875 = vrot.slane %v874, 2
      %v876 = vadd.f32 %v874, %v875
      %v877 = vrot.slane %v876, 1
      %v878 = vadd.f32 %v876, %v877
      %v879 = vadd.f32 %v855, %v857
      %v880 = vrot.slane %v879, 4
      %v881 = vadd.f32 %v879, %v880
      %v882 = vrot.slane %v881, 2
      %v883 = vadd.f32 %v881, %v882
      %v884 = vrot.slane %v883, 1
      %v885 = vadd.f32 %v883, %v884
      %v886 = vmul.f32 %v854, %v854
      %v887 = vmul.f32 %v855, %v855
      %v888 = vmul.f32 %v856, %v856
      %v889 = vmul.f32 %v857, %v857
      %v890 = vadd.f32 %v886, %v888
      %v891 = vrot.slane %v890, 4
      %v892 = vadd.f32 %v890, %v891
      %v893 = vrot.slane %v892, 2
      %v894 = vadd.f32 %v892, %v893
      %v895 = vrot.slane %v894, 1
      %v896 = vadd.f32 %v894, %v895
      %v897 = vadd.f32 %v887, %v889
      %v898 = vrot.slane %v897, 4
      %v899 = vadd.f32 %v897, %v898
      %v900 = vrot.slane %v899, 2
      %v901 = vadd.f32 %v899, %v900
      %v902 = vrot.slane %v901, 1
      %v903 = vadd.f32 %v901, %v902
      %905 = vrot.lane.b32.xlu0 %v878, 112
      %v906 = vpop.permute.xlu0 %905
      %v908 = vadd.f32 %v878, %v906
      %910 = vrot.lane.b32.xlu0 %v896, 112
      %v911 = vpop.permute.xlu0 %910
      %v913 = vadd.f32 %v896, %v911
      %914 = vrot.lane.b32.xlu0 %v878, 96
      %v915 = vpop.permute.xlu0 %914
      %v917 = vadd.f32 %v908, %v915
      %918 = vrot.lane.b32.xlu0 %v896, 96
      %v919 = vpop.permute.xlu0 %918
      %v921 = vadd.f32 %v913, %v919
      %922 = vrot.lane.b32.xlu0 %v878, 80
      %v923 = vpop.permute.xlu0 %922
      %v925 = vadd.f32 %v917, %v923
      %926 = vrot.lane.b32.xlu0 %v896, 80
      %v927 = vpop.permute.xlu0 %926
      %v929 = vadd.f32 %v921, %v927
      %930 = vrot.lane.b32.xlu0 %v878, 64
      %v931 = vpop.permute.xlu0 %930
      %v933 = vadd.f32 %v925, %v931
      %934 = vrot.lane.b32.xlu0 %v896, 64
      %v935 = vpop.permute.xlu0 %934
      %v937 = vadd.f32 %v929, %v935
      %938 = vrot.lane.b32.xlu0 %v878, 48
      %v939 = vpop.permute.xlu0 %938
      %v941 = vadd.f32 %v933, %v939
      %942 = vrot.lane.b32.xlu0 %v896, 48
      %v943 = vpop.permute.xlu0 %942
      %v945 = vadd.f32 %v937, %v943
      %946 = vrot.lane.b32.xlu0 %v878, 32
      %v947 = vpop.permute.xlu0 %946
      %v949 = vadd.f32 %v941, %v947
      %950 = vrot.lane.b32.xlu0 %v896, 32
      %v951 = vpop.permute.xlu0 %950
      %v953 = vadd.f32 %v945, %v951
      %954 = vrot.lane.b32.xlu0 %v878, 16
      %v955 = vpop.permute.xlu0 %954
      %v957 = vadd.f32 %v949, %v955
      %958 = vrot.lane.b32.xlu0 %v896, 16
      %v959 = vpop.permute.xlu0 %958
      %v961 = vadd.f32 %v953, %v959
      %v962 = vadd.f32 %v957, %v885
      %v963 = vadd.f32 %v961, %v903
      %965 = vrot.lane.b32.xlu0 %v885, 112
      %v966 = vpop.permute.xlu0 %965
      %v968 = vadd.f32 %v962, %v966
      %970 = vrot.lane.b32.xlu0 %v903, 112
      %v971 = vpop.permute.xlu0 %970
      %v973 = vadd.f32 %v963, %v971
      %974 = vrot.lane.b32.xlu0 %v885, 96
      %v975 = vpop.permute.xlu0 %974
      %v977 = vadd.f32 %v968, %v975
      %978 = vrot.lane.b32.xlu0 %v903, 96
      %v979 = vpop.permute.xlu0 %978
      %v981 = vadd.f32 %v973, %v979
      %982 = vrot.lane.b32.xlu0 %v885, 80
      %v983 = vpop.permute.xlu0 %982
      %v985 = vadd.f32 %v977, %v983
      %986 = vrot.lane.b32.xlu0 %v903, 80
      %v987 = vpop.permute.xlu0 %986
      %v989 = vadd.f32 %v981, %v987
      %990 = vrot.lane.b32.xlu0 %v885, 64
      %v991 = vpop.permute.xlu0 %990
      %v993 = vadd.f32 %v985, %v991
      %994 = vrot.lane.b32.xlu0 %v903, 64
      %v995 = vpop.permute.xlu0 %994
      %v997 = vadd.f32 %v989, %v995
      %998 = vrot.lane.b32.xlu0 %v885, 48
      %v999 = vpop.permute.xlu0 %998
      %v1001 = vadd.f32 %v993, %v999
      %1002 = vrot.lane.b32.xlu0 %v903, 48
      %v1003 = vpop.permute.xlu0 %1002
      %v1005 = vadd.f32 %v997, %v1003
      %1006 = vrot.lane.b32.xlu0 %v885, 32
      %v1007 = vpop.permute.xlu0 %1006
      %v1009 = vadd.f32 %v1001, %v1007
      %1010 = vrot.lane.b32.xlu0 %v903, 32
      %v1011 = vpop.permute.xlu0 %1010
      %v1013 = vadd.f32 %v1005, %v1011
      %1014 = vrot.lane.b32.xlu0 %v885, 16
      %v1015 = vpop.permute.xlu0 %1014
      %v1017 = vadd.f32 %v1009, %v1015
      %1018 = vrot.lane.b32.xlu0 %v903, 16
      %v1019 = vpop.permute.xlu0 %1018
      %v1021 = vadd.f32 %v1013, %v1019
      %vm1022 = vcmask 122880
      %1023 = vst.msk [vmem:[%s238] sm:$0x1] %vm1022, %v1017
      %1024 = vst.msk [vmem:[%s241] sm:$0x1] %vm1022, %v1021
      %p1025 = scmp.lt.s32.totalorder %s17, 1
      %s1026 = scalar_select %p1025, %s17, 1
      %s1027 = smul.addr %s1026, 4
      %s1028 = smul.addr %s1027, 4
      %s1029 = scalar_lea.vmem %s3, %s1028
      %p1030 = scmp.lt.s32.totalorder %s17, 1
      %s1031 = scalar_select %p1030, %s17, 1
      %s1032 = scalar_lea.vmem %s4, %s1031
      %p1033 = scmp.lt.s32.totalorder %s17, 1
      %s1034 = scalar_select %p1033, %s17, 1
      %s1035 = scalar_lea.vmem %s5, %s1034
      // Predicated region
      $region33: #{faster_rcnn_forward.5} parent=31 // pred_check
        %p1036 = pneg %p103
      $region34: #{faster_rcnn_forward.5} parent=31 // pred_check_branch
        %1038 = sbr.rel (%p1036) target = $region36
      $region35: #{faster_rcnn_forward.5} parent=31 // pred_region
        _
      $region36: #{faster_rcnn_forward.5} parent=31 // pred_fallthru
        _
      // Predicated region
      $region37: #{faster_rcnn_forward.5} parent=31 // pred_check
        %p1039 = pneg %p129
      $region38: #{faster_rcnn_forward.5} parent=31 // pred_check_branch
        %1041 = sbr.rel (%p1039) target = $region40
      $region39: #{faster_rcnn_forward.5} parent=31 // pred_region
        _
      $region40: #{faster_rcnn_forward.5} parent=31 // pred_fallthru
        _
      // Predicated region
      $region41: #{faster_rcnn_forward.5} parent=31 // pred_check
        %p1042 = pneg %p155
      $region42: #{faster_rcnn_forward.5} parent=31 // pred_check_branch
        %1044 = sbr.rel (%p1042) target = $region44
      $region43: #{faster_rcnn_forward.5} parent=31 // pred_region
        _
      $region44: #{faster_rcnn_forward.5} parent=31 // pred_fallthru
        _
    $region32: #{faster_rcnn_forward.5} parent=5 // pred_fallthru
      _
    %p1045 = scmp.le.s32.totalorder 2, %s12
    // Predicated region
    $region45: #{faster_rcnn_forward.5} parent=5 // pred_check
      %p1046 = pneg %p1045
    $region46: #{faster_rcnn_forward.5} parent=5 // pred_check_branch
      %1048 = sbr.rel (%p1046) target = $region48
    $region47: #{faster_rcnn_forward.5} parent=5 // pred_region
      %s1049 = ssub.s32 %s12, 2
      // Predicated region
      $region49: #{faster_rcnn_forward.5} parent=47 // pred_check
        %p1050 = pneg %p109
      $region50: #{faster_rcnn_forward.5} parent=47 // pred_check_branch
        %1052 = sbr.rel (%p1050) target = $region52
      $region51: #{faster_rcnn_forward.5} parent=47 // pred_region
        %p1053 = scmp.lt.s32.totalorder %s18, 1
        %s1054 = scalar_select %p1053, %s18, 1
        %s1055 = smul.addr %s1054, 4
        %s1056 = smul.addr %s1055, 4
        %s1057 = scalar_lea.vmem %s3, %s1056
      $region52: #{faster_rcnn_forward.5} parent=47 // pred_fallthru
        _
      // Predicated region
      $region53: #{faster_rcnn_forward.5} parent=47 // pred_check
        %p1058 = pneg %p135
      $region54: #{faster_rcnn_forward.5} parent=47 // pred_check_branch
        %1060 = sbr.rel (%p1058) target = $region56
      $region55: #{faster_rcnn_forward.5} parent=47 // pred_region
        %p1061 = scmp.lt.s32.totalorder %s18, 1
        %s1062 = scalar_select %p1061, %s18, 1
        %s1063 = scalar_lea.vmem %s4, %s1062
      $region56: #{faster_rcnn_forward.5} parent=47 // pred_fallthru
        _
      // Predicated region
      $region57: #{faster_rcnn_forward.5} parent=47 // pred_check
        %p1064 = pneg %p161
      $region58: #{faster_rcnn_forward.5} parent=47 // pred_check_branch
        %1066 = sbr.rel (%p1064) target = $region60
      $region59: #{faster_rcnn_forward.5} parent=47 // pred_region
        %p1067 = scmp.lt.s32.totalorder %s18, 1
        %s1068 = scalar_select %p1067, %s18, 1
        %s1069 = scalar_lea.vmem %s5, %s1068
      $region60: #{faster_rcnn_forward.5} parent=47 // pred_fallthru
        _
    $region48: #{faster_rcnn_forward.5} parent=5 // pred_fallthru
      _
  $region6: #{faster_rcnn_forward.5} parent=0 // loop_footer
    %s16 = sadd.s32 1, %s12
  $region7: #{faster_rcnn_forward.5} parent=0 // loop_footer_branch
    %11 = sbr.rel target = $region3
  $region8: #{faster_rcnn_forward.5} parent=0 // loop_exit
    _

// kernel: faster_rcnn_forward.6
$region0: #{faster_rcnn_forward.6}
  #allocation0 [shape = 'u32[]', space=smem, size = 0x4, offset = 0x4, fixed_abs, tag = 'smem constant byte address 0x4 - core index']
  #allocation1 [shape = 'u32[144,128]{1,0:T(1,128)}', space=vmem, size = 0x12000, scoped, tag = 'internal scratch']
  %s0 = inlined_call_operand.vmem [shape: bf16[2,16,256], index: 0, kind: input, shape index: {}]
  %s1 = inlined_call_operand.vmem [shape: f32[1,256], index: 1, kind: input, shape index: {}]
  %s2 = inlined_call_operand.vmem [shape: f32[1,256], index: 2, kind: input, shape index: {}]
  %s3 = inlined_call_operand.vmem [shape: bf16[256,896], index: 3, kind: input, shape index: {}]
  %s4 = inlined_call_operand.vmem [shape: f32[1,896], index: 4, kind: input, shape index: {}]
  %s5 = inlined_call_operand.vmem [shape: f32[2,16,896], index: 5, kind: output, shape index: {}]
  %s6 = sld [smem:[#allocation0]]
  $region53: #{faster_rcnn_forward.6} parent=0
    _
  %s8 = ssub.s32 1, %s6
  %s9 = scalar_select 0, %s8, %s6
  loop: start=0, step=1, limit=4
  $region2: #{faster_rcnn_forward.6} parent=0 // loop_pre_header
    _
  $region3: #{faster_rcnn_forward.6} parent=0 // loop_header
    %s11 = sphi 0, %s15
    %p12 = scmp.ge.s32.totalorder %s11, 4
    %s21 = sphi 0, %s23
    %s24 = sphi 0, %s21
    %s25 = sphi 0, %s24
    %s41 = sphi 0, %s25
    %s45 = sphi 0, %s45
    %s47 = sphi 0, %s45
    %s48 = sphi 0, %s47
    %s62 = sphi 0, %s48
    %s66 = sphi 0, %s66
    %s68 = sphi 0, %s66
    %s69 = sphi 0, %s68
    %s83 = sphi 0, %s69
    %s87 = sphi 0, %s87
    %s89 = sphi 0, %s87
    %s90 = sphi 0, %s89
    %s104 = sphi 0, %s90
    %s108 = sphi 0, %s108
    %s110 = sphi 0, %s108
    %s111 = sphi 0, %s110
    %s125 = sphi 0, %s111
    %s131 = sphi 0, %s133
    %s134 = sphi 0, %s131
    %s135 = sphi 0, %s134
    %s151 = sphi 0, %s135
  $region4: #{faster_rcnn_forward.6} parent=0 // loop_header_branch
    %14 = sbr.rel (%p12) target = $region8
  $region5: #{faster_rcnn_forward.6} parent=0 // loop_body
    %s16 = ssub.s32 %s11, 1
    %s17 = ssub.s32 %s11, 2
    %s18 = sadd.s32 %s11, 1
    %s19 = ssub.s32 %s11, %s18
    %p20 = scmp.eq.s32.totalorder %s19, 0
    %s22 = sadd.s32 %s21, 1
    %s23 = scalar_select %p20, %s21, %s22
    %p26 = pneg %p20
    %p27 = scmp.eq.s32.totalorder %s11, 1
    %p28 = por %p26, %p27
    %p29 = scmp.ne.s32.totalorder %s21, %s24
    %p30 = scmp.eq.s32.totalorder %s11, 0
    %p31 = por %p29, %p30
    %p32 = scmp.ne.s32.totalorder %s21, %s24
    %p33 = scmp.eq.s32.totalorder %s16, 1
    %p34 = por %p32, %p33
    %p35 = scmp.ne.s32.totalorder %s24, %s25
    %p36 = scmp.eq.s32.totalorder %s16, 0
    %p37 = por %p35, %p36
    %p38 = scmp.ne.s32.totalorder %s24, %s25
    %p39 = scmp.eq.s32.totalorder %s17, 1
    %p40 = por %p38, %p39
    %p42 = scmp.ne.s32.totalorder %s25, %s41
    %p43 = scmp.eq.s32.totalorder %s17, 0
    %p44 = por %p42, %p43
    %s46 = sadd.s32 %s45, 1
    %p49 = scmp.eq.s32.totalorder %s11, 1
    %p50 = scmp.ne.s32.totalorder %s45, %s47
    %p51 = scmp.eq.s32.totalorder %s11, 0
    %p52 = por %p50, %p51
    %p53 = scmp.ne.s32.totalorder %s45, %s47
    %p54 = scmp.eq.s32.totalorder %s16, 1
    %p55 = por %p53, %p54
    %p56 = scmp.ne.s32.totalorder %s47, %s48
    %p57 = scmp.eq.s32.totalorder %s16, 0
    %p58 = por %p56, %p57
    %p59 = scmp.ne.s32.totalorder %s47, %s48
    %p60 = scmp.eq.s32.totalorder %s17, 1
    %p61 = por %p59, %p60
    %p63 = scmp.ne.s32.totalorder %s48, %s62
    %p64 = scmp.eq.s32.totalorder %s17, 0
    %p65 = por %p63, %p64
    %s67 = sadd.s32 %s66, 1
    %p70 = scmp.eq.s32.totalorder %s11, 1
    %p71 = scmp.ne.s32.totalorder %s66, %s68
    %p72 = scmp.eq.s32.totalorder %s11, 0
    %p73 = por %p71, %p72
    %p74 = scmp.ne.s32.totalorder %s66, %s68
    %p75 = scmp.eq.s32.totalorder %s16, 1
    %p76 = por %p74, %p75
    %p77 = scmp.ne.s32.totalorder %s68, %s69
    %p78 = scmp.eq.s32.totalorder %s16, 0
    %p79 = por %p77, %p78
    %p80 = scmp.ne.s32.totalorder %s68, %s69
    %p81 = scmp.eq.s32.totalorder %s17, 1
    %p82 = por %p80, %p81
    %p84 = scmp.ne.s32.totalorder %s69, %s83
    %p85 = scmp.eq.s32.totalorder %s17, 0
    %p86 = por %p84, %p85
    %s88 = sadd.s32 %s87, 1
    %p91 = scmp.eq.s32.totalorder %s11, 1
    %p92 = scmp.ne.s32.totalorder %s87, %s89
    %p93 = scmp.eq.s32.totalorder %s11, 0
    %p94 = por %p92, %p93
    %p95 = scmp.ne.s32.totalorder %s87, %s89
    %p96 = scmp.eq.s32.totalorder %s16, 1
    %p97 = por %p95, %p96
    %p98 = scmp.ne.s32.totalorder %s89, %s90
    %p99 = scmp.eq.s32.totalorder %s16, 0
    %p100 = por %p98, %p99
    %p101 = scmp.ne.s32.totalorder %s89, %s90
    %p102 = scmp.eq.s32.totalorder %s17, 1
    %p103 = por %p101, %p102
    %p105 = scmp.ne.s32.totalorder %s90, %s104
    %p106 = scmp.eq.s32.totalorder %s17, 0
    %p107 = por %p105, %p106
    %s109 = sadd.s32 %s108, 1
    %p112 = scmp.eq.s32.totalorder %s11, 1
    %p113 = scmp.ne.s32.totalorder %s108, %s110
    %p114 = scmp.eq.s32.totalorder %s11, 0
    %p115 = por %p113, %p114
    %p116 = scmp.ne.s32.totalorder %s108, %s110
    %p117 = scmp.eq.s32.totalorder %s16, 1
    %p118 = por %p116, %p117
    %p119 = scmp.ne.s32.totalorder %s110, %s111
    %p120 = scmp.eq.s32.totalorder %s16, 0
    %p121 = por %p119, %p120
    %p122 = scmp.ne.s32.totalorder %s110, %s111
    %p123 = scmp.eq.s32.totalorder %s17, 1
    %p124 = por %p122, %p123
    %p126 = scmp.ne.s32.totalorder %s111, %s125
    %p127 = scmp.eq.s32.totalorder %s17, 0
    %p128 = por %p126, %p127
    %s129 = ssub.s32 %s11, %s18
    %p130 = scmp.eq.s32.totalorder %s129, 0
    %s132 = sadd.s32 %s131, 1
    %s133 = scalar_select %p130, %s131, %s132
    %p136 = pneg %p130
    %p137 = scmp.eq.s32.totalorder %s11, 1
    %p138 = por %p136, %p137
    %p139 = scmp.ne.s32.totalorder %s131, %s134
    %p140 = scmp.eq.s32.totalorder %s11, 0
    %p141 = por %p139, %p140
    %p142 = scmp.ne.s32.totalorder %s131, %s134
    %p143 = scmp.eq.s32.totalorder %s16, 1
    %p144 = por %p142, %p143
    %p145 = scmp.ne.s32.totalorder %s134, %s135
    %p146 = scmp.eq.s32.totalorder %s16, 0
    %p147 = por %p145, %p146
    %p148 = scmp.ne.s32.totalorder %s134, %s135
    %p149 = scmp.eq.s32.totalorder %s17, 1
    %p150 = por %p148, %p149
    %p152 = scmp.ne.s32.totalorder %s135, %s151
    %p153 = scmp.eq.s32.totalorder %s17, 0
    %p154 = por %p152, %p153
    %p155 = scmp.le.s32.totalorder 1, %s11
    %p156 = scmp.lt.s32.totalorder %s11, 3
    %p157 = pnand %p155, %p156
    %p158 = pneg %p157
    // Predicated region
    $region9: #{faster_rcnn_forward.6} parent=5 // pred_check
      _
    $region10: #{faster_rcnn_forward.6} parent=5 // pred_check_branch
      %160 = sbr.rel (%p157) target = $region12
    $region11: #{faster_rcnn_forward.6} parent=5 // pred_region
      %s161 = ssub.s32 %s11, 1
      // Predicated region
      $region13: #{faster_rcnn_forward.6} parent=11 // pred_check
        %p162 = pneg %p58
      $region14: #{faster_rcnn_forward.6} parent=11 // pred_check_branch
        %164 = sbr.rel (%p162) target = $region16
      $region15: #{faster_rcnn_forward.6} parent=11 // pred_region
        _
      $region16: #{faster_rcnn_forward.6} parent=11 // pred_fallthru
        _
      // Predicated region
      $region17: #{faster_rcnn_forward.6} parent=11 // pred_check
        %p165 = pneg %p79
      $region18: #{faster_rcnn_forward.6} parent=11 // pred_check_branch
        %167 = sbr.rel (%p165) target = $region20
      $region19: #{faster_rcnn_forward.6} parent=11 // pred_region
        _
      $region20: #{faster_rcnn_forward.6} parent=11 // pred_fallthru
        _
      // Predicated region
      $region21: #{faster_rcnn_forward.6} parent=11 // pred_check
        %p168 = pneg %p100
      $region22: #{faster_rcnn_forward.6} parent=11 // pred_check_branch
        %170 = sbr.rel (%p168) target = $region24
      $region23: #{faster_rcnn_forward.6} parent=11 // pred_region
        _
      $region24: #{faster_rcnn_forward.6} parent=11 // pred_fallthru
        _
      // Predicated region
      $region25: #{faster_rcnn_forward.6} parent=11 // pred_check
        %p171 = pneg %p121
      $region26: #{faster_rcnn_forward.6} parent=11 // pred_check_branch
        %173 = sbr.rel (%p171) target = $region28
      $region27: #{faster_rcnn_forward.6} parent=11 // pred_region
        _
      $region28: #{faster_rcnn_forward.6} parent=11 // pred_fallthru
        _
    $region12: #{faster_rcnn_forward.6} parent=5 // pred_fallthru
      _
    %p174 = scmp.lt.s32.totalorder %s11, 2
    // Predicated region
    $region29: #{faster_rcnn_forward.6} parent=5 // pred_check
      %p175 = pneg %p174
    $region30: #{faster_rcnn_forward.6} parent=5 // pred_check_branch
      %177 = sbr.rel (%p175) target = $region32
    $region31: #{faster_rcnn_forward.6} parent=5 // pred_region
      // Predicated region
      $region33: #{faster_rcnn_forward.6} parent=31 // pred_check
        %p178 = pneg %p31
      $region34: #{faster_rcnn_forward.6} parent=31 // pred_check_branch
        %180 = sbr.rel (%p178) target = $region36
      $region35: #{faster_rcnn_forward.6} parent=31 // pred_region
        %p181 = scmp.lt.s32.totalorder %s11, 1
        %s182 = scalar_select %p181, %s11, 1
        %s183 = smul.addr %s182, 4
        %s184 = smul.addr %s183, 4
        %s185 = scalar_lea.vmem %s0, %s184
      $region36: #{faster_rcnn_forward.6} parent=31 // pred_fallthru
        _
    $region32: #{faster_rcnn_forward.6} parent=5 // pred_fallthru
      _
    %p186 = scmp.le.s32.totalorder 1, %s11
    %p187 = scmp.lt.s32.totalorder %s11, 3
    %p188 = pnand %p186, %p187
    %p189 = pneg %p188
    // Predicated region
    $region37: #{faster_rcnn_forward.6} parent=5 // pred_check
      _
    $region38: #{faster_rcnn_forward.6} parent=5 // pred_check_branch
      %191 = sbr.rel (%p188) target = $region40
    $region39: #{faster_rcnn_forward.6} parent=5 // pred_region
      %s192 = ssub.s32 %s11, 1
      %p193 = scmp.lt.s32.totalorder %s16, 1
      %s194 = scalar_select %p193, %s16, 1
      %s195 = smul.addr %s194, 4
      %s196 = smul.addr %s195, 4
      %s197 = scalar_lea.vmem %s0, %s196
      %p198 = pneg %p37
      %p199 = pneg %p34
      %p200 = pneg %p58
      %p201 = pneg %p55
      %p202 = pneg %p79
      %p203 = pneg %p76
      %p204 = pneg %p100
      %p205 = pneg %p97
      %p206 = pneg %p121
      %p207 = pneg %p118
      %p208 = pneg %p147
      %p209 = pneg %p144
      %p210 = scmp.lt.s32.totalorder %s16, 1
      %s211 = scalar_select %p210, %s16, 1
      %s212 = smul.addr %s211, 14
      %s213 = smul.addr %s212, 8
      %s214 = scalar_lea.vmem %s5, %s213
      %p215 = scmp.lt.s32.totalorder %s16, 1
      %s216 = scalar_select %p215, %s16, 1
      %s217 = smul.addr %s216, 4
      %s218 = smul.addr %s217, 4
      %s219 = scalar_lea.vmem %s0, %s218
      %p220 = scmp.lt.s32.totalorder %s16, 1
      %s221 = scalar_select %p220, %s16, 1
      %s222 = smul.addr %s221, 14
      %s223 = smul.addr %s222, 8
      %s224 = scalar_lea.vmem %s5, %s223
      %v226 = vld [vmem:[%s219] sm:$0xff]
      %v227 = vld [vmem:[%s219 + $0x8] sm:$0xff]
      %v228 = vunpack.c.l.bf16 %v226
      %v229 = vunpack.c.h.bf16 %v226
      %v230 = vunpack.c.l.bf16 %v227
      %v231 = vunpack.c.h.bf16 %v227
      %v232 = vld [vmem:[%s1] sm:$0x3]
      %v234 = vlaneseq
      %v235 = vshrl.u32 %v234, 7
      %v236 = vsub.s32 0, %v235
      %v237 = vrot.slane %v232, %v236
      %v238 = vlaneseq
      %v239 = vshrl.u32 %v238, 7
      %v240 = vsub.s32 1, %v239
      %v241 = vrot.slane %v232, %v240
      %v244 = vmul.f32 %v228, %v237
      %v245 = vmul.f32 %v229, %v241
      %v246 = vmul.f32 %v230, %v237
      %v247 = vmul.f32 %v231, %v241
      %v248 = vld [vmem:[%s2] sm:$0x3]
      %v250 = vlaneseq
      %v251 = vshrl.u32 %v250, 7
      %v252 = vsub.s32 0, %v251
      %v253 = vrot.slane %v248, %v252
      %v254 = vlaneseq
      %v255 = vshrl.u32 %v254, 7
      %v256 = vsub.s32 1, %v255
      %v257 = vrot.slane %v248, %v256
      %v260 = vadd.f32 %v244, %v253
      %v261 = vadd.f32 %v245, %v257
      %v262 = vadd.f32 %v246, %v253
      %v263 = vadd.f32 %v247, %v257
      %v264 = vpack.c.bf16 %v262, %v260
      %v265 = vpack.c.bf16 %v263, %v261
      %v266 = vld [vmem:[%s3] sm:$0xff]
      %v267 = vld [vmem:[%s3 + $0x8] sm:$0xff]
      %v268 = vld [vmem:[%s3 + $0x10] sm:$0xff]
      %v269 = vld [vmem:[%s3 + $0x18] sm:$0xf]
      %v270 = vld [vmem:[%s3 + $0x1c] sm:$0xff]
      %v271 = vld [vmem:[%s3 + $0x24] sm:$0xff]
      %v272 = vld [vmem:[%s3 + $0x2c] sm:$0xff]
      %v273 = vld [vmem:[%s3 + $0x34] sm:$0xf]
      %v274 = vld [vmem:[%s3 + $0x38] sm:$0xff]
      %v275 = vld [vmem:[%s3 + $0x40] sm:$0xff]
      %v276 = vld [vmem:[%s3 + $0x48] sm:$0xff]
      %v277 = vld [vmem:[%s3 + $0x50] sm:$0xf]
      %v278 = vld [vmem:[%s3 + $0x54] sm:$0xff]
      %v279 = vld [vmem:[%s3 + $0x5c] sm:$0xff]
      %v280 = vld [vmem:[%s3 + $0x64] sm:$0xff]
      %v281 = vld [vmem:[%s3 + $0x6c] sm:$0xf]
      %v282 = vld [vmem:[%s3 + $0x70] sm:$0xff]
      %v283 = vld [vmem:[%s3 + $0x78] sm:$0xff]
      %v284 = vld [vmem:[%s3 + $0x80] sm:$0xff]
      %v285 = vld [vmem:[%s3 + $0x88] sm:$0xf]
      %v286 = vld [vmem:[%s3 + $0x8c] sm:$0xff]
      %v287 = vld [vmem:[%s3 + $0x94] sm:$0xff]
      %v288 = vld [vmem:[%s3 + $0x9c] sm:$0xff]
      %v289 = vld [vmem:[%s3 + $0xa4] sm:$0xf]
      %v290 = vld [vmem:[%s3 + $0xa8] sm:$0xff]
      %v291 = vld [vmem:[%s3 + $0xb0] sm:$0xff]
      %v292 = vld [vmem:[%s3 + $0xb8] sm:$0xff]
      %v293 = vld [vmem:[%s3 + $0xc0] sm:$0xf]
      %v294 = vld [vmem:[%s3 + $0xc4] sm:$0xff]
      %v295 = vld [vmem:[%s3 + $0xcc] sm:$0xff]
      %v296 = vld [vmem:[%s3 + $0xd4] sm:$0xff]
      %v297 = vld [vmem:[%s3 + $0xdc] sm:$0xf]
      %v298 = vld [vmem:[%s3 + $0xe0] sm:$0xff]
      %v299 = vld [vmem:[%s3 + $0xe8] sm:$0xff]
      %v300 = vld [vmem:[%s3 + $0xf0] sm:$0xff]
      %v301 = vld [vmem:[%s3 + $0xf8] sm:$0xf]
      %v302 = vld [vmem:[%s3 + $0xfc] sm:$0xff]
      %v303 = vld [vmem:[%s3 + $0x104] sm:$0xff]
      %v304 = vld [vmem:[%s3 + $0x10c] sm:$0xff]
      %v305 = vld [vmem:[%s3 + $0x114] sm:$0xf]
      %v306 = vld [vmem:[%s3 + $0x118] sm:$0xff]
      %v307 = vld [vmem:[%s3 + $0x120] sm:$0xff]
      %v308 = vld [vmem:[%s3 + $0x128] sm:$0xff]
      %v309 = vld [vmem:[%s3 + $0x130] sm:$0xf]
      %v310 = vld [vmem:[%s3 + $0x134] sm:$0xff]
      %v311 = vld [vmem:[%s3 + $0x13c] sm:$0xff]
      %v312 = vld [vmem:[%s3 + $0x144] sm:$0xff]
      %v313 = vld [vmem:[%s3 + $0x14c] sm:$0xf]
      %v314 = vld [vmem:[%s3 + $0x150] sm:$0xff]
      %v315 = vld [vmem:[%s3 + $0x158] sm:$0xff]
      %v316 = vld [vmem:[%s3 + $0x160] sm:$0xff]
      %v317 = vld [vmem:[%s3 + $0x168] sm:$0xf]
      %v318 = vld [vmem:[%s3 + $0x16c] sm:$0xff]
      %v319 = vld [vmem:[%s3 + $0x174] sm:$0xff]
      %v320 = vld [vmem:[%s3 + $0x17c] sm:$0xff]
      %v321 = vld [vmem:[%s3 + $0x184] sm:$0xf]
      %v322 = vld [vmem:[%s3 + $0x188] sm:$0xff]
      %v323 = vld [vmem:[%s3 + $0x190] sm:$0xff]
      %v324 = vld [vmem:[%s3 + $0x198] sm:$0xff]
      %v325 = vld [vmem:[%s3 + $0x1a0] sm:$0xf]
      %v326 = vld [vmem:[%s3 + $0x1a4] sm:$0xff]
      %v327 = vld [vmem:[%s3 + $0x1ac] sm:$0xff]
      %v328 = vld [vmem:[%s3 + $0x1b4] sm:$0xff]
      %v329 = vld [vmem:[%s3 + $0x1bc] sm:$0xf]
      %v330 = vld [vmem:[%s3 + $0x1c0] sm:$0xff]
      %v331 = vld [vmem:[%s3 + $0x1c8] sm:$0xff]
      %v332 = vld [vmem:[%s3 + $0x1d0] sm:$0xff]
      %v333 = vld [vmem:[%s3 + $0x1d8] sm:$0xf]
      %v334 = vld [vmem:[%s3 + $0x1dc] sm:$0xff]
      %v335 = vld [vmem:[%s3 + $0x1e4] sm:$0xff]
      %v336 = vld [vmem:[%s3 + $0x1ec] sm:$0xff]
      %v337 = vld [vmem:[%s3 + $0x1f4] sm:$0xf]
      %v338 = vld [vmem:[%s3 + $0x1f8] sm:$0xff]
      %v339 = vld [vmem:[%s3 + $0x200] sm:$0xff]
      %v340 = vld [vmem:[%s3 + $0x208] sm:$0xff]
      %v341 = vld [vmem:[%s3 + $0x210] sm:$0xf]
      %v342 = vld [vmem:[%s3 + $0x214] sm:$0xff]
      %v343 = vld [vmem:[%s3 + $0x21c] sm:$0xff]
      %v344 = vld [vmem:[%s3 + $0x224] sm:$0xff]
      %v345 = vld [vmem:[%s3 + $0x22c] sm:$0xf]
      %v346 = vld [vmem:[%s3 + $0x230] sm:$0xff]
      %v347 = vld [vmem:[%s3 + $0x238] sm:$0xff]
      %v348 = vld [vmem:[%s3 + $0x240] sm:$0xff]
      %v349 = vld [vmem:[%s3 + $0x248] sm:$0xf]
      %v350 = vld [vmem:[%s3 + $0x24c] sm:$0xff]
      %v351 = vld [vmem:[%s3 + $0x254] sm:$0xff]
      %v352 = vld [vmem:[%s3 + $0x25c] sm:$0xff]
      %v353 = vld [vmem:[%s3 + $0x264] sm:$0xf]
      %v354 = vld [vmem:[%s3 + $0x268] sm:$0xff]
      %v355 = vld [vmem:[%s3 + $0x270] sm:$0xff]
      %v356 = vld [vmem:[%s3 + $0x278] sm:$0xff]
      %v357 = vld [vmem:[%s3 + $0x280] sm:$0xf]
      %v358 = vld [vmem:[%s3 + $0x284] sm:$0xff]
      %v359 = vld [vmem:[%s3 + $0x28c] sm:$0xff]
      %v360 = vld [vmem:[%s3 + $0x294] sm:$0xff]
      %v361 = vld [vmem:[%s3 + $0x29c] sm:$0xf]
      %v362 = vld [vmem:[%s3 + $0x2a0] sm:$0xff]
      %v363 = vld [vmem:[%s3 + $0x2a8] sm:$0xff]
      %v364 = vld [vmem:[%s3 + $0x2b0] sm:$0xff]
      %v365 = vld [vmem:[%s3 + $0x2b8] sm:$0xf]
      %v366 = vld [vmem:[%s3 + $0x2bc] sm:$0xff]
      %v367 = vld [vmem:[%s3 + $0x2c4] sm:$0xff]
      %v368 = vld [vmem:[%s3 + $0x2cc] sm:$0xff]
      %v369 = vld [vmem:[%s3 + $0x2d4] sm:$0xf]
      %v370 = vld [vmem:[%s3 + $0x2d8] sm:$0xff]
      %v371 = vld [vmem:[%s3 + $0x2e0] sm:$0xff]
      %v372 = vld [vmem:[%s3 + $0x2e8] sm:$0xff]
      %v373 = vld [vmem:[%s3 + $0x2f0] sm:$0xf]
      %v374 = vld [vmem:[%s3 + $0x2f4] sm:$0xff]
      %v375 = vld [vmem:[%s3 + $0x2fc] sm:$0xff]
      %v376 = vld [vmem:[%s3 + $0x304] sm:$0xff]
      %v377 = vld [vmem:[%s3 + $0x30c] sm:$0xf]
      %v378 = vld [vmem:[%s3 + $0x310] sm:$0xff]
      %v379 = vld [vmem:[%s3 + $0x318] sm:$0xff]
      %v380 = vld [vmem:[%s3 + $0x320] sm:$0xff]
      %v381 = vld [vmem:[%s3 + $0x328] sm:$0xf]
      %v382 = vld [vmem:[%s3 + $0x32c] sm:$0xff]
      %v383 = vld [vmem:[%s3 + $0x334] sm:$0xff]
      %v384 = vld [vmem:[%s3 + $0x33c] sm:$0xff]
      %v385 = vld [vmem:[%s3 + $0x344] sm:$0xf]
      %v386 = vld [vmem:[%s3 + $0x348] sm:$0xff]
      %v387 = vld [vmem:[%s3 + $0x350] sm:$0xff]
      %v388 = vld [vmem:[%s3 + $0x358] sm:$0xff]
      %v389 = vld [vmem:[%s3 + $0x360] sm:$0xf]
      %v390 = vld [vmem:[%s3 + $0x364] sm:$0xff]
      %v391 = vld [vmem:[%s3 + $0x36c] sm:$0xff]
      %v392 = vld [vmem:[%s3 + $0x374] sm:$0xff]
      %v393 = vld [vmem:[%s3 + $0x37c] sm:$0xf]
      %v394 = vld [vmem:[%s4] sm:$0xff]
      %v396 = vlaneseq
      %v397 = vshrl.u32 %v396, 7
      %v398 = vsub.s32 0, %v397
      %v399 = vrot.slane %v394, %v398
      %v400 = vlaneseq
      %v401 = vshrl.u32 %v400, 7
      %v402 = vsub.s32 1, %v401
      %v403 = vrot.slane %v394, %v402
      %v404 = vlaneseq
      %v405 = vshrl.u32 %v404, 7
      %v406 = vsub.s32 2, %v405
      %v407 = vrot.slane %v394, %v406
      %v408 = vlaneseq
      %v409 = vshrl.u32 %v408, 7
      %v410 = vsub.s32 3, %v409
      %v411 = vrot.slane %v394, %v410
      %v412 = vlaneseq
      %v413 = vshrl.u32 %v412, 7
      %v414 = vsub.s32 4, %v413
      %v415 = vrot.slane %v394, %v414
      %v416 = vlaneseq
      %v417 = vshrl.u32 %v416, 7
      %v418 = vsub.s32 5, %v417
      %v419 = vrot.slane %v394, %v418
      %v420 = vlaneseq
      %v421 = vshrl.u32 %v420, 7
      %v422 = vsub.s32 6, %v421
      %v423 = vrot.slane %v394, %v422
      %v559 = vunpack.c.l.b16 %v266
      %v560 = vunpack.c.h.b16 %v266
      %v561 = vunpack.c.l.b16 %v267
      %v562 = vunpack.c.h.b16 %v267
      %v563 = vunpack.c.l.b16 %v268
      %v564 = vunpack.c.h.b16 %v268
      %v565 = vunpack.c.l.b16 %v269
      %v566 = vunpack.c.l.b16 %v270
      %v567 = vunpack.c.h.b16 %v270
      %v568 = vunpack.c.l.b16 %v271
      %v569 = vunpack.c.h.b16 %v271
      %v570 = vunpack.c.l.b16 %v272
      %v571 = vunpack.c.h.b16 %v272
      %v572 = vunpack.c.l.b16 %v273
      %v573 = vunpack.c.l.b16 %v274
      %v574 = vunpack.c.h.b16 %v274
      %v575 = vunpack.c.l.b16 %v275
      %v576 = vunpack.c.h.b16 %v275
      %v577 = vunpack.c.l.b16 %v276
      %v578 = vunpack.c.h.b16 %v276
      %v579 = vunpack.c.l.b16 %v277
      %v580 = vunpack.c.l.b16 %v278
      %v581 = vunpack.c.h.b16 %v278
      %v582 = vunpack.c.l.b16 %v279
      %v583 = vunpack.c.h.b16 %v279
      %v584 = vunpack.c.l.b16 %v280
      %v585 = vunpack.c.h.b16 %v280
      %v586 = vunpack.c.l.b16 %v281
      %v587 = vunpack.c.l.b16 %v282
      %v588 = vunpack.c.h.b16 %v282
      %v589 = vunpack.c.l.b16 %v283
      %v590 = vunpack.c.h.b16 %v283
      %v591 = vunpack.c.l.b16 %v284
      %v592 = vunpack.c.h.b16 %v284
      %v593 = vunpack.c.l.b16 %v285
      %v594 = vunpack.c.l.b16 %v286
      %v595 = vunpack.c.h.b16 %v286
      %v596 = vunpack.c.l.b16 %v287
      %v597 = vunpack.c.h.b16 %v287
      %v598 = vunpack.c.l.b16 %v288
      %v599 = vunpack.c.h.b16 %v288
      %v600 = vunpack.c.l.b16 %v289
      %v601 = vunpack.c.l.b16 %v290
      %v602 = vunpack.c.h.b16 %v290
      %v603 = vunpack.c.l.b16 %v291
      %v604 = vunpack.c.h.b16 %v291
      %v605 = vunpack.c.l.b16 %v292
      %v606 = vunpack.c.h.b16 %v292
      %v607 = vunpack.c.l.b16 %v293
      %v608 = vunpack.c.l.b16 %v294
      %v609 = vunpack.c.h.b16 %v294
      %v610 = vunpack.c.l.b16 %v295
      %v611 = vunpack.c.h.b16 %v295
      %v612 = vunpack.c.l.b16 %v296
      %v613 = vunpack.c.h.b16 %v296
      %v614 = vunpack.c.l.b16 %v297
      %v615 = vunpack.c.l.b16 %v298
      %v616 = vunpack.c.h.b16 %v298
      %v617 = vunpack.c.l.b16 %v299
      %v618 = vunpack.c.h.b16 %v299
      %v619 = vunpack.c.l.b16 %v300
      %v620 = vunpack.c.h.b16 %v300
      %v621 = vunpack.c.l.b16 %v301
      %v622 = vunpack.c.l.b16 %v302
      %v623 = vunpack.c.h.b16 %v302
      %v624 = vunpack.c.l.b16 %v303
      %v625 = vunpack.c.h.b16 %v303
      %v626 = vunpack.c.l.b16 %v304
      %v627 = vunpack.c.h.b16 %v304
      %v628 = vunpack.c.l.b16 %v305
      %v629 = vunpack.c.l.b16 %v306
      %v630 = vunpack.c.h.b16 %v306
      %v631 = vunpack.c.l.b16 %v307
      %v632 = vunpack.c.h.b16 %v307
      %v633 = vunpack.c.l.b16 %v308
      %v634 = vunpack.c.h.b16 %v308
      %v635 = vunpack.c.l.b16 %v309
      %v636 = vunpack.c.l.b16 %v310
      %v637 = vunpack.c.h.b16 %v310
      %v638 = vunpack.c.l.b16 %v311
      %v639 = vunpack.c.h.b16 %v311
      %v640 = vunpack.c.l.b16 %v312
      %v641 = vunpack.c.h.b16 %v312
      %v642 = vunpack.c.l.b16 %v313
      %v643 = vunpack.c.l.b16 %v314
      %v644 = vunpack.c.h.b16 %v314
      %v645 = vunpack.c.l.b16 %v315
      %v646 = vunpack.c.h.b16 %v315
      %v647 = vunpack.c.l.b16 %v316
      %v648 = vunpack.c.h.b16 %v316
      %v649 = vunpack.c.l.b16 %v317
      %v650 = vunpack.c.l.b16 %v318
      %v651 = vunpack.c.h.b16 %v318
      %v652 = vunpack.c.l.b16 %v319
      %v653 = vunpack.c.h.b16 %v319
      %v654 = vunpack.c.l.b16 %v320
      %v655 = vunpack.c.h.b16 %v320
      %v656 = vunpack.c.l.b16 %v321
      %v657 = vunpack.c.l.b16 %v322
      %v658 = vunpack.c.h.b16 %v322
      %v659 = vunpack.c.l.b16 %v323
      %v660 = vunpack.c.h.b16 %v323
      %v661 = vunpack.c.l.b16 %v324
      %v662 = vunpack.c.h.b16 %v324
      %v663 = vunpack.c.l.b16 %v325
      %v664 = vunpack.c.l.b16 %v326
      %v665 = vunpack.c.h.b16 %v326
      %v666 = vunpack.c.l.b16 %v327
      %v667 = vunpack.c.h.b16 %v327
      %v668 = vunpack.c.l.b16 %v328
      %v669 = vunpack.c.h.b16 %v328
      %v670 = vunpack.c.l.b16 %v329
      %v671 = vunpack.c.l.b16 %v330
      %v672 = vunpack.c.h.b16 %v330
      %v673 = vunpack.c.l.b16 %v331
      %v674 = vunpack.c.h.b16 %v331
      %v675 = vunpack.c.l.b16 %v332
      %v676 = vunpack.c.h.b16 %v332
      %v677 = vunpack.c.l.b16 %v333
      %v678 = vunpack.c.l.b16 %v334
      %v679 = vunpack.c.h.b16 %v334
      %v680 = vunpack.c.l.b16 %v335
      %v681 = vunpack.c.h.b16 %v335
      %v682 = vunpack.c.l.b16 %v336
      %v683 = vunpack.c.h.b16 %v336
      %v684 = vunpack.c.l.b16 %v337
      %v685 = vunpack.c.l.b16 %v338
      %v686 = vunpack.c.h.b16 %v338
      %v687 = vunpack.c.l.b16 %v339
      %v688 = vunpack.c.h.b16 %v339
      %v689 = vunpack.c.l.b16 %v340
      %v690 = vunpack.c.h.b16 %v340
      %v691 = vunpack.c.l.b16 %v341
      %v692 = vunpack.c.l.b16 %v342
      %v693 = vunpack.c.h.b16 %v342
      %v694 = vunpack.c.l.b16 %v343
      %v695 = vunpack.c.h.b16 %v343
      %v696 = vunpack.c.l.b16 %v344
      %v697 = vunpack.c.h.b16 %v344
      %v698 = vunpack.c.l.b16 %v345
      %v699 = vunpack.c.l.b16 %v346
      %v700 = vunpack.c.h.b16 %v346
      %v701 = vunpack.c.l.b16 %v347
      %v702 = vunpack.c.h.b16 %v347
      %v703 = vunpack.c.l.b16 %v348
      %v704 = vunpack.c.h.b16 %v348
      %v705 = vunpack.c.l.b16 %v349
      %v706 = vunpack.c.l.b16 %v350
      %v707 = vunpack.c.h.b16 %v350
      %v708 = vunpack.c.l.b16 %v351
      %v709 = vunpack.c.h.b16 %v351
      %v710 = vunpack.c.l.b16 %v352
      %v711 = vunpack.c.h.b16 %v352
      %v712 = vunpack.c.l.b16 %v353
      %v713 = vunpack.c.l.b16 %v354
      %v714 = vunpack.c.h.b16 %v354
      %v715 = vunpack.c.l.b16 %v355
      %v716 = vunpack.c.h.b16 %v355
      %v717 = vunpack.c.l.b16 %v356
      %v718 = vunpack.c.h.b16 %v356
      %v719 = vunpack.c.l.b16 %v357
      %v720 = vunpack.c.l.b16 %v358
      %v721 = vunpack.c.h.b16 %v358
      %v722 = vunpack.c.l.b16 %v359
      %v723 = vunpack.c.h.b16 %v359
      %v724 = vunpack.c.l.b16 %v360
      %v725 = vunpack.c.h.b16 %v360
      %v726 = vunpack.c.l.b16 %v361
      %v727 = vunpack.c.l.b16 %v362
      %v728 = vunpack.c.h.b16 %v362
      %v729 = vunpack.c.l.b16 %v363
      %v730 = vunpack.c.h.b16 %v363
      %v731 = vunpack.c.l.b16 %v364
      %v732 = vunpack.c.h.b16 %v364
      %v733 = vunpack.c.l.b16 %v365
      %v734 = vunpack.c.l.b16 %v366
      %v735 = vunpack.c.h.b16 %v366
      %v736 = vunpack.c.l.b16 %v367
      %v737 = vunpack.c.h.b16 %v367
      %v738 = vunpack.c.l.b16 %v368
      %v739 = vunpack.c.h.b16 %v368
      %v740 = vunpack.c.l.b16 %v369
      %v741 = vunpack.c.l.b16 %v370
      %v742 = vunpack.c.h.b16 %v370
      %v743 = vunpack.c.l.b16 %v371
      %v744 = vunpack.c.h.b16 %v371
      %v745 = vunpack.c.l.b16 %v372
      %v746 = vunpack.c.h.b16 %v372
      %v747 = vunpack.c.l.b16 %v373
      %v748 = vunpack.c.l.b16 %v374
      %v749 = vunpack.c.h.b16 %v374
      %v750 = vunpack.c.l.b16 %v375
      %v751 = vunpack.c.h.b16 %v375
      %v752 = vunpack.c.l.b16 %v376
      %v753 = vunpack.c.h.b16 %v376
      %v754 = vunpack.c.l.b16 %v377
      %v755 = vunpack.c.l.b16 %v378
      %v756 = vunpack.c.h.b16 %v378
      %v757 = vunpack.c.l.b16 %v379
      %v758 = vunpack.c.h.b16 %v379
      %v759 = vunpack.c.l.b16 %v380
      %v760 = vunpack.c.h.b16 %v380
      %v761 = vunpack.c.l.b16 %v381
      %v762 = vunpack.c.l.b16 %v382
      %v763 = vunpack.c.h.b16 %v382
      %v764 = vunpack.c.l.b16 %v383
      %v765 = vunpack.c.h.b16 %v383
      %v766 = vunpack.c.l.b16 %v384
      %v767 = vunpack.c.h.b16 %v384
      %v768 = vunpack.c.l.b16 %v385
      %v769 = vunpack.c.l.b16 %v386
      %v770 = vunpack.c.h.b16 %v386
      %v771 = vunpack.c.l.b16 %v387
      %v772 = vunpack.c.h.b16 %v387
      %v773 = vunpack.c.l.b16 %v388
      %v774 = vunpack.c.h.b16 %v388
      %v775 = vunpack.c.l.b16 %v389
      %v776 = vunpack.c.l.b16 %v390
      %v777 = vunpack.c.h.b16 %v390
      %v778 = vunpack.c.l.b16 %v391
      %v779 = vunpack.c.h.b16 %v391
      %v780 = vunpack.c.l.b16 %v392
      %v781 = vunpack.c.h.b16 %v392
      %v782 = vunpack.c.l.b16 %v393
      %v783 = vpack.c.b16 %v566, %v559
      %v784 = vpack.c.b16 %v567, %v560
      %v785 = vpack.c.b16 %v568, %v561
      %v786 = vpack.c.b16 %v569, %v562
      %v787 = vpack.c.b16 %v570, %v563
      %v788 = vpack.c.b16 %v571, %v564
      %v789 = vpack.c.b16 %v572, %v565
      %v790 = vpack.c.b16 %v580, %v573
      %v791 = vpack.c.b16 %v581, %v574
      %v792 = vpack.c.b16 %v582, %v575
      %v793 = vpack.c.b16 %v583, %v576
      %v794 = vpack.c.b16 %v584, %v577
      %v795 = vpack.c.b16 %v585, %v578
      %v796 = vpack.c.b16 %v586, %v579
      %v797 = vpack.c.b16 %v594, %v587
      %v798 = vpack.c.b16 %v595, %v588
      %v799 = vpack.c.b16 %v596, %v589
      %v800 = vpack.c.b16 %v597, %v590
      %v801 = vpack.c.b16 %v598, %v591
      %v802 = vpack.c.b16 %v599, %v592
      %v803 = vpack.c.b16 %v600, %v593
      %v804 = vpack.c.b16 %v608, %v601
      %v805 = vpack.c.b16 %v609, %v602
      %v806 = vpack.c.b16 %v610, %v603
      %v807 = vpack.c.b16 %v611, %v604
      %v808 = vpack.c.b16 %v612, %v605
      %v809 = vpack.c.b16 %v613, %v606
      %v810 = vpack.c.b16 %v614, %v607
      %v811 = vpack.c.b16 %v622, %v615
      %v812 = vpack.c.b16 %v623, %v616
      %v813 = vpack.c.b16 %v624, %v617
      %v814 = vpack.c.b16 %v625, %v618
      %v815 = vpack.c.b16 %v626, %v619
      %v816 = vpack.c.b16 %v627, %v620
      %v817 = vpack.c.b16 %v628, %v621
      %v818 = vpack.c.b16 %v636, %v629
      %v819 = vpack.c.b16 %v637, %v630
      %v820 = vpack.c.b16 %v638, %v631
      %v821 = vpack.c.b16 %v639, %v632
      %v822 = vpack.c.b16 %v640, %v633
      %v823 = vpack.c.b16 %v641, %v634
      %v824 = vpack.c.b16 %v642, %v635
      %v825 = vpack.c.b16 %v650, %v643
      %v826 = vpack.c.b16 %v651, %v644
      %v827 = vpack.c.b16 %v652, %v645
      %v828 = vpack.c.b16 %v653, %v646
      %v829 = vpack.c.b16 %v654, %v647
      %v830 = vpack.c.b16 %v655, %v648
      %v831 = vpack.c.b16 %v656, %v649
      %v832 = vpack.c.b16 %v664, %v657
      %v833 = vpack.c.b16 %v665, %v658
      %v834 = vpack.c.b16 %v666, %v659
      %v835 = vpack.c.b16 %v667, %v660
      %v836 = vpack.c.b16 %v668, %v661
      %v837 = vpack.c.b16 %v669, %v662
      %v838 = vpack.c.b16 %v670, %v663
      %v839 = vpack.c.b16 %v678, %v671
      %v840 = vpack.c.b16 %v679, %v672
      %v841 = vpack.c.b16 %v680, %v673
      %v842 = vpack.c.b16 %v681, %v674
      %v843 = vpack.c.b16 %v682, %v675
      %v844 = vpack.c.b16 %v683, %v676
      %v845 = vpack.c.b16 %v684, %v677
      %v846 = vpack.c.b16 %v692, %v685
      %v847 = vpack.c.b16 %v693, %v686
      %v848 = vpack.c.b16 %v694, %v687
      %v849 = vpack.c.b16 %v695, %v688
      %v850 = vpack.c.b16 %v696, %v689
      %v851 = vpack.c.b16 %v697, %v690
      %v852 = vpack.c.b16 %v698, %v691
      %v853 = vpack.c.b16 %v706, %v699
      %v854 = vpack.c.b16 %v707, %v700
      %v855 = vpack.c.b16 %v708, %v701
      %v856 = vpack.c.b16 %v709, %v702
      %v857 = vpack.c.b16 %v710, %v703
      %v858 = vpack.c.b16 %v711, %v704
      %v859 = vpack.c.b16 %v712, %v705
      %v860 = vpack.c.b16 %v720, %v713
      %v861 = vpack.c.b16 %v721, %v714
      %v862 = vpack.c.b16 %v722, %v715
      %v863 = vpack.c.b16 %v723, %v716
      %v864 = vpack.c.b16 %v724, %v717
      %v865 = vpack.c.b16 %v725, %v718
      %v866 = vpack.c.b16 %v726, %v719
      %v867 = vpack.c.b16 %v734, %v727
      %v868 = vpack.c.b16 %v735, %v728
      %v869 = vpack.c.b16 %v736, %v729
      %v870 = vpack.c.b16 %v737, %v730
      %v871 = vpack.c.b16 %v738, %v731
      %v872 = vpack.c.b16 %v739, %v732
      %v873 = vpack.c.b16 %v740, %v733
      %v874 = vpack.c.b16 %v748, %v741
      %v875 = vpack.c.b16 %v749, %v742
      %v876 = vpack.c.b16 %v750, %v743
      %v877 = vpack.c.b16 %v751, %v744
      %v878 = vpack.c.b16 %v752, %v745
      %v879 = vpack.c.b16 %v753, %v746
      %v880 = vpack.c.b16 %v754, %v747
      %v881 = vpack.c.b16 %v762, %v755
      %v882 = vpack.c.b16 %v763, %v756
      %v883 = vpack.c.b16 %v764, %v757
      %v884 = vpack.c.b16 %v765, %v758
      %v885 = vpack.c.b16 %v766, %v759
      %v886 = vpack.c.b16 %v767, %v760
      %v887 = vpack.c.b16 %v768, %v761
      %v888 = vpack.c.b16 %v776, %v769
      %v889 = vpack.c.b16 %v777, %v770
      %v890 = vpack.c.b16 %v778, %v771
      %v891 = vpack.c.b16 %v779, %v772
      %v892 = vpack.c.b16 %v780, %v773
      %v893 = vpack.c.b16 %v781, %v774
      %v894 = vpack.c.b16 %v782, %v775
      %1007 = vmatprep.subr.bf16.mxu0 %v833
      %1008 = vmatpush1.bf16.msra.mxu0 %v832
      %1009 = vmatprep.subr.bf16.mxu0 %v826
      %1010 = vmatpush1.bf16.msra.mxu0 %v825
      %1011 = vmatprep.subr.bf16.mxu0 %v819
      %1012 = vmatpush1.bf16.msra.mxu0 %v818
      %1013 = vmatprep.subr.bf16.mxu0 %v812
      %1014 = vmatpush1.bf16.msra.mxu0 %v811
      %1015 = vmatprep.subr.bf16.mxu0 %v805
      %1016 = vmatpush1.bf16.msra.mxu0 %v804
      %1017 = vmatprep.subr.bf16.mxu0 %v798
      %1018 = vmatpush1.bf16.msra.mxu0 %v797
      %1019 = vmatprep.subr.bf16.mxu0 %v791
      %1020 = vmatpush1.bf16.msra.mxu0 %v790
      %1021 = vmatprep.subr.bf16.mxu0 %v784
      %1022 = vmatpush1.bf16.msra.mxu0 %v783
      %1023 = vmatprep.subr.bf16.mxu0 %v889
      %1024 = vmatpush2.bf16.msra.mxu0 %v888
      %1025 = vmatprep.subr.bf16.mxu0 %v882
      %1026 = vmatpush2.bf16.msra.mxu0 %v881
      %1027 = vmatprep.subr.bf16.mxu0 %v875
      %1028 = vmatpush2.bf16.msra.mxu0 %v874
      %1029 = vmatprep.subr.bf16.mxu0 %v868
      %1030 = vmatpush2.bf16.msra.mxu0 %v867
      %1031 = vmatprep.subr.bf16.mxu0 %v861
      %1032 = vmatpush2.bf16.msra.mxu0 %v860
      %1033 = vmatprep.subr.bf16.mxu0 %v854
      %1034 = vmatpush2.bf16.msra.mxu0 %v853
      %1035 = vmatprep.subr.bf16.mxu0 %v847
      %1036 = vmatpush2.bf16.msra.mxu0 %v846
      %1037 = vmatprep.subr.bf16.mxu0 %v840
      %1038 = vmatpush2.bf16.msra.mxu0 %v839
      %1039 = vmatprep.mubr.bf16.mxu0 %v265
      %1040 = vmatmul.mubr.bf16.gmra.mxu0 %v264
      %v1041 = vpop.f32.mrf.mxu0
      %v1042 = vadd.f32 %v399, %v1041
      %v1043 = vpop.f32.mrf.mxu0
      %v1044 = vadd.f32 %v403, %v1043
      %v1045 = vpop.f32.mrf.mxu0
      %v1046 = vadd.f32 %v399, %v1045
      %v1047 = vpop.f32.mrf.mxu0
      %v1048 = vadd.f32 %v403, %v1047
      %1049 = vdwg.mxu0
      %1050 = vmatprep.subr.bf16.mxu0 %v835
      %1051 = vmatpush1.bf16.msra.mxu0 %v834
      %1052 = vmatprep.subr.bf16.mxu0 %v828
      %1053 = vmatpush1.bf16.msra.mxu0 %v827
      %1054 = vmatprep.subr.bf16.mxu0 %v821
      %1055 = vmatpush1.bf16.msra.mxu0 %v820
      %1056 = vmatprep.subr.bf16.mxu0 %v814
      %1057 = vmatpush1.bf16.msra.mxu0 %v813
      %1058 = vmatprep.subr.bf16.mxu0 %v807
      %1059 = vmatpush1.bf16.msra.mxu0 %v806
      %1060 = vmatprep.subr.bf16.mxu0 %v800
      %1061 = vmatpush1.bf16.msra.mxu0 %v799
      %1062 = vmatprep.subr.bf16.mxu0 %v793
      %1063 = vmatpush1.bf16.msra.mxu0 %v792
      %1064 = vmatprep.subr.bf16.mxu0 %v786
      %1065 = vmatpush1.bf16.msra.mxu0 %v785
      %1066 = vmatprep.subr.bf16.mxu0 %v891
      %1067 = vmatpush2.bf16.msra.mxu0 %v890
      %1068 = vmatprep.subr.bf16.mxu0 %v884
      %1069 = vmatpush2.bf16.msra.mxu0 %v883
      %1070 = vmatprep.subr.bf16.mxu0 %v877
      %1071 = vmatpush2.bf16.msra.mxu0 %v876
      %1072 = vmatprep.subr.bf16.mxu0 %v870
      %1073 = vmatpush2.bf16.msra.mxu0 %v869
      %1074 = vmatprep.subr.bf16.mxu0 %v863
      %1075 = vmatpush2.bf16.msra.mxu0 %v862
      %1076 = vmatprep.subr.bf16.mxu0 %v856
      %1077 = vmatpush2.bf16.msra.mxu0 %v855
      %1078 = vmatprep.subr.bf16.mxu0 %v849
      %1079 = vmatpush2.bf16.msra.mxu0 %v848
      %1080 = vmatprep.subr.bf16.mxu0 %v842
      %1081 = vmatpush2.bf16.msra.mxu0 %v841
      %1082 = vmatprep.mubr.bf16.mxu0 %v265
      %1083 = vmatmul.mubr.bf16.gmra.mxu0 %v264
      %v1084 = vpop.f32.mrf.mxu0
      %v1085 = vadd.f32 %v407, %v1084
      %v1086 = vpop.f32.mrf.mxu0
      %v1087 = vadd.f32 %v411, %v1086
      %v1088 = vpop.f32.mrf.mxu0
      %v1089 = vadd.f32 %v407, %v1088
      %v1090 = vpop.f32.mrf.mxu0
      %v1091 = vadd.f32 %v411, %v1090
      %1092 = vdwg.mxu0
      %1093 = vmatprep.subr.bf16.mxu0 %v837
      %1094 = vmatpush1.bf16.msra.mxu0 %v836
      %1095 = vmatprep.subr.bf16.mxu0 %v830
      %1096 = vmatpush1.bf16.msra.mxu0 %v829
      %1097 = vmatprep.subr.bf16.mxu0 %v823
      %1098 = vmatpush1.bf16.msra.mxu0 %v822
      %1099 = vmatprep.subr.bf16.mxu0 %v816
      %1100 = vmatpush1.bf16.msra.mxu0 %v815
      %1101 = vmatprep.subr.bf16.mxu0 %v809
      %1102 = vmatpush1.bf16.msra.mxu0 %v808
      %1103 = vmatprep.subr.bf16.mxu0 %v802
      %1104 = vmatpush1.bf16.msra.mxu0 %v801
      %1105 = vmatprep.subr.bf16.mxu0 %v795
      %1106 = vmatpush1.bf16.msra.mxu0 %v794
      %1107 = vmatprep.subr.bf16.mxu0 %v788
      %1108 = vmatpush1.bf16.msra.mxu0 %v787
      %1109 = vmatprep.subr.bf16.mxu0 %v893
      %1110 = vmatpush2.bf16.msra.mxu0 %v892
      %1111 = vmatprep.subr.bf16.mxu0 %v886
      %1112 = vmatpush2.bf16.msra.mxu0 %v885
      %1113 = vmatprep.subr.bf16.mxu0 %v879
      %1114 = vmatpush2.bf16.msra.mxu0 %v878
      %1115 = vmatprep.subr.bf16.mxu0 %v872
      %1116 = vmatpush2.bf16.msra.mxu0 %v871
      %1117 = vmatprep.subr.bf16.mxu0 %v865
      %1118 = vmatpush2.bf16.msra.mxu0 %v864
      %1119 = vmatprep.subr.bf16.mxu0 %v858
      %1120 = vmatpush2.bf16.msra.mxu0 %v857
      %1121 = vmatprep.subr.bf16.mxu0 %v851
      %1122 = vmatpush2.bf16.msra.mxu0 %v850
      %1123 = vmatprep.subr.bf16.mxu0 %v844
      %1124 = vmatpush2.bf16.msra.mxu0 %v843
      %1125 = vmatprep.mubr.bf16.mxu0 %v265
      %1126 = vmatmul.mubr.bf16.gmra.mxu0 %v264
      %v1127 = vpop.f32.mrf.mxu0
      %v1128 = vadd.f32 %v415, %v1127
      %v1129 = vpop.f32.mrf.mxu0
      %v1130 = vadd.f32 %v419, %v1129
      %v1131 = vpop.f32.mrf.mxu0
      %v1132 = vadd.f32 %v415, %v1131
      %v1133 = vpop.f32.mrf.mxu0
      %v1134 = vadd.f32 %v419, %v1133
      %1135 = vdwg.mxu0
      %1136 = vmatprep.subr.bf16.mxu0 0
      %1137 = vmatpush1.bf16.msra.mxu0 %v838
      %1138 = vmatprep.subr.bf16.mxu0 0
      %1139 = vmatpush1.bf16.msra.mxu0 %v831
      %1140 = vmatprep.subr.bf16.mxu0 0
      %1141 = vmatpush1.bf16.msra.mxu0 %v824
      %1142 = vmatprep.subr.bf16.mxu0 0
      %1143 = vmatpush1.bf16.msra.mxu0 %v817
      %1144 = vmatprep.subr.bf16.mxu0 0
      %1145 = vmatpush1.bf16.msra.mxu0 %v810
      %1146 = vmatprep.subr.bf16.mxu0 0
      %1147 = vmatpush1.bf16.msra.mxu0 %v803
      %1148 = vmatprep.subr.bf16.mxu0 0
      %1149 = vmatpush1.bf16.msra.mxu0 %v796
      %1150 = vmatprep.subr.bf16.mxu0 0
      %1151 = vmatpush1.bf16.msra.mxu0 %v789
      %1152 = vmatprep.subr.bf16.mxu0 0
      %1153 = vmatpush2.bf16.msra.mxu0 %v894
      %1154 = vmatprep.subr.bf16.mxu0 0
      %1155 = vmatpush2.bf16.msra.mxu0 %v887
      %1156 = vmatprep.subr.bf16.mxu0 0
      %1157 = vmatpush2.bf16.msra.mxu0 %v880
      %1158 = vmatprep.subr.bf16.mxu0 0
      %1159 = vmatpush2.bf16.msra.mxu0 %v873
      %1160 = vmatprep.subr.bf16.mxu0 0
      %1161 = vmatpush2.bf16.msra.mxu0 %v866
      %1162 = vmatprep.subr.bf16.mxu0 0
      %1163 = vmatpush2.bf16.msra.mxu0 %v859
      %1164 = vmatprep.subr.bf16.mxu0 0
      %1165 = vmatpush2.bf16.msra.mxu0 %v852
      %1166 = vmatprep.subr.bf16.mxu0 0
      %1167 = vmatpush2.bf16.msra.mxu0 %v845
      %1168 = vmatprep.mubr.bf16.mxu0 %v265
      %1169 = vmatmul.mubr.bf16.gmra.mxu0 %v264
      %v1170 = vpop.f32.mrf.mxu0
      %v1171 = vadd.f32 %v423, %v1170
      %v1172 = vpop.f32.mrf.mxu0
      %v1173 = vpop.f32.mrf.mxu0
      %v1174 = vadd.f32 %v423, %v1173
      %v1175 = vpop.f32.mrf.mxu0
      %1176 = vdwg.mxu0
      %1177 = vst [vmem:[%s224] sm:$0xff] %v1042
      %1178 = vst [vmem:[%s224 + $0x8] sm:$0xff] %v1044
      %1179 = vst [vmem:[%s224 + $0x10] sm:$0xff] %v1085
      %1180 = vst [vmem:[%s224 + $0x18] sm:$0xff] %v1087
      %1181 = vst [vmem:[%s224 + $0x20] sm:$0xff] %v1128
      %1182 = vst [vmem:[%s224 + $0x28] sm:$0xff] %v1130
      %1183 = vst [vmem:[%s224 + $0x30] sm:$0xff] %v1171
      %1184 = vst [vmem:[%s224 + $0x38] sm:$0xff] %v1046
      %1185 = vst [vmem:[%s224 + $0x40] sm:$0xff] %v1048
      %1186 = vst [vmem:[%s224 + $0x48] sm:$0xff] %v1089
      %1187 = vst [vmem:[%s224 + $0x50] sm:$0xff] %v1091
      %1188 = vst [vmem:[%s224 + $0x58] sm:$0xff] %v1132
      %1189 = vst [vmem:[%s224 + $0x60] sm:$0xff] %v1134
      %1190 = vst [vmem:[%s224 + $0x68] sm:$0xff] %v1174
      %p1191 = scmp.lt.s32.totalorder %s16, 1
      %s1192 = scalar_select %p1191, %s16, 1
      %s1193 = smul.addr %s1192, 14
      %s1194 = smul.addr %s1193, 8
      %s1195 = scalar_lea.vmem %s5, %s1194
      // Predicated region
      $region41: #{faster_rcnn_forward.6} parent=39 // pred_check
        %p1196 = pneg %p144
      $region42: #{faster_rcnn_forward.6} parent=39 // pred_check_branch
        %1198 = sbr.rel (%p1196) target = $region44
      $region43: #{faster_rcnn_forward.6} parent=39 // pred_region
        _
      $region44: #{faster_rcnn_forward.6} parent=39 // pred_fallthru
        _
    $region40: #{faster_rcnn_forward.6} parent=5 // pred_fallthru
      _
    %p1199 = scmp.le.s32.totalorder 2, %s11
    // Predicated region
    $region45: #{faster_rcnn_forward.6} parent=5 // pred_check
      %p1200 = pneg %p1199
    $region46: #{faster_rcnn_forward.6} parent=5 // pred_check_branch
      %1202 = sbr.rel (%p1200) target = $region48
    $region47: #{faster_rcnn_forward.6} parent=5 // pred_region
      %s1203 = ssub.s32 %s11, 2
      // Predicated region
      $region49: #{faster_rcnn_forward.6} parent=47 // pred_check
        %p1204 = pneg %p150
      $region50: #{faster_rcnn_forward.6} parent=47 // pred_check_branch
        %1206 = sbr.rel (%p1204) target = $region52
      $region51: #{faster_rcnn_forward.6} parent=47 // pred_region
        %p1207 = scmp.lt.s32.totalorder %s17, 1
        %s1208 = scalar_select %p1207, %s17, 1
        %s1209 = smul.addr %s1208, 14
        %s1210 = smul.addr %s1209, 8
        %s1211 = scalar_lea.vmem %s5, %s1210
      $region52: #{faster_rcnn_forward.6} parent=47 // pred_fallthru
        _
    $region48: #{faster_rcnn_forward.6} parent=5 // pred_fallthru
      _
  $region6: #{faster_rcnn_forward.6} parent=0 // loop_footer
    %s15 = sadd.s32 1, %s11
  $region7: #{faster_rcnn_forward.6} parent=0 // loop_footer_branch
    %10 = sbr.rel target = $region3
  $region8: #{faster_rcnn_forward.6} parent=0 // loop_exit
    _

</llo_original>
